<compile_context>
chip_gen: v5e
topology: v5e:2x2
jax: 0.10.0
libtpu: 0.0.40
codegen_flags: <defaults>
</compile_context>

<pallas_src>
import jax
import jax.numpy as jnp
from jax import lax
from jax.experimental import pallas as pl
from jax.experimental.pallas import tpu as pltpu

NUM_CLASSES = 26
B = 2
H = W = 28
CHUNK = 104          # conv1 row chunk (multiple of 8; 2 chunks cover 208 rows)


# --------------------------------------------------------------------------- #
# Fused kernel: conv1+pool -> conv2+pool -> flatten -> fc1 -> fc2   (per sample)
# --------------------------------------------------------------------------- #
def letter_cnn_kernel(im1_ref, w1_ref, b1_ref, w2_ref, b2_ref,
                      f1w_ref, fb1_ref, f2w_ref, fb2_ref,
                      out_ref, p1_ref, flat_ref):
    # im1_ref : (1,832,16) f32  conv1 im2col, row = m*208 + 16*i + j
    #                           (m = 2*r+c pool member; i,j = 13x13 pooled pos)
    # w1_ref  : (16,32) f32     b1_ref : (1,32) f32
    # w2_ref  : (9,32,64) bf16  per-tap conv2 matrices;   b2_ref : (1,64) f32
    # f1w_ref : (1600,128) bf16 (HWC-permuted);           fb1_ref: (1,128) f32
    # f2w_ref : (128,26) bf16                             fb2_ref: (1,26)  f32
    # out_ref : (1,1,26) f32
    # p1_ref  : (208,32) bf16   pooled conv1 at 16-row pitch (row = 16*i + j)
    # flat_ref: (1,1600) bf16   flattened pooled conv2 (HWC, 64-lane pitch)

    # ---- conv1 (1->32, k3) on the MXU, fused with 2x2 max-pool ---------------
    # The 4 pool members are 4 contiguous 208-row blocks of the im2col; chunking
    # keeps live state to ~2 x 13 vregs (no spills).
    for s in range(0, 208, CHUNK):
        pm = jnp.dot(im1_ref[0, pl.ds(s, CHUNK), :], w1_ref[...],
                     preferred_element_type=jnp.float32)             # (CHUNK,32)
        for m in range(1, 4):
            pm = jnp.maximum(
                pm,
                jnp.dot(im1_ref[0, pl.ds(m * 208 + s, CHUNK), :], w1_ref[...],
                        preferred_element_type=jnp.float32))
        pm = jnp.maximum(pm + b1_ref[...], 0.0)      # bias+ReLU commute with max
        p1_ref[pl.ds(s, CHUNK), :] = pm.astype(jnp.bfloat16)

    # ---- conv2 (32->64, k3) as 9 accumulating MXU matmuls --------------------
    # Output row o = 16*i' + j' reads p1 row o + 16*di + dj (max 193 < 208, so
    # every read row was written above; rows with j' in 11..15 are junk-but-
    # finite and are never consumed by the pooling below).
    acc = jnp.zeros((160, 64), jnp.float32)
    for di in range(3):
        for dj in range(3):
            acc = acc + jnp.dot(p1_ref[pl.ds(16 * di + dj, 160), :],
                                w2_ref[3 * di + dj],
                                preferred_element_type=jnp.float32)

    # ---- 2x2 max-pool (floor 11->5) + bias + ReLU, scattered lane-aligned ----
    for a in range(5):
        rp = jnp.maximum(acc[32 * a:32 * a + 16],
                         acc[32 * a + 16:32 * a + 32])                # (16,64)
        rp = jnp.maximum(rp + b2_ref[...], 0.0)
        for b in range(5):
            v = jnp.maximum(rp[2 * b:2 * b + 1], rp[2 * b + 1:2 * b + 2])  # (1,64)
            # independent store into its own half lane-tile (offset 64*(5a+b))
            flat_ref[:, pl.ds(64 * (5 * a + b), 64)] = v.astype(jnp.bfloat16)

    # ---- fc1 (1600->128) + ReLU, fc2 (128->26) -------------------------------
    h = jnp.dot(flat_ref[...], f1w_ref[...],
                preferred_element_type=jnp.float32) + fb1_ref[...]
    h = jnp.maximum(h, 0.0).astype(jnp.bfloat16)                      # (1,128)
    out_ref[0] = jnp.dot(h, f2w_ref[...],
                         preferred_element_type=jnp.float32) + fb2_ref[...]


# --------------------------------------------------------------------------- #
# One-time parameter prep (layout permutations + bf16 casts, hoisted)
# --------------------------------------------------------------------------- #
def prepare_params(params):
    (c1w, c1b, c2w, c2b, f1w, f1b, f2w, f2b) = params
    # conv1 (32,1,3,3) -> (9,32), K padded to 16 with zeros
    w1 = jnp.transpose(c1w, (2, 3, 1, 0)).reshape(9, 32).astype(jnp.float32)
    w1_pad = jnp.pad(w1, ((0, 7), (0, 0)))                           # (16,32)
    b1_row = c1b.reshape(1, 32).astype(jnp.float32)
    # conv2 (64,32,3,3) -> 9 tap matrices (9,32,64), tap = 3*di+dj
    w2_taps = jnp.transpose(c2w, (2, 3, 1, 0)).reshape(9, 32, 64).astype(jnp.bfloat16)
    b2_row = c2b.reshape(1, 64).astype(jnp.float32)
    # torch flattens NCHW (c,h,w); kernel flattens HWC -> permute fc1 weight once
    f1w_hwc = jnp.transpose(f1w.reshape(128, 64, 5, 5), (0, 2, 3, 1)) \
                  .reshape(128, 1600).T.astype(jnp.bfloat16)          # (1600,128)
    fb1_row = f1b.reshape(1, 128).astype(jnp.float32)
    f2w_t = f2w.T.astype(jnp.bfloat16)                                # (128,26)
    fb2_row = f2b.reshape(1, NUM_CLASSES).astype(jnp.float32)
    return (w1_pad, b1_row, w2_taps, b2_row, f1w_hwc, fb1_row, f2w_t, fb2_row)


def _conv1_im2col(x_nchw):
    """Cin=1 im2col with the pool-member row ordering the kernel expects.

    Row within a sample = m*208 + 16*i + j, with m = 2*r+c the 2x2 pool member,
    (i,j) the pooled 13x13 position; K padded 9->16, j padded 13->16 (zeros).
    """
    b = x_nchw.shape[0]
    x2d = x_nchw[:, 0, :, :].astype(jnp.float32)                      # (B,28,28)
    cols = jnp.stack([x2d[:, di:di + 26, dj:dj + 26]
                      for di in range(3) for dj in range(3)], axis=-1)  # (B,26,26,9)
    cols = cols.reshape(b, 13, 2, 13, 2, 9)            # (b, i, r, j, c, k)
    cols = jnp.transpose(cols, (0, 2, 4, 1, 3, 5))     # (b, r, c, i, j, k)
    cols = jnp.pad(cols, ((0, 0), (0, 0), (0, 0), (0, 0), (0, 3), (0, 7)))
    return cols.reshape(b, 832, 16)


# --------------------------------------------------------------------------- #
# Forward wrapper
# --------------------------------------------------------------------------- #
@jax.jit
def letter_cnn_forward(x_nchw, prep):
    (w1_pad, b1_row, w2_taps, b2_row, f1w_hwc, fb1_row, f2w_t, fb2_row) = prep
    batch = x_nchw.shape[0]
    im1 = _conv1_im2col(x_nchw)          # ~100 KB of HBM traffic, done in XLA

    out = pl.pallas_call(
        letter_cnn_kernel,
        out_shape=jax.ShapeDtypeStruct((batch, 1, NUM_CLASSES), jnp.float32),
        grid=(batch,),
        in_specs=[
            pl.BlockSpec((1, 832, 16), lambda b: (b, 0, 0)),
            pl.BlockSpec((16, 32), lambda b: (0, 0)),
            pl.BlockSpec((1, 32), lambda b: (0, 0)),
            pl.BlockSpec((9, 32, 64), lambda b: (0, 0, 0)),
            pl.BlockSpec((1, 64), lambda b: (0, 0)),
            pl.BlockSpec((1600, 128), lambda b: (0, 0)),
            pl.BlockSpec((1, 128), lambda b: (0, 0)),
            pl.BlockSpec((128, NUM_CLASSES), lambda b: (0, 0)),
            pl.BlockSpec((1, NUM_CLASSES), lambda b: (0, 0)),
        ],
        out_specs=pl.BlockSpec((1, 1, NUM_CLASSES), lambda b: (b, 0, 0)),
        scratch_shapes=[
            pltpu.VMEM((208, 32), jnp.bfloat16),     # pooled conv1, 16-row pitch
            pltpu.VMEM((1, 1600), jnp.bfloat16),     # flattened pooled conv2
        ],
        compiler_params=pltpu.CompilerParams(
            dimension_semantics=("parallel",)),      # v7x: batch across both TCs
    )(im1, w1_pad, b1_row, w2_taps, b2_row, f1w_hwc, fb1_row, f2w_t, fb2_row)
    return out.reshape(batch, NUM_CLASSES)


# --------------------------------------------------------------------------- #
# Pure-JAX reference (PyTorch semantics, NCHW) for validation
# --------------------------------------------------------------------------- #
def letter_cnn_reference(x, params):
    (c1w, c1b, c2w, c2b, f1w, f1b, f2w, f2b) = params
    dn = ("NCHW", "OIHW", "NCHW")
    y = lax.conv_general_dilated(x, c1w, (1, 1), "VALID", dimension_numbers=dn)
    y = jnp.maximum(y + c1b[None, :, None, None], 0.0)
    y = lax.reduce_window(y, -jnp.inf, lax.max, (1, 1, 2, 2), (1, 1, 2, 2), "VALID")
    y = lax.conv_general_dilated(y, c2w, (1, 1), "VALID", dimension_numbers=dn)
    y = jnp.maximum(y + c2b[None, :, None, None], 0.0)
    y = lax.reduce_window(y, -jnp.inf, lax.max, (1, 1, 2, 2), (1, 1, 2, 2), "VALID")
    y = y.reshape(y.shape[0], -1)                      # NCHW flatten (torch .view)
    y = jnp.maximum(y @ f1w.T + f1b, 0.0)
    return y @ f2w.T + f2b


def init_params(key):
    ks = jax.random.split(key, 8)
    c1w = 0.20 * jax.random.normal(ks[0], (32, 1, 3, 3), jnp.float32)
    c1b = 0.10 * jax.random.normal(ks[1], (32,), jnp.float32)
    c2w = 0.05 * jax.random.normal(ks[2], (64, 32, 3, 3), jnp.float32)
    c2b = 0.10 * jax.random.normal(ks[3], (64,), jnp.float32)
    f1w = 0.02 * jax.random.normal(ks[4], (128, 1600), jnp.float32)
    f1b = 0.10 * jax.random.normal(ks[5], (128,), jnp.float32)
    f2w = 0.05 * jax.random.normal(ks[6], (NUM_CLASSES, 128), jnp.float32)
    f2b = 0.10 * jax.random.normal(ks[7], (NUM_CLASSES,), jnp.float32)
    return (c1w, c1b, c2w, c2b, f1w, f1b, f2w, f2b)


if __name__ == "__main__":
    key = jax.random.PRNGKey(0)
    k_x, k_p = jax.random.split(key)
    x = jax.random.normal(k_x, (B, 1, H, W), jnp.float32)
    params = init_params(k_p)
    prep = prepare_params(params)          # one-time layout/dtype prep (hoisted)

    out = jax.block_until_ready(letter_cnn_forward(x, prep))
    ref = jax.block_until_ready(letter_cnn_reference(x, params))

    assert out.shape == (B, NUM_CLASSES), out.shape
    # conv2/fc matmuls use bf16 operands with f32 accumulation, so the gate is
    # slightly looser than pure-f32; real layout/permutation bugs are O(0.1+).
    assert jnp.allclose(out, ref, rtol=2e-2, atol=2e-2), \
        f"max abs err {jnp.max(jnp.abs(out - ref))}"
    print("KERNEL_OK")
</pallas_src>

<mosaic_0001>
module attributes {stable_mosaic.version = 11 : i64} {
  func.func @letter_cnn_kernel(%arg0: i32, %arg1: memref<1x832x16xf32, #tpu.memory_space<vmem>>, %arg2: memref<16x32xf32, #tpu.memory_space<vmem>>, %arg3: memref<1x32xf32, #tpu.memory_space<vmem>>, %arg4: memref<9x32x64xbf16, #tpu.memory_space<vmem>>, %arg5: memref<1x64xf32, #tpu.memory_space<vmem>>, %arg6: memref<1600x128xbf16, #tpu.memory_space<vmem>>, %arg7: memref<1x128xf32, #tpu.memory_space<vmem>>, %arg8: memref<128x26xbf16, #tpu.memory_space<vmem>>, %arg9: memref<1x26xf32, #tpu.memory_space<vmem>>, %arg10: memref<1x1x26xf32, #tpu.memory_space<vmem>>, %arg11: memref<208x32xbf16, #tpu.memory_space<vmem>>, %arg12: memref<1x1600xbf16, #tpu.memory_space<vmem>>) attributes {dimension_semantics = [#tpu.dimension_semantics<parallel>], iteration_bounds = array<i64: 2>, scalar_prefetch = 0 : i64, scratch_operands = 2 : i64, tpu.core_type = #tpu.core_type<tc>, window_params = [{transform_indices = @transform_0, window_bounds = array<i64: 1, 832, 16>}, {pipeline_mode = #tpu.pipeline_mode<synchronous>, transform_indices = @transform_1, window_bounds = array<i64: 16, 32>}, {pipeline_mode = #tpu.pipeline_mode<synchronous>, transform_indices = @transform_2, window_bounds = array<i64: 1, 32>}, {pipeline_mode = #tpu.pipeline_mode<synchronous>, transform_indices = @transform_3, window_bounds = array<i64: 9, 32, 64>}, {pipeline_mode = #tpu.pipeline_mode<synchronous>, transform_indices = @transform_4, window_bounds = array<i64: 1, 64>}, {pipeline_mode = #tpu.pipeline_mode<synchronous>, transform_indices = @transform_5, window_bounds = array<i64: 1600, 128>}, {pipeline_mode = #tpu.pipeline_mode<synchronous>, transform_indices = @transform_6, window_bounds = array<i64: 1, 128>}, {pipeline_mode = #tpu.pipeline_mode<synchronous>, transform_indices = @transform_7, window_bounds = array<i64: 128, 26>}, {pipeline_mode = #tpu.pipeline_mode<synchronous>, transform_indices = @transform_8, window_bounds = array<i64: 1, 26>}, {transform_indices = @transform_9, window_bounds = array<i64: 1, 1, 26>}]} {
    %c0 = arith.constant 0 : index
    %c0_0 = arith.constant 0 : index
    %c0_1 = arith.constant 0 : index
    %0 = vector.load %arg1[%c0, %c0_0, %c0_1] : memref<1x832x16xf32, #tpu.memory_space<vmem>>, vector<1x104x16xf32>
    %1 = vector.shape_cast %0 : vector<1x104x16xf32> to vector<104x16xf32>
    %c0_2 = arith.constant 0 : index
    %c0_3 = arith.constant 0 : index
    %2 = vector.load %arg2[%c0_2, %c0_3] : memref<16x32xf32, #tpu.memory_space<vmem>>, vector<16x32xf32>
    %cst = arith.constant dense<0.000000e+00> : vector<104x32xf32>
    %3 = tpu.matmul %1, %2, %cst {dimension_numbers = #tpu.dot_dimension_numbers<[1], [0], [0], [1], [0, 0, 1, 1], [], []>} : vector<104x16xf32>, vector<16x32xf32>, vector<104x32xf32> -> vector<104x32xf32>
    %c0_4 = arith.constant 0 : index
    %c208 = arith.constant 208 : index
    %c0_5 = arith.constant 0 : index
    %4 = vector.load %arg1[%c0_4, %c208, %c0_5] : memref<1x832x16xf32, #tpu.memory_space<vmem>>, vector<1x104x16xf32>
    %5 = vector.shape_cast %4 : vector<1x104x16xf32> to vector<104x16xf32>
    %c0_6 = arith.constant 0 : index
    %c0_7 = arith.constant 0 : index
    %6 = vector.load %arg2[%c0_6, %c0_7] : memref<16x32xf32, #tpu.memory_space<vmem>>, vector<16x32xf32>
    %cst_8 = arith.constant dense<0.000000e+00> : vector<104x32xf32>
    %7 = tpu.matmul %5, %6, %cst_8 {dimension_numbers = #tpu.dot_dimension_numbers<[1], [0], [0], [1], [0, 0, 1, 1], [], []>} : vector<104x16xf32>, vector<16x32xf32>, vector<104x32xf32> -> vector<104x32xf32>
    %8 = arith.maximumf %3, %7 : vector<104x32xf32>
    %c0_9 = arith.constant 0 : index
    %c416 = arith.constant 416 : index
    %c0_10 = arith.constant 0 : index
    %9 = vector.load %arg1[%c0_9, %c416, %c0_10] : memref<1x832x16xf32, #tpu.memory_space<vmem>>, vector<1x104x16xf32>
    %10 = vector.shape_cast %9 : vector<1x104x16xf32> to vector<104x16xf32>
    %c0_11 = arith.constant 0 : index
    %c0_12 = arith.constant 0 : index
    %11 = vector.load %arg2[%c0_11, %c0_12] : memref<16x32xf32, #tpu.memory_space<vmem>>, vector<16x32xf32>
    %cst_13 = arith.constant dense<0.000000e+00> : vector<104x32xf32>
    %12 = tpu.matmul %10, %11, %cst_13 {dimension_numbers = #tpu.dot_dimension_numbers<[1], [0], [0], [1], [0, 0, 1, 1], [], []>} : vector<104x16xf32>, vector<16x32xf32>, vector<104x32xf32> -> vector<104x32xf32>
    %13 = arith.maximumf %8, %12 : vector<104x32xf32>
    %c0_14 = arith.constant 0 : index
    %c624 = arith.constant 624 : index
    %c0_15 = arith.constant 0 : index
    %14 = vector.load %arg1[%c0_14, %c624, %c0_15] : memref<1x832x16xf32, #tpu.memory_space<vmem>>, vector<1x104x16xf32>
    %15 = vector.shape_cast %14 : vector<1x104x16xf32> to vector<104x16xf32>
    %c0_16 = arith.constant 0 : index
    %c0_17 = arith.constant 0 : index
    %16 = vector.load %arg2[%c0_16, %c0_17] : memref<16x32xf32, #tpu.memory_space<vmem>>, vector<16x32xf32>
    %cst_18 = arith.constant dense<0.000000e+00> : vector<104x32xf32>
    %17 = tpu.matmul %15, %16, %cst_18 {dimension_numbers = #tpu.dot_dimension_numbers<[1], [0], [0], [1], [0, 0, 1, 1], [], []>} : vector<104x16xf32>, vector<16x32xf32>, vector<104x32xf32> -> vector<104x32xf32>
    %18 = arith.maximumf %13, %17 : vector<104x32xf32>
    %c0_19 = arith.constant 0 : index
    %c0_20 = arith.constant 0 : index
    %19 = vector.load %arg3[%c0_19, %c0_20] : memref<1x32xf32, #tpu.memory_space<vmem>>, vector<1x32xf32>
    %20 = vector.broadcast %19 : vector<1x32xf32> to vector<104x32xf32>
    %21 = arith.addf %18, %20 : vector<104x32xf32>
    %cst_21 = arith.constant 0.000000e+00 : f32
    %22 = vector.broadcast %cst_21 : f32 to vector<104x32xf32>
    %23 = arith.maximumf %21, %22 : vector<104x32xf32>
    %24 = arith.truncf %23 : vector<104x32xf32> to vector<104x32xbf16>
    %c0_22 = arith.constant 0 : index
    %c0_23 = arith.constant 0 : index
    %25 = vector.load %arg11[%c0_22, %c0_23] : memref<208x32xbf16, #tpu.memory_space<vmem>>, vector<104x32xbf16>
    tpu.vector_store %arg11[%c0_22, %c0_23], %24 {strides = array<i32>} : memref<208x32xbf16, #tpu.memory_space<vmem>>, vector<104x32xbf16>,
    %c0_24 = arith.constant 0 : index
    %c104 = arith.constant 104 : index
    %c0_25 = arith.constant 0 : index
    %26 = vector.load %arg1[%c0_24, %c104, %c0_25] : memref<1x832x16xf32, #tpu.memory_space<vmem>>, vector<1x104x16xf32>
    %27 = vector.shape_cast %26 : vector<1x104x16xf32> to vector<104x16xf32>
    %c0_26 = arith.constant 0 : index
    %c0_27 = arith.constant 0 : index
    %28 = vector.load %arg2[%c0_26, %c0_27] : memref<16x32xf32, #tpu.memory_space<vmem>>, vector<16x32xf32>
    %cst_28 = arith.constant dense<0.000000e+00> : vector<104x32xf32>
    %29 = tpu.matmul %27, %28, %cst_28 {dimension_numbers = #tpu.dot_dimension_numbers<[1], [0], [0], [1], [0, 0, 1, 1], [], []>} : vector<104x16xf32>, vector<16x32xf32>, vector<104x32xf32> -> vector<104x32xf32>
    %c0_29 = arith.constant 0 : index
    %c312 = arith.constant 312 : index
    %c0_30 = arith.constant 0 : index
    %30 = vector.load %arg1[%c0_29, %c312, %c0_30] : memref<1x832x16xf32, #tpu.memory_space<vmem>>, vector<1x104x16xf32>
    %31 = vector.shape_cast %30 : vector<1x104x16xf32> to vector<104x16xf32>
    %c0_31 = arith.constant 0 : index
    %c0_32 = arith.constant 0 : index
    %32 = vector.load %arg2[%c0_31, %c0_32] : memref<16x32xf32, #tpu.memory_space<vmem>>, vector<16x32xf32>
    %cst_33 = arith.constant dense<0.000000e+00> : vector<104x32xf32>
    %33 = tpu.matmul %31, %32, %cst_33 {dimension_numbers = #tpu.dot_dimension_numbers<[1], [0], [0], [1], [0, 0, 1, 1], [], []>} : vector<104x16xf32>, vector<16x32xf32>, vector<104x32xf32> -> vector<104x32xf32>
    %34 = arith.maximumf %29, %33 : vector<104x32xf32>
    %c0_34 = arith.constant 0 : index
    %c520 = arith.constant 520 : index
    %c0_35 = arith.constant 0 : index
    %35 = vector.load %arg1[%c0_34, %c520, %c0_35] : memref<1x832x16xf32, #tpu.memory_space<vmem>>, vector<1x104x16xf32>
    %36 = vector.shape_cast %35 : vector<1x104x16xf32> to vector<104x16xf32>
    %c0_36 = arith.constant 0 : index
    %c0_37 = arith.constant 0 : index
    %37 = vector.load %arg2[%c0_36, %c0_37] : memref<16x32xf32, #tpu.memory_space<vmem>>, vector<16x32xf32>
    %cst_38 = arith.constant dense<0.000000e+00> : vector<104x32xf32>
    %38 = tpu.matmul %36, %37, %cst_38 {dimension_numbers = #tpu.dot_dimension_numbers<[1], [0], [0], [1], [0, 0, 1, 1], [], []>} : vector<104x16xf32>, vector<16x32xf32>, vector<104x32xf32> -> vector<104x32xf32>
    %39 = arith.maximumf %34, %38 : vector<104x32xf32>
    %c0_39 = arith.constant 0 : index
    %c728 = arith.constant 728 : index
    %c0_40 = arith.constant 0 : index
    %40 = vector.load %arg1[%c0_39, %c728, %c0_40] : memref<1x832x16xf32, #tpu.memory_space<vmem>>, vector<1x104x16xf32>
    %41 = vector.shape_cast %40 : vector<1x104x16xf32> to vector<104x16xf32>
    %c0_41 = arith.constant 0 : index
    %c0_42 = arith.constant 0 : index
    %42 = vector.load %arg2[%c0_41, %c0_42] : memref<16x32xf32, #tpu.memory_space<vmem>>, vector<16x32xf32>
    %cst_43 = arith.constant dense<0.000000e+00> : vector<104x32xf32>
    %43 = tpu.matmul %41, %42, %cst_43 {dimension_numbers = #tpu.dot_dimension_numbers<[1], [0], [0], [1], [0, 0, 1, 1], [], []>} : vector<104x16xf32>, vector<16x32xf32>, vector<104x32xf32> -> vector<104x32xf32>
    %44 = arith.maximumf %39, %43 : vector<104x32xf32>
    %c0_44 = arith.constant 0 : index
    %c0_45 = arith.constant 0 : index
    %45 = vector.load %arg3[%c0_44, %c0_45] : memref<1x32xf32, #tpu.memory_space<vmem>>, vector<1x32xf32>
    %46 = vector.broadcast %45 : vector<1x32xf32> to vector<104x32xf32>
    %47 = arith.addf %44, %46 : vector<104x32xf32>
    %cst_46 = arith.constant 0.000000e+00 : f32
    %48 = vector.broadcast %cst_46 : f32 to vector<104x32xf32>
    %49 = arith.maximumf %47, %48 : vector<104x32xf32>
    %50 = arith.truncf %49 : vector<104x32xf32> to vector<104x32xbf16>
    %c104_47 = arith.constant 104 : index
    %c0_48 = arith.constant 0 : index
    %51 = vector.load %arg11[%c104_47, %c0_48] : memref<208x32xbf16, #tpu.memory_space<vmem>>, vector<104x32xbf16>
    tpu.vector_store %arg11[%c104_47, %c0_48], %50 {strides = array<i32>} : memref<208x32xbf16, #tpu.memory_space<vmem>>, vector<104x32xbf16>,
    %cst_49 = arith.constant 0.000000e+00 : f32
    %52 = vector.broadcast %cst_49 : f32 to vector<160x64xf32>
    %c0_50 = arith.constant 0 : index
    %c0_51 = arith.constant 0 : index
    %53 = vector.load %arg11[%c0_50, %c0_51] : memref<208x32xbf16, #tpu.memory_space<vmem>>, vector<160x32xbf16>
    %c0_52 = arith.constant 0 : index
    %c0_53 = arith.constant 0 : index
    %c0_54 = arith.constant 0 : index
    %54 = vector.load %arg4[%c0_52, %c0_53, %c0_54] : memref<9x32x64xbf16, #tpu.memory_space<vmem>>, vector<1x32x64xbf16>
    %55 = vector.shape_cast %54 : vector<1x32x64xbf16> to vector<32x64xbf16>
    %cst_55 = arith.constant dense<0.000000e+00> : vector<160x64xf32>
    %56 = tpu.matmul %53, %55, %cst_55 {dimension_numbers = #tpu.dot_dimension_numbers<[1], [0], [0], [1], [0, 0, 1, 1], [], []>} : vector<160x32xbf16>, vector<32x64xbf16>, vector<160x64xf32> -> vector<160x64xf32>
    %57 = arith.addf %52, %56 : vector<160x64xf32>
    %c1 = arith.constant 1 : index
    %c0_56 = arith.constant 0 : index
    %58 = vector.load %arg11[%c1, %c0_56] : memref<208x32xbf16, #tpu.memory_space<vmem>>, vector<160x32xbf16>
    %c1_57 = arith.constant 1 : index
    %c0_58 = arith.constant 0 : index
    %c0_59 = arith.constant 0 : index
    %59 = vector.load %arg4[%c1_57, %c0_58, %c0_59] : memref<9x32x64xbf16, #tpu.memory_space<vmem>>, vector<1x32x64xbf16>
    %60 = vector.shape_cast %59 : vector<1x32x64xbf16> to vector<32x64xbf16>
    %cst_60 = arith.constant dense<0.000000e+00> : vector<160x64xf32>
    %61 = tpu.matmul %58, %60, %cst_60 {dimension_numbers = #tpu.dot_dimension_numbers<[1], [0], [0], [1], [0, 0, 1, 1], [], []>} : vector<160x32xbf16>, vector<32x64xbf16>, vector<160x64xf32> -> vector<160x64xf32>
    %62 = arith.addf %57, %61 : vector<160x64xf32>
    %c2 = arith.constant 2 : index
    %c0_61 = arith.constant 0 : index
    %63 = vector.load %arg11[%c2, %c0_61] : memref<208x32xbf16, #tpu.memory_space<vmem>>, vector<160x32xbf16>
    %c2_62 = arith.constant 2 : index
    %c0_63 = arith.constant 0 : index
    %c0_64 = arith.constant 0 : index
    %64 = vector.load %arg4[%c2_62, %c0_63, %c0_64] : memref<9x32x64xbf16, #tpu.memory_space<vmem>>, vector<1x32x64xbf16>
    %65 = vector.shape_cast %64 : vector<1x32x64xbf16> to vector<32x64xbf16>
    %cst_65 = arith.constant dense<0.000000e+00> : vector<160x64xf32>
    %66 = tpu.matmul %63, %65, %cst_65 {dimension_numbers = #tpu.dot_dimension_numbers<[1], [0], [0], [1], [0, 0, 1, 1], [], []>} : vector<160x32xbf16>, vector<32x64xbf16>, vector<160x64xf32> -> vector<160x64xf32>
    %67 = arith.addf %62, %66 : vector<160x64xf32>
    %c16 = arith.constant 16 : index
    %c0_66 = arith.constant 0 : index
    %68 = vector.load %arg11[%c16, %c0_66] : memref<208x32xbf16, #tpu.memory_space<vmem>>, vector<160x32xbf16>
    %c3 = arith.constant 3 : index
    %c0_67 = arith.constant 0 : index
    %c0_68 = arith.constant 0 : index
    %69 = vector.load %arg4[%c3, %c0_67, %c0_68] : memref<9x32x64xbf16, #tpu.memory_space<vmem>>, vector<1x32x64xbf16>
    %70 = vector.shape_cast %69 : vector<1x32x64xbf16> to vector<32x64xbf16>
    %cst_69 = arith.constant dense<0.000000e+00> : vector<160x64xf32>
    %71 = tpu.matmul %68, %70, %cst_69 {dimension_numbers = #tpu.dot_dimension_numbers<[1], [0], [0], [1], [0, 0, 1, 1], [], []>} : vector<160x32xbf16>, vector<32x64xbf16>, vector<160x64xf32> -> vector<160x64xf32>
    %72 = arith.addf %67, %71 : vector<160x64xf32>
    %c17 = arith.constant 17 : index
    %c0_70 = arith.constant 0 : index
    %73 = vector.load %arg11[%c17, %c0_70] : memref<208x32xbf16, #tpu.memory_space<vmem>>, vector<160x32xbf16>
    %c4 = arith.constant 4 : index
    %c0_71 = arith.constant 0 : index
    %c0_72 = arith.constant 0 : index
    %74 = vector.load %arg4[%c4, %c0_71, %c0_72] : memref<9x32x64xbf16, #tpu.memory_space<vmem>>, vector<1x32x64xbf16>
    %75 = vector.shape_cast %74 : vector<1x32x64xbf16> to vector<32x64xbf16>
    %cst_73 = arith.constant dense<0.000000e+00> : vector<160x64xf32>
    %76 = tpu.matmul %73, %75, %cst_73 {dimension_numbers = #tpu.dot_dimension_numbers<[1], [0], [0], [1], [0, 0, 1, 1], [], []>} : vector<160x32xbf16>, vector<32x64xbf16>, vector<160x64xf32> -> vector<160x64xf32>
    %77 = arith.addf %72, %76 : vector<160x64xf32>
    %c18 = arith.constant 18 : index
    %c0_74 = arith.constant 0 : index
    %78 = vector.load %arg11[%c18, %c0_74] : memref<208x32xbf16, #tpu.memory_space<vmem>>, vector<160x32xbf16>
    %c5 = arith.constant 5 : index
    %c0_75 = arith.constant 0 : index
    %c0_76 = arith.constant 0 : index
    %79 = vector.load %arg4[%c5, %c0_75, %c0_76] : memref<9x32x64xbf16, #tpu.memory_space<vmem>>, vector<1x32x64xbf16>
    %80 = vector.shape_cast %79 : vector<1x32x64xbf16> to vector<32x64xbf16>
    %cst_77 = arith.constant dense<0.000000e+00> : vector<160x64xf32>
    %81 = tpu.matmul %78, %80, %cst_77 {dimension_numbers = #tpu.dot_dimension_numbers<[1], [0], [0], [1], [0, 0, 1, 1], [], []>} : vector<160x32xbf16>, vector<32x64xbf16>, vector<160x64xf32> -> vector<160x64xf32>
    %82 = arith.addf %77, %81 : vector<160x64xf32>
    %c32 = arith.constant 32 : index
    %c0_78 = arith.constant 0 : index
    %83 = vector.load %arg11[%c32, %c0_78] : memref<208x32xbf16, #tpu.memory_space<vmem>>, vector<160x32xbf16>
    %c6 = arith.constant 6 : index
    %c0_79 = arith.constant 0 : index
    %c0_80 = arith.constant 0 : index
    %84 = vector.load %arg4[%c6, %c0_79, %c0_80] : memref<9x32x64xbf16, #tpu.memory_space<vmem>>, vector<1x32x64xbf16>
    %85 = vector.shape_cast %84 : vector<1x32x64xbf16> to vector<32x64xbf16>
    %cst_81 = arith.constant dense<0.000000e+00> : vector<160x64xf32>
    %86 = tpu.matmul %83, %85, %cst_81 {dimension_numbers = #tpu.dot_dimension_numbers<[1], [0], [0], [1], [0, 0, 1, 1], [], []>} : vector<160x32xbf16>, vector<32x64xbf16>, vector<160x64xf32> -> vector<160x64xf32>
    %87 = arith.addf %82, %86 : vector<160x64xf32>
    %c33 = arith.constant 33 : index
    %c0_82 = arith.constant 0 : index
    %88 = vector.load %arg11[%c33, %c0_82] : memref<208x32xbf16, #tpu.memory_space<vmem>>, vector<160x32xbf16>
    %c7 = arith.constant 7 : index
    %c0_83 = arith.constant 0 : index
    %c0_84 = arith.constant 0 : index
    %89 = vector.load %arg4[%c7, %c0_83, %c0_84] : memref<9x32x64xbf16, #tpu.memory_space<vmem>>, vector<1x32x64xbf16>
    %90 = vector.shape_cast %89 : vector<1x32x64xbf16> to vector<32x64xbf16>
    %cst_85 = arith.constant dense<0.000000e+00> : vector<160x64xf32>
    %91 = tpu.matmul %88, %90, %cst_85 {dimension_numbers = #tpu.dot_dimension_numbers<[1], [0], [0], [1], [0, 0, 1, 1], [], []>} : vector<160x32xbf16>, vector<32x64xbf16>, vector<160x64xf32> -> vector<160x64xf32>
    %92 = arith.addf %87, %91 : vector<160x64xf32>
    %c34 = arith.constant 34 : index
    %c0_86 = arith.constant 0 : index
    %93 = vector.load %arg11[%c34, %c0_86] : memref<208x32xbf16, #tpu.memory_space<vmem>>, vector<160x32xbf16>
    %c8 = arith.constant 8 : index
    %c0_87 = arith.constant 0 : index
    %c0_88 = arith.constant 0 : index
    %94 = vector.load %arg4[%c8, %c0_87, %c0_88] : memref<9x32x64xbf16, #tpu.memory_space<vmem>>, vector<1x32x64xbf16>
    %95 = vector.shape_cast %94 : vector<1x32x64xbf16> to vector<32x64xbf16>
    %cst_89 = arith.constant dense<0.000000e+00> : vector<160x64xf32>
    %96 = tpu.matmul %93, %95, %cst_89 {dimension_numbers = #tpu.dot_dimension_numbers<[1], [0], [0], [1], [0, 0, 1, 1], [], []>} : vector<160x32xbf16>, vector<32x64xbf16>, vector<160x64xf32> -> vector<160x64xf32>
    %97 = arith.addf %92, %96 : vector<160x64xf32>
    %98 = vector.extract_strided_slice %97 {offsets = [0, 0], sizes = [16, 64], strides = [1, 1]} : vector<160x64xf32> to vector<16x64xf32>
    %99 = vector.extract_strided_slice %97 {offsets = [16, 0], sizes = [16, 64], strides = [1, 1]} : vector<160x64xf32> to vector<16x64xf32>
    %100 = arith.maximumf %98, %99 : vector<16x64xf32>
    %c0_90 = arith.constant 0 : index
    %c0_91 = arith.constant 0 : index
    %101 = vector.load %arg5[%c0_90, %c0_91] : memref<1x64xf32, #tpu.memory_space<vmem>>, vector<1x64xf32>
    %102 = vector.broadcast %101 : vector<1x64xf32> to vector<16x64xf32>
    %103 = arith.addf %100, %102 : vector<16x64xf32>
    %cst_92 = arith.constant 0.000000e+00 : f32
    %104 = vector.broadcast %cst_92 : f32 to vector<16x64xf32>
    %105 = arith.maximumf %103, %104 : vector<16x64xf32>
    %106 = vector.extract_strided_slice %105 {offsets = [0, 0], sizes = [1, 64], strides = [1, 1]} : vector<16x64xf32> to vector<1x64xf32>
    %107 = vector.extract_strided_slice %105 {offsets = [1, 0], sizes = [1, 64], strides = [1, 1]} : vector<16x64xf32> to vector<1x64xf32>
    %108 = arith.maximumf %106, %107 : vector<1x64xf32>
    %109 = arith.truncf %108 : vector<1x64xf32> to vector<1x64xbf16>
    %c0_93 = arith.constant 0 : index
    %c0_94 = arith.constant 0 : index
    %110 = vector.load %arg12[%c0_93, %c0_94] : memref<1x1600xbf16, #tpu.memory_space<vmem>>, vector<1x64xbf16>
    tpu.vector_store %arg12[%c0_93, %c0_94], %109 {strides = array<i32>} : memref<1x1600xbf16, #tpu.memory_space<vmem>>, vector<1x64xbf16>,
    %111 = vector.extract_strided_slice %105 {offsets = [2, 0], sizes = [1, 64], strides = [1, 1]} : vector<16x64xf32> to vector<1x64xf32>
    %112 = vector.extract_strided_slice %105 {offsets = [3, 0], sizes = [1, 64], strides = [1, 1]} : vector<16x64xf32> to vector<1x64xf32>
    %113 = arith.maximumf %111, %112 : vector<1x64xf32>
    %114 = arith.truncf %113 : vector<1x64xf32> to vector<1x64xbf16>
    %c0_95 = arith.constant 0 : index
    %c64 = arith.constant 64 : index
    %115 = vector.load %arg12[%c0_95, %c64] : memref<1x1600xbf16, #tpu.memory_space<vmem>>, vector<1x64xbf16>
    tpu.vector_store %arg12[%c0_95, %c64], %114 {strides = array<i32>} : memref<1x1600xbf16, #tpu.memory_space<vmem>>, vector<1x64xbf16>,
    %116 = vector.extract_strided_slice %105 {offsets = [4, 0], sizes = [1, 64], strides = [1, 1]} : vector<16x64xf32> to vector<1x64xf32>
    %117 = vector.extract_strided_slice %105 {offsets = [5, 0], sizes = [1, 64], strides = [1, 1]} : vector<16x64xf32> to vector<1x64xf32>
    %118 = arith.maximumf %116, %117 : vector<1x64xf32>
    %119 = arith.truncf %118 : vector<1x64xf32> to vector<1x64xbf16>
    %c0_96 = arith.constant 0 : index
    %c128 = arith.constant 128 : index
    %120 = vector.load %arg12[%c0_96, %c128] : memref<1x1600xbf16, #tpu.memory_space<vmem>>, vector<1x64xbf16>
    tpu.vector_store %arg12[%c0_96, %c128], %119 {strides = array<i32>} : memref<1x1600xbf16, #tpu.memory_space<vmem>>, vector<1x64xbf16>,
    %121 = vector.extract_strided_slice %105 {offsets = [6, 0], sizes = [1, 64], strides = [1, 1]} : vector<16x64xf32> to vector<1x64xf32>
    %122 = vector.extract_strided_slice %105 {offsets = [7, 0], sizes = [1, 64], strides = [1, 1]} : vector<16x64xf32> to vector<1x64xf32>
    %123 = arith.maximumf %121, %122 : vector<1x64xf32>
    %124 = arith.truncf %123 : vector<1x64xf32> to vector<1x64xbf16>
    %c0_97 = arith.constant 0 : index
    %c192 = arith.constant 192 : index
    %125 = vector.load %arg12[%c0_97, %c192] : memref<1x1600xbf16, #tpu.memory_space<vmem>>, vector<1x64xbf16>
    tpu.vector_store %arg12[%c0_97, %c192], %124 {strides = array<i32>} : memref<1x1600xbf16, #tpu.memory_space<vmem>>, vector<1x64xbf16>,
    %126 = vector.extract_strided_slice %105 {offsets = [8, 0], sizes = [1, 64], strides = [1, 1]} : vector<16x64xf32> to vector<1x64xf32>
    %127 = vector.extract_strided_slice %105 {offsets = [9, 0], sizes = [1, 64], strides = [1, 1]} : vector<16x64xf32> to vector<1x64xf32>
    %128 = arith.maximumf %126, %127 : vector<1x64xf32>
    %129 = arith.truncf %128 : vector<1x64xf32> to vector<1x64xbf16>
    %c0_98 = arith.constant 0 : index
    %c256 = arith.constant 256 : index
    %130 = vector.load %arg12[%c0_98, %c256] : memref<1x1600xbf16, #tpu.memory_space<vmem>>, vector<1x64xbf16>
    tpu.vector_store %arg12[%c0_98, %c256], %129 {strides = array<i32>} : memref<1x1600xbf16, #tpu.memory_space<vmem>>, vector<1x64xbf16>,
    %131 = vector.extract_strided_slice %97 {offsets = [32, 0], sizes = [16, 64], strides = [1, 1]} : vector<160x64xf32> to vector<16x64xf32>
    %132 = vector.extract_strided_slice %97 {offsets = [48, 0], sizes = [16, 64], strides = [1, 1]} : vector<160x64xf32> to vector<16x64xf32>
    %133 = arith.maximumf %131, %132 : vector<16x64xf32>
    %c0_99 = arith.constant 0 : index
    %c0_100 = arith.constant 0 : index
    %134 = vector.load %arg5[%c0_99, %c0_100] : memref<1x64xf32, #tpu.memory_space<vmem>>, vector<1x64xf32>
    %135 = vector.broadcast %134 : vector<1x64xf32> to vector<16x64xf32>
    %136 = arith.addf %133, %135 : vector<16x64xf32>
    %cst_101 = arith.constant 0.000000e+00 : f32
    %137 = vector.broadcast %cst_101 : f32 to vector<16x64xf32>
    %138 = arith.maximumf %136, %137 : vector<16x64xf32>
    %139 = vector.extract_strided_slice %138 {offsets = [0, 0], sizes = [1, 64], strides = [1, 1]} : vector<16x64xf32> to vector<1x64xf32>
    %140 = vector.extract_strided_slice %138 {offsets = [1, 0], sizes = [1, 64], strides = [1, 1]} : vector<16x64xf32> to vector<1x64xf32>
    %141 = arith.maximumf %139, %140 : vector<1x64xf32>
    %142 = arith.truncf %141 : vector<1x64xf32> to vector<1x64xbf16>
    %c0_102 = arith.constant 0 : index
    %c320 = arith.constant 320 : index
    %143 = vector.load %arg12[%c0_102, %c320] : memref<1x1600xbf16, #tpu.memory_space<vmem>>, vector<1x64xbf16>
    tpu.vector_store %arg12[%c0_102, %c320], %142 {strides = array<i32>} : memref<1x1600xbf16, #tpu.memory_space<vmem>>, vector<1x64xbf16>,
    %144 = vector.extract_strided_slice %138 {offsets = [2, 0], sizes = [1, 64], strides = [1, 1]} : vector<16x64xf32> to vector<1x64xf32>
    %145 = vector.extract_strided_slice %138 {offsets = [3, 0], sizes = [1, 64], strides = [1, 1]} : vector<16x64xf32> to vector<1x64xf32>
    %146 = arith.maximumf %144, %145 : vector<1x64xf32>
    %147 = arith.truncf %146 : vector<1x64xf32> to vector<1x64xbf16>
    %c0_103 = arith.constant 0 : index
    %c384 = arith.constant 384 : index
    %148 = vector.load %arg12[%c0_103, %c384] : memref<1x1600xbf16, #tpu.memory_space<vmem>>, vector<1x64xbf16>
    tpu.vector_store %arg12[%c0_103, %c384], %147 {strides = array<i32>} : memref<1x1600xbf16, #tpu.memory_space<vmem>>, vector<1x64xbf16>,
    %149 = vector.extract_strided_slice %138 {offsets = [4, 0], sizes = [1, 64], strides = [1, 1]} : vector<16x64xf32> to vector<1x64xf32>
    %150 = vector.extract_strided_slice %138 {offsets = [5, 0], sizes = [1, 64], strides = [1, 1]} : vector<16x64xf32> to vector<1x64xf32>
    %151 = arith.maximumf %149, %150 : vector<1x64xf32>
    %152 = arith.truncf %151 : vector<1x64xf32> to vector<1x64xbf16>
    %c0_104 = arith.constant 0 : index
    %c448 = arith.constant 448 : index
    %153 = vector.load %arg12[%c0_104, %c448] : memref<1x1600xbf16, #tpu.memory_space<vmem>>, vector<1x64xbf16>
    tpu.vector_store %arg12[%c0_104, %c448], %152 {strides = array<i32>} : memref<1x1600xbf16, #tpu.memory_space<vmem>>, vector<1x64xbf16>,
    %154 = vector.extract_strided_slice %138 {offsets = [6, 0], sizes = [1, 64], strides = [1, 1]} : vector<16x64xf32> to vector<1x64xf32>
    %155 = vector.extract_strided_slice %138 {offsets = [7, 0], sizes = [1, 64], strides = [1, 1]} : vector<16x64xf32> to vector<1x64xf32>
    %156 = arith.maximumf %154, %155 : vector<1x64xf32>
    %157 = arith.truncf %156 : vector<1x64xf32> to vector<1x64xbf16>
    %c0_105 = arith.constant 0 : index
    %c512 = arith.constant 512 : index
    %158 = vector.load %arg12[%c0_105, %c512] : memref<1x1600xbf16, #tpu.memory_space<vmem>>, vector<1x64xbf16>
    tpu.vector_store %arg12[%c0_105, %c512], %157 {strides = array<i32>} : memref<1x1600xbf16, #tpu.memory_space<vmem>>, vector<1x64xbf16>,
    %159 = vector.extract_strided_slice %138 {offsets = [8, 0], sizes = [1, 64], strides = [1, 1]} : vector<16x64xf32> to vector<1x64xf32>
    %160 = vector.extract_strided_slice %138 {offsets = [9, 0], sizes = [1, 64], strides = [1, 1]} : vector<16x64xf32> to vector<1x64xf32>
    %161 = arith.maximumf %159, %160 : vector<1x64xf32>
    %162 = arith.truncf %161 : vector<1x64xf32> to vector<1x64xbf16>
    %c0_106 = arith.constant 0 : index
    %c576 = arith.constant 576 : index
    %163 = vector.load %arg12[%c0_106, %c576] : memref<1x1600xbf16, #tpu.memory_space<vmem>>, vector<1x64xbf16>
    tpu.vector_store %arg12[%c0_106, %c576], %162 {strides = array<i32>} : memref<1x1600xbf16, #tpu.memory_space<vmem>>, vector<1x64xbf16>,
    %164 = vector.extract_strided_slice %97 {offsets = [64, 0], sizes = [16, 64], strides = [1, 1]} : vector<160x64xf32> to vector<16x64xf32>
    %165 = vector.extract_strided_slice %97 {offsets = [80, 0], sizes = [16, 64], strides = [1, 1]} : vector<160x64xf32> to vector<16x64xf32>
    %166 = arith.maximumf %164, %165 : vector<16x64xf32>
    %c0_107 = arith.constant 0 : index
    %c0_108 = arith.constant 0 : index
    %167 = vector.load %arg5[%c0_107, %c0_108] : memref<1x64xf32, #tpu.memory_space<vmem>>, vector<1x64xf32>
    %168 = vector.broadcast %167 : vector<1x64xf32> to vector<16x64xf32>
    %169 = arith.addf %166, %168 : vector<16x64xf32>
    %cst_109 = arith.constant 0.000000e+00 : f32
    %170 = vector.broadcast %cst_109 : f32 to vector<16x64xf32>
    %171 = arith.maximumf %169, %170 : vector<16x64xf32>
    %172 = vector.extract_strided_slice %171 {offsets = [0, 0], sizes = [1, 64], strides = [1, 1]} : vector<16x64xf32> to vector<1x64xf32>
    %173 = vector.extract_strided_slice %171 {offsets = [1, 0], sizes = [1, 64], strides = [1, 1]} : vector<16x64xf32> to vector<1x64xf32>
    %174 = arith.maximumf %172, %173 : vector<1x64xf32>
    %175 = arith.truncf %174 : vector<1x64xf32> to vector<1x64xbf16>
    %c0_110 = arith.constant 0 : index
    %c640 = arith.constant 640 : index
    %176 = vector.load %arg12[%c0_110, %c640] : memref<1x1600xbf16, #tpu.memory_space<vmem>>, vector<1x64xbf16>
    tpu.vector_store %arg12[%c0_110, %c640], %175 {strides = array<i32>} : memref<1x1600xbf16, #tpu.memory_space<vmem>>, vector<1x64xbf16>,
    %177 = vector.extract_strided_slice %171 {offsets = [2, 0], sizes = [1, 64], strides = [1, 1]} : vector<16x64xf32> to vector<1x64xf32>
    %178 = vector.extract_strided_slice %171 {offsets = [3, 0], sizes = [1, 64], strides = [1, 1]} : vector<16x64xf32> to vector<1x64xf32>
    %179 = arith.maximumf %177, %178 : vector<1x64xf32>
    %180 = arith.truncf %179 : vector<1x64xf32> to vector<1x64xbf16>
    %c0_111 = arith.constant 0 : index
    %c704 = arith.constant 704 : index
    %181 = vector.load %arg12[%c0_111, %c704] : memref<1x1600xbf16, #tpu.memory_space<vmem>>, vector<1x64xbf16>
    tpu.vector_store %arg12[%c0_111, %c704], %180 {strides = array<i32>} : memref<1x1600xbf16, #tpu.memory_space<vmem>>, vector<1x64xbf16>,
    %182 = vector.extract_strided_slice %171 {offsets = [4, 0], sizes = [1, 64], strides = [1, 1]} : vector<16x64xf32> to vector<1x64xf32>
    %183 = vector.extract_strided_slice %171 {offsets = [5, 0], sizes = [1, 64], strides = [1, 1]} : vector<16x64xf32> to vector<1x64xf32>
    %184 = arith.maximumf %182, %183 : vector<1x64xf32>
    %185 = arith.truncf %184 : vector<1x64xf32> to vector<1x64xbf16>
    %c0_112 = arith.constant 0 : index
    %c768 = arith.constant 768 : index
    %186 = vector.load %arg12[%c0_112, %c768] : memref<1x1600xbf16, #tpu.memory_space<vmem>>, vector<1x64xbf16>
    tpu.vector_store %arg12[%c0_112, %c768], %185 {strides = array<i32>} : memref<1x1600xbf16, #tpu.memory_space<vmem>>, vector<1x64xbf16>,
    %187 = vector.extract_strided_slice %171 {offsets = [6, 0], sizes = [1, 64], strides = [1, 1]} : vector<16x64xf32> to vector<1x64xf32>
    %188 = vector.extract_strided_slice %171 {offsets = [7, 0], sizes = [1, 64], strides = [1, 1]} : vector<16x64xf32> to vector<1x64xf32>
    %189 = arith.maximumf %187, %188 : vector<1x64xf32>
    %190 = arith.truncf %189 : vector<1x64xf32> to vector<1x64xbf16>
    %c0_113 = arith.constant 0 : index
    %c832 = arith.constant 832 : index
    %191 = vector.load %arg12[%c0_113, %c832] : memref<1x1600xbf16, #tpu.memory_space<vmem>>, vector<1x64xbf16>
    tpu.vector_store %arg12[%c0_113, %c832], %190 {strides = array<i32>} : memref<1x1600xbf16, #tpu.memory_space<vmem>>, vector<1x64xbf16>,
    %192 = vector.extract_strided_slice %171 {offsets = [8, 0], sizes = [1, 64], strides = [1, 1]} : vector<16x64xf32> to vector<1x64xf32>
    %193 = vector.extract_strided_slice %171 {offsets = [9, 0], sizes = [1, 64], strides = [1, 1]} : vector<16x64xf32> to vector<1x64xf32>
    %194 = arith.maximumf %192, %193 : vector<1x64xf32>
    %195 = arith.truncf %194 : vector<1x64xf32> to vector<1x64xbf16>
    %c0_114 = arith.constant 0 : index
    %c896 = arith.constant 896 : index
    %196 = vector.load %arg12[%c0_114, %c896] : memref<1x1600xbf16, #tpu.memory_space<vmem>>, vector<1x64xbf16>
    tpu.vector_store %arg12[%c0_114, %c896], %195 {strides = array<i32>} : memref<1x1600xbf16, #tpu.memory_space<vmem>>, vector<1x64xbf16>,
    %197 = vector.extract_strided_slice %97 {offsets = [96, 0], sizes = [16, 64], strides = [1, 1]} : vector<160x64xf32> to vector<16x64xf32>
    %198 = vector.extract_strided_slice %97 {offsets = [112, 0], sizes = [16, 64], strides = [1, 1]} : vector<160x64xf32> to vector<16x64xf32>
    %199 = arith.maximumf %197, %198 : vector<16x64xf32>
    %c0_115 = arith.constant 0 : index
    %c0_116 = arith.constant 0 : index
    %200 = vector.load %arg5[%c0_115, %c0_116] : memref<1x64xf32, #tpu.memory_space<vmem>>, vector<1x64xf32>
    %201 = vector.broadcast %200 : vector<1x64xf32> to vector<16x64xf32>
    %202 = arith.addf %199, %201 : vector<16x64xf32>
    %cst_117 = arith.constant 0.000000e+00 : f32
    %203 = vector.broadcast %cst_117 : f32 to vector<16x64xf32>
    %204 = arith.maximumf %202, %203 : vector<16x64xf32>
    %205 = vector.extract_strided_slice %204 {offsets = [0, 0], sizes = [1, 64], strides = [1, 1]} : vector<16x64xf32> to vector<1x64xf32>
    %206 = vector.extract_strided_slice %204 {offsets = [1, 0], sizes = [1, 64], strides = [1, 1]} : vector<16x64xf32> to vector<1x64xf32>
    %207 = arith.maximumf %205, %206 : vector<1x64xf32>
    %208 = arith.truncf %207 : vector<1x64xf32> to vector<1x64xbf16>
    %c0_118 = arith.constant 0 : index
    %c960 = arith.constant 960 : index
    %209 = vector.load %arg12[%c0_118, %c960] : memref<1x1600xbf16, #tpu.memory_space<vmem>>, vector<1x64xbf16>
    tpu.vector_store %arg12[%c0_118, %c960], %208 {strides = array<i32>} : memref<1x1600xbf16, #tpu.memory_space<vmem>>, vector<1x64xbf16>,
    %210 = vector.extract_strided_slice %204 {offsets = [2, 0], sizes = [1, 64], strides = [1, 1]} : vector<16x64xf32> to vector<1x64xf32>
    %211 = vector.extract_strided_slice %204 {offsets = [3, 0], sizes = [1, 64], strides = [1, 1]} : vector<16x64xf32> to vector<1x64xf32>
    %212 = arith.maximumf %210, %211 : vector<1x64xf32>
    %213 = arith.truncf %212 : vector<1x64xf32> to vector<1x64xbf16>
    %c0_119 = arith.constant 0 : index
    %c1024 = arith.constant 1024 : index
    %214 = vector.load %arg12[%c0_119, %c1024] : memref<1x1600xbf16, #tpu.memory_space<vmem>>, vector<1x64xbf16>
    tpu.vector_store %arg12[%c0_119, %c1024], %213 {strides = array<i32>} : memref<1x1600xbf16, #tpu.memory_space<vmem>>, vector<1x64xbf16>,
    %215 = vector.extract_strided_slice %204 {offsets = [4, 0], sizes = [1, 64], strides = [1, 1]} : vector<16x64xf32> to vector<1x64xf32>
    %216 = vector.extract_strided_slice %204 {offsets = [5, 0], sizes = [1, 64], strides = [1, 1]} : vector<16x64xf32> to vector<1x64xf32>
    %217 = arith.maximumf %215, %216 : vector<1x64xf32>
    %218 = arith.truncf %217 : vector<1x64xf32> to vector<1x64xbf16>
    %c0_120 = arith.constant 0 : index
    %c1088 = arith.constant 1088 : index
    %219 = vector.load %arg12[%c0_120, %c1088] : memref<1x1600xbf16, #tpu.memory_space<vmem>>, vector<1x64xbf16>
    tpu.vector_store %arg12[%c0_120, %c1088], %218 {strides = array<i32>} : memref<1x1600xbf16, #tpu.memory_space<vmem>>, vector<1x64xbf16>,
    %220 = vector.extract_strided_slice %204 {offsets = [6, 0], sizes = [1, 64], strides = [1, 1]} : vector<16x64xf32> to vector<1x64xf32>
    %221 = vector.extract_strided_slice %204 {offsets = [7, 0], sizes = [1, 64], strides = [1, 1]} : vector<16x64xf32> to vector<1x64xf32>
    %222 = arith.maximumf %220, %221 : vector<1x64xf32>
    %223 = arith.truncf %222 : vector<1x64xf32> to vector<1x64xbf16>
    %c0_121 = arith.constant 0 : index
    %c1152 = arith.constant 1152 : index
    %224 = vector.load %arg12[%c0_121, %c1152] : memref<1x1600xbf16, #tpu.memory_space<vmem>>, vector<1x64xbf16>
    tpu.vector_store %arg12[%c0_121, %c1152], %223 {strides = array<i32>} : memref<1x1600xbf16, #tpu.memory_space<vmem>>, vector<1x64xbf16>,
    %225 = vector.extract_strided_slice %204 {offsets = [8, 0], sizes = [1, 64], strides = [1, 1]} : vector<16x64xf32> to vector<1x64xf32>
    %226 = vector.extract_strided_slice %204 {offsets = [9, 0], sizes = [1, 64], strides = [1, 1]} : vector<16x64xf32> to vector<1x64xf32>
    %227 = arith.maximumf %225, %226 : vector<1x64xf32>
    %228 = arith.truncf %227 : vector<1x64xf32> to vector<1x64xbf16>
    %c0_122 = arith.constant 0 : index
    %c1216 = arith.constant 1216 : index
    %229 = vector.load %arg12[%c0_122, %c1216] : memref<1x1600xbf16, #tpu.memory_space<vmem>>, vector<1x64xbf16>
    tpu.vector_store %arg12[%c0_122, %c1216], %228 {strides = array<i32>} : memref<1x1600xbf16, #tpu.memory_space<vmem>>, vector<1x64xbf16>,
    %230 = vector.extract_strided_slice %97 {offsets = [128, 0], sizes = [16, 64], strides = [1, 1]} : vector<160x64xf32> to vector<16x64xf32>
    %231 = vector.extract_strided_slice %97 {offsets = [144, 0], sizes = [16, 64], strides = [1, 1]} : vector<160x64xf32> to vector<16x64xf32>
    %232 = arith.maximumf %230, %231 : vector<16x64xf32>
    %c0_123 = arith.constant 0 : index
    %c0_124 = arith.constant 0 : index
    %233 = vector.load %arg5[%c0_123, %c0_124] : memref<1x64xf32, #tpu.memory_space<vmem>>, vector<1x64xf32>
    %234 = vector.broadcast %233 : vector<1x64xf32> to vector<16x64xf32>
    %235 = arith.addf %232, %234 : vector<16x64xf32>
    %cst_125 = arith.constant 0.000000e+00 : f32
    %236 = vector.broadcast %cst_125 : f32 to vector<16x64xf32>
    %237 = arith.maximumf %235, %236 : vector<16x64xf32>
    %238 = vector.extract_strided_slice %237 {offsets = [0, 0], sizes = [1, 64], strides = [1, 1]} : vector<16x64xf32> to vector<1x64xf32>
    %239 = vector.extract_strided_slice %237 {offsets = [1, 0], sizes = [1, 64], strides = [1, 1]} : vector<16x64xf32> to vector<1x64xf32>
    %240 = arith.maximumf %238, %239 : vector<1x64xf32>
    %241 = arith.truncf %240 : vector<1x64xf32> to vector<1x64xbf16>
    %c0_126 = arith.constant 0 : index
    %c1280 = arith.constant 1280 : index
    %242 = vector.load %arg12[%c0_126, %c1280] : memref<1x1600xbf16, #tpu.memory_space<vmem>>, vector<1x64xbf16>
    tpu.vector_store %arg12[%c0_126, %c1280], %241 {strides = array<i32>} : memref<1x1600xbf16, #tpu.memory_space<vmem>>, vector<1x64xbf16>,
    %243 = vector.extract_strided_slice %237 {offsets = [2, 0], sizes = [1, 64], strides = [1, 1]} : vector<16x64xf32> to vector<1x64xf32>
    %244 = vector.extract_strided_slice %237 {offsets = [3, 0], sizes = [1, 64], strides = [1, 1]} : vector<16x64xf32> to vector<1x64xf32>
    %245 = arith.maximumf %243, %244 : vector<1x64xf32>
    %246 = arith.truncf %245 : vector<1x64xf32> to vector<1x64xbf16>
    %c0_127 = arith.constant 0 : index
    %c1344 = arith.constant 1344 : index
    %247 = vector.load %arg12[%c0_127, %c1344] : memref<1x1600xbf16, #tpu.memory_space<vmem>>, vector<1x64xbf16>
    tpu.vector_store %arg12[%c0_127, %c1344], %246 {strides = array<i32>} : memref<1x1600xbf16, #tpu.memory_space<vmem>>, vector<1x64xbf16>,
    %248 = vector.extract_strided_slice %237 {offsets = [4, 0], sizes = [1, 64], strides = [1, 1]} : vector<16x64xf32> to vector<1x64xf32>
    %249 = vector.extract_strided_slice %237 {offsets = [5, 0], sizes = [1, 64], strides = [1, 1]} : vector<16x64xf32> to vector<1x64xf32>
    %250 = arith.maximumf %248, %249 : vector<1x64xf32>
    %251 = arith.truncf %250 : vector<1x64xf32> to vector<1x64xbf16>
    %c0_128 = arith.constant 0 : index
    %c1408 = arith.constant 1408 : index
    %252 = vector.load %arg12[%c0_128, %c1408] : memref<1x1600xbf16, #tpu.memory_space<vmem>>, vector<1x64xbf16>
    tpu.vector_store %arg12[%c0_128, %c1408], %251 {strides = array<i32>} : memref<1x1600xbf16, #tpu.memory_space<vmem>>, vector<1x64xbf16>,
    %253 = vector.extract_strided_slice %237 {offsets = [6, 0], sizes = [1, 64], strides = [1, 1]} : vector<16x64xf32> to vector<1x64xf32>
    %254 = vector.extract_strided_slice %237 {offsets = [7, 0], sizes = [1, 64], strides = [1, 1]} : vector<16x64xf32> to vector<1x64xf32>
    %255 = arith.maximumf %253, %254 : vector<1x64xf32>
    %256 = arith.truncf %255 : vector<1x64xf32> to vector<1x64xbf16>
    %c0_129 = arith.constant 0 : index
    %c1472 = arith.constant 1472 : index
    %257 = vector.load %arg12[%c0_129, %c1472] : memref<1x1600xbf16, #tpu.memory_space<vmem>>, vector<1x64xbf16>
    tpu.vector_store %arg12[%c0_129, %c1472], %256 {strides = array<i32>} : memref<1x1600xbf16, #tpu.memory_space<vmem>>, vector<1x64xbf16>,
    %258 = vector.extract_strided_slice %237 {offsets = [8, 0], sizes = [1, 64], strides = [1, 1]} : vector<16x64xf32> to vector<1x64xf32>
    %259 = vector.extract_strided_slice %237 {offsets = [9, 0], sizes = [1, 64], strides = [1, 1]} : vector<16x64xf32> to vector<1x64xf32>
    %260 = arith.maximumf %258, %259 : vector<1x64xf32>
    %261 = arith.truncf %260 : vector<1x64xf32> to vector<1x64xbf16>
    %c0_130 = arith.constant 0 : index
    %c1536 = arith.constant 1536 : index
    %262 = vector.load %arg12[%c0_130, %c1536] : memref<1x1600xbf16, #tpu.memory_space<vmem>>, vector<1x64xbf16>
    tpu.vector_store %arg12[%c0_130, %c1536], %261 {strides = array<i32>} : memref<1x1600xbf16, #tpu.memory_space<vmem>>, vector<1x64xbf16>,
    %c0_131 = arith.constant 0 : index
    %c0_132 = arith.constant 0 : index
    %263 = vector.load %arg12[%c0_131, %c0_132] : memref<1x1600xbf16, #tpu.memory_space<vmem>>, vector<1x1600xbf16>
    %c0_133 = arith.constant 0 : index
    %c0_134 = arith.constant 0 : index
    %264 = vector.load %arg6[%c0_133, %c0_134] : memref<1600x128xbf16, #tpu.memory_space<vmem>>, vector<1600x128xbf16>
    %cst_135 = arith.constant dense<0.000000e+00> : vector<1x128xf32>
    %265 = tpu.matmul %263, %264, %cst_135 {dimension_numbers = #tpu.dot_dimension_numbers<[1], [0], [0], [1], [0, 0, 1, 1], [], []>} : vector<1x1600xbf16>, vector<1600x128xbf16>, vector<1x128xf32> -> vector<1x128xf32>
    %c0_136 = arith.constant 0 : index
    %c0_137 = arith.constant 0 : index
    %266 = vector.load %arg7[%c0_136, %c0_137] : memref<1x128xf32, #tpu.memory_space<vmem>>, vector<1x128xf32>
    %267 = arith.addf %265, %266 : vector<1x128xf32>
    %cst_138 = arith.constant 0.000000e+00 : f32
    %268 = vector.broadcast %cst_138 : f32 to vector<1x128xf32>
    %269 = arith.maximumf %267, %268 : vector<1x128xf32>
    %270 = arith.truncf %269 : vector<1x128xf32> to vector<1x128xbf16>
    %c0_139 = arith.constant 0 : index
    %c0_140 = arith.constant 0 : index
    %271 = vector.load %arg8[%c0_139, %c0_140] : memref<128x26xbf16, #tpu.memory_space<vmem>>, vector<128x26xbf16>
    %cst_141 = arith.constant dense<0.000000e+00> : vector<1x26xf32>
    %272 = tpu.matmul %270, %271, %cst_141 {dimension_numbers = #tpu.dot_dimension_numbers<[1], [0], [0], [1], [0, 0, 1, 1], [], []>} : vector<1x128xbf16>, vector<128x26xbf16>, vector<1x26xf32> -> vector<1x26xf32>
    %c0_142 = arith.constant 0 : index
    %c0_143 = arith.constant 0 : index
    %273 = vector.load %arg9[%c0_142, %c0_143] : memref<1x26xf32, #tpu.memory_space<vmem>>, vector<1x26xf32>
    %274 = arith.addf %272, %273 : vector<1x26xf32>
    %c0_144 = arith.constant 0 : index
    %c0_145 = arith.constant 0 : index
    %c0_146 = arith.constant 0 : index
    %275 = vector.load %arg10[%c0_144, %c0_145, %c0_146] : memref<1x1x26xf32, #tpu.memory_space<vmem>>, vector<1x1x26xf32>
    %276 = vector.shape_cast %275 : vector<1x1x26xf32> to vector<1x26xf32>
    %277 = vector.shape_cast %274 : vector<1x26xf32> to vector<1x1x26xf32>
    tpu.vector_store %arg10[%c0_144, %c0_145, %c0_146], %277 {strides = array<i32>} : memref<1x1x26xf32, #tpu.memory_space<vmem>>, vector<1x1x26xf32>,
    return
  }
  func.func @transform_0(%arg0: i32) -> (i32, i32, i32) {
    %c0_i32 = arith.constant 0 : i32
    %c0_i32_0 = arith.constant 0 : i32
    %c0_i32_1 = arith.constant 0 : i32
    return %arg0, %c0_i32, %c0_i32_0 : i32, i32, i32
  }
  func.func @transform_1(%arg0: i32) -> (i32, i32) {
    %c0_i32 = arith.constant 0 : i32
    %c0_i32_0 = arith.constant 0 : i32
    %c0_i32_1 = arith.constant 0 : i32
    return %c0_i32, %c0_i32_0 : i32, i32
  }
  func.func @transform_2(%arg0: i32) -> (i32, i32) {
    %c0_i32 = arith.constant 0 : i32
    %c0_i32_0 = arith.constant 0 : i32
    %c0_i32_1 = arith.constant 0 : i32
    return %c0_i32, %c0_i32_0 : i32, i32
  }
  func.func @transform_3(%arg0: i32) -> (i32, i32, i32) {
    %c0_i32 = arith.constant 0 : i32
    %c0_i32_0 = arith.constant 0 : i32
    %c0_i32_1 = arith.constant 0 : i32
    %c0_i32_2 = arith.constant 0 : i32
    return %c0_i32, %c0_i32_0, %c0_i32_1 : i32, i32, i32
  }
  func.func @transform_4(%arg0: i32) -> (i32, i32) {
    %c0_i32 = arith.constant 0 : i32
    %c0_i32_0 = arith.constant 0 : i32
    %c0_i32_1 = arith.constant 0 : i32
    return %c0_i32, %c0_i32_0 : i32, i32
  }
  func.func @transform_5(%arg0: i32) -> (i32, i32) {
    %c0_i32 = arith.constant 0 : i32
    %c0_i32_0 = arith.constant 0 : i32
    %c0_i32_1 = arith.constant 0 : i32
    return %c0_i32, %c0_i32_0 : i32, i32
  }
  func.func @transform_6(%arg0: i32) -> (i32, i32) {
    %c0_i32 = arith.constant 0 : i32
    %c0_i32_0 = arith.constant 0 : i32
    %c0_i32_1 = arith.constant 0 : i32
    return %c0_i32, %c0_i32_0 : i32, i32
  }
  func.func @transform_7(%arg0: i32) -> (i32, i32) {
    %c0_i32 = arith.constant 0 : i32
    %c0_i32_0 = arith.constant 0 : i32
    %c0_i32_1 = arith.constant 0 : i32
    return %c0_i32, %c0_i32_0 : i32, i32
  }
  func.func @transform_8(%arg0: i32) -> (i32, i32) {
    %c0_i32 = arith.constant 0 : i32
    %c0_i32_0 = arith.constant 0 : i32
    %c0_i32_1 = arith.constant 0 : i32
    return %c0_i32, %c0_i32_0 : i32, i32
  }
  func.func @transform_9(%arg0: i32) -> (i32, i32, i32) {
    %c0_i32 = arith.constant 0 : i32
    %c0_i32_0 = arith.constant 0 : i32
    %c0_i32_1 = arith.constant 0 : i32
    return %arg0, %c0_i32, %c0_i32_0 : i32, i32, i32
  }
}

</mosaic_0001>

<llo_original>
// kernel: letter_cnn_forward.1
$region0: #{letter_cnn_forward.1}
  #allocation0 [shape = 'u32[]', space=smem, size = 0x4, offset = 0x4, fixed_abs, tag = 'smem constant byte address 0x4 - core index']
  #allocation1 [shape = 'u32[72,128]{1,0:T(1,128)}', space=vmem, size = 0x9000, scoped, tag = 'internal scratch']
  #allocation2 [shape = 'bf16[208,32]{1,0:T(8,128)(2,1)}', space=vmem, size = 0xd000, scoped, tag = 'scratch operand']
  #allocation3 [shape = 'bf16[1,1600]{1,0:T(2,128)(2,1)}', space=vmem, size = 0x1a00, scoped, tag = 'scratch operand']
  %s0 = inlined_call_operand.vmem [shape: f32[2,832,16], index: 0, kind: input, shape index: {}]
  %s1 = inlined_call_operand.vmem [shape: f32[16,32], index: 1, kind: input, shape index: {}]
  %s2 = inlined_call_operand.vmem [shape: f32[1,32], index: 2, kind: input, shape index: {}]
  %s3 = inlined_call_operand.vmem [shape: bf16[9,32,64], index: 3, kind: input, shape index: {}]
  %s4 = inlined_call_operand.vmem [shape: f32[1,64], index: 4, kind: input, shape index: {}]
  %s5 = inlined_call_operand.vmem [shape: bf16[1600,128], index: 5, kind: input, shape index: {}]
  %s6 = inlined_call_operand.vmem [shape: f32[1,128], index: 6, kind: input, shape index: {}]
  %s7 = inlined_call_operand.vmem [shape: bf16[128,26], index: 7, kind: input, shape index: {}]
  %s8 = inlined_call_operand.vmem [shape: f32[1,26], index: 8, kind: input, shape index: {}]
  %s9 = inlined_call_operand.hbm [shape: f32[2,1,26], index: 9, kind: output, shape index: {}]
  %s10 = sld [smem:[#allocation0]]
  $region69: #{letter_cnn_forward.1} parent=0
    _
  %s12 = ssub.s32 1, %s10
  %s13 = scalar_select 0, %s12, %s10
  $region1: #{letter_cnn_forward.1} parent=0
    #allocation4 [shape = 'u8[1024]{0}', space=vmem, size = 0x400, scoped, tag = 'output window, operand 0']
    #allocation5 [shape = 's32[2]{0}', space=sflag, size = 0x8, scoped, tag = 'scoped memory for letter_cnn_forward.1']
    %14 = vsyncpa [#allocation5], 0
    %s15 = scalar_lea.sflag [#allocation5], 1
    %16 = vsyncpa %s15, 0
    loop: start=0, step=1, limit=4
    $region2: #{letter_cnn_forward.1} parent=1 // loop_pre_header
      _
    $region3: #{letter_cnn_forward.1} parent=1 // loop_header
      %s18 = sphi 0, %s22
      %p19 = scmp.ge.s32.totalorder %s18, 4
      %s28 = sphi 0, %s30
      %s31 = sphi 0, %s28
      %s32 = sphi 0, %s31
      %s48 = sphi 0, %s32
      %s52 = sphi 0, %s52
      %s54 = sphi 0, %s52
      %s55 = sphi 0, %s54
      %s69 = sphi 0, %s55
      %s73 = sphi 0, %s73
      %s75 = sphi 0, %s73
      %s76 = sphi 0, %s75
      %s90 = sphi 0, %s76
      %s94 = sphi 0, %s94
      %s96 = sphi 0, %s94
      %s97 = sphi 0, %s96
      %s111 = sphi 0, %s97
      %s115 = sphi 0, %s115
      %s117 = sphi 0, %s115
      %s118 = sphi 0, %s117
      %s132 = sphi 0, %s118
      %s136 = sphi 0, %s136
      %s138 = sphi 0, %s136
      %s139 = sphi 0, %s138
      %s153 = sphi 0, %s139
      %s157 = sphi 0, %s157
      %s159 = sphi 0, %s157
      %s160 = sphi 0, %s159
      %s174 = sphi 0, %s160
      %s178 = sphi 0, %s178
      %s180 = sphi 0, %s178
      %s181 = sphi 0, %s180
      %s195 = sphi 0, %s181
      %s199 = sphi 0, %s199
      %s201 = sphi 0, %s199
      %s202 = sphi 0, %s201
      %s216 = sphi 0, %s202
      %s222 = sphi 0, %s224
      %s225 = sphi 0, %s222
      %s226 = sphi 0, %s225
      %s242 = sphi 0, %s226
    $region4: #{letter_cnn_forward.1} parent=1 // loop_header_branch
      %21 = sbr.rel (%p19) target = $region8
    $region5: #{letter_cnn_forward.1} parent=1 // loop_body
      %s23 = ssub.s32 %s18, 1
      %s24 = ssub.s32 %s18, 2
      %s25 = sadd.s32 %s18, 1
      %s26 = ssub.s32 %s18, %s25
      %p27 = scmp.eq.s32.totalorder %s26, 0
      %s29 = sadd.s32 %s28, 1
      %s30 = scalar_select %p27, %s28, %s29
      %p33 = pneg %p27
      %p34 = scmp.eq.s32.totalorder %s18, 1
      %p35 = por %p33, %p34
      %p36 = scmp.ne.s32.totalorder %s28, %s31
      %p37 = scmp.eq.s32.totalorder %s18, 0
      %p38 = por %p36, %p37
      %p39 = scmp.ne.s32.totalorder %s28, %s31
      %p40 = scmp.eq.s32.totalorder %s23, 1
      %p41 = por %p39, %p40
      %p42 = scmp.ne.s32.totalorder %s31, %s32
      %p43 = scmp.eq.s32.totalorder %s23, 0
      %p44 = por %p42, %p43
      %p45 = scmp.ne.s32.totalorder %s31, %s32
      %p46 = scmp.eq.s32.totalorder %s24, 1
      %p47 = por %p45, %p46
      %p49 = scmp.ne.s32.totalorder %s32, %s48
      %p50 = scmp.eq.s32.totalorder %s24, 0
      %p51 = por %p49, %p50
      %s53 = sadd.s32 %s52, 1
      %p56 = scmp.eq.s32.totalorder %s18, 1
      %p57 = scmp.ne.s32.totalorder %s52, %s54
      %p58 = scmp.eq.s32.totalorder %s18, 0
      %p59 = por %p57, %p58
      %p60 = scmp.ne.s32.totalorder %s52, %s54
      %p61 = scmp.eq.s32.totalorder %s23, 1
      %p62 = por %p60, %p61
      %p63 = scmp.ne.s32.totalorder %s54, %s55
      %p64 = scmp.eq.s32.totalorder %s23, 0
      %p65 = por %p63, %p64
      %p66 = scmp.ne.s32.totalorder %s54, %s55
      %p67 = scmp.eq.s32.totalorder %s24, 1
      %p68 = por %p66, %p67
      %p70 = scmp.ne.s32.totalorder %s55, %s69
      %p71 = scmp.eq.s32.totalorder %s24, 0
      %p72 = por %p70, %p71
      %s74 = sadd.s32 %s73, 1
      %p77 = scmp.eq.s32.totalorder %s18, 1
      %p78 = scmp.ne.s32.totalorder %s73, %s75
      %p79 = scmp.eq.s32.totalorder %s18, 0
      %p80 = por %p78, %p79
      %p81 = scmp.ne.s32.totalorder %s73, %s75
      %p82 = scmp.eq.s32.totalorder %s23, 1
      %p83 = por %p81, %p82
      %p84 = scmp.ne.s32.totalorder %s75, %s76
      %p85 = scmp.eq.s32.totalorder %s23, 0
      %p86 = por %p84, %p85
      %p87 = scmp.ne.s32.totalorder %s75, %s76
      %p88 = scmp.eq.s32.totalorder %s24, 1
      %p89 = por %p87, %p88
      %p91 = scmp.ne.s32.totalorder %s76, %s90
      %p92 = scmp.eq.s32.totalorder %s24, 0
      %p93 = por %p91, %p92
      %s95 = sadd.s32 %s94, 1
      %p98 = scmp.eq.s32.totalorder %s18, 1
      %p99 = scmp.ne.s32.totalorder %s94, %s96
      %p100 = scmp.eq.s32.totalorder %s18, 0
      %p101 = por %p99, %p100
      %p102 = scmp.ne.s32.totalorder %s94, %s96
      %p103 = scmp.eq.s32.totalorder %s23, 1
      %p104 = por %p102, %p103
      %p105 = scmp.ne.s32.totalorder %s96, %s97
      %p106 = scmp.eq.s32.totalorder %s23, 0
      %p107 = por %p105, %p106
      %p108 = scmp.ne.s32.totalorder %s96, %s97
      %p109 = scmp.eq.s32.totalorder %s24, 1
      %p110 = por %p108, %p109
      %p112 = scmp.ne.s32.totalorder %s97, %s111
      %p113 = scmp.eq.s32.totalorder %s24, 0
      %p114 = por %p112, %p113
      %s116 = sadd.s32 %s115, 1
      %p119 = scmp.eq.s32.totalorder %s18, 1
      %p120 = scmp.ne.s32.totalorder %s115, %s117
      %p121 = scmp.eq.s32.totalorder %s18, 0
      %p122 = por %p120, %p121
      %p123 = scmp.ne.s32.totalorder %s115, %s117
      %p124 = scmp.eq.s32.totalorder %s23, 1
      %p125 = por %p123, %p124
      %p126 = scmp.ne.s32.totalorder %s117, %s118
      %p127 = scmp.eq.s32.totalorder %s23, 0
      %p128 = por %p126, %p127
      %p129 = scmp.ne.s32.totalorder %s117, %s118
      %p130 = scmp.eq.s32.totalorder %s24, 1
      %p131 = por %p129, %p130
      %p133 = scmp.ne.s32.totalorder %s118, %s132
      %p134 = scmp.eq.s32.totalorder %s24, 0
      %p135 = por %p133, %p134
      %s137 = sadd.s32 %s136, 1
      %p140 = scmp.eq.s32.totalorder %s18, 1
      %p141 = scmp.ne.s32.totalorder %s136, %s138
      %p142 = scmp.eq.s32.totalorder %s18, 0
      %p143 = por %p141, %p142
      %p144 = scmp.ne.s32.totalorder %s136, %s138
      %p145 = scmp.eq.s32.totalorder %s23, 1
      %p146 = por %p144, %p145
      %p147 = scmp.ne.s32.totalorder %s138, %s139
      %p148 = scmp.eq.s32.totalorder %s23, 0
      %p149 = por %p147, %p148
      %p150 = scmp.ne.s32.totalorder %s138, %s139
      %p151 = scmp.eq.s32.totalorder %s24, 1
      %p152 = por %p150, %p151
      %p154 = scmp.ne.s32.totalorder %s139, %s153
      %p155 = scmp.eq.s32.totalorder %s24, 0
      %p156 = por %p154, %p155
      %s158 = sadd.s32 %s157, 1
      %p161 = scmp.eq.s32.totalorder %s18, 1
      %p162 = scmp.ne.s32.totalorder %s157, %s159
      %p163 = scmp.eq.s32.totalorder %s18, 0
      %p164 = por %p162, %p163
      %p165 = scmp.ne.s32.totalorder %s157, %s159
      %p166 = scmp.eq.s32.totalorder %s23, 1
      %p167 = por %p165, %p166
      %p168 = scmp.ne.s32.totalorder %s159, %s160
      %p169 = scmp.eq.s32.totalorder %s23, 0
      %p170 = por %p168, %p169
      %p171 = scmp.ne.s32.totalorder %s159, %s160
      %p172 = scmp.eq.s32.totalorder %s24, 1
      %p173 = por %p171, %p172
      %p175 = scmp.ne.s32.totalorder %s160, %s174
      %p176 = scmp.eq.s32.totalorder %s24, 0
      %p177 = por %p175, %p176
      %s179 = sadd.s32 %s178, 1
      %p182 = scmp.eq.s32.totalorder %s18, 1
      %p183 = scmp.ne.s32.totalorder %s178, %s180
      %p184 = scmp.eq.s32.totalorder %s18, 0
      %p185 = por %p183, %p184
      %p186 = scmp.ne.s32.totalorder %s178, %s180
      %p187 = scmp.eq.s32.totalorder %s23, 1
      %p188 = por %p186, %p187
      %p189 = scmp.ne.s32.totalorder %s180, %s181
      %p190 = scmp.eq.s32.totalorder %s23, 0
      %p191 = por %p189, %p190
      %p192 = scmp.ne.s32.totalorder %s180, %s181
      %p193 = scmp.eq.s32.totalorder %s24, 1
      %p194 = por %p192, %p193
      %p196 = scmp.ne.s32.totalorder %s181, %s195
      %p197 = scmp.eq.s32.totalorder %s24, 0
      %p198 = por %p196, %p197
      %s200 = sadd.s32 %s199, 1
      %p203 = scmp.eq.s32.totalorder %s18, 1
      %p204 = scmp.ne.s32.totalorder %s199, %s201
      %p205 = scmp.eq.s32.totalorder %s18, 0
      %p206 = por %p204, %p205
      %p207 = scmp.ne.s32.totalorder %s199, %s201
      %p208 = scmp.eq.s32.totalorder %s23, 1
      %p209 = por %p207, %p208
      %p210 = scmp.ne.s32.totalorder %s201, %s202
      %p211 = scmp.eq.s32.totalorder %s23, 0
      %p212 = por %p210, %p211
      %p213 = scmp.ne.s32.totalorder %s201, %s202
      %p214 = scmp.eq.s32.totalorder %s24, 1
      %p215 = por %p213, %p214
      %p217 = scmp.ne.s32.totalorder %s202, %s216
      %p218 = scmp.eq.s32.totalorder %s24, 0
      %p219 = por %p217, %p218
      %s220 = ssub.s32 %s18, %s25
      %p221 = scmp.eq.s32.totalorder %s220, 0
      %s223 = sadd.s32 %s222, 1
      %s224 = scalar_select %p221, %s222, %s223
      %p227 = pneg %p221
      %p228 = scmp.eq.s32.totalorder %s18, 1
      %p229 = por %p227, %p228
      %p230 = scmp.ne.s32.totalorder %s222, %s225
      %p231 = scmp.eq.s32.totalorder %s18, 0
      %p232 = por %p230, %p231
      %p233 = scmp.ne.s32.totalorder %s222, %s225
      %p234 = scmp.eq.s32.totalorder %s23, 1
      %p235 = por %p233, %p234
      %p236 = scmp.ne.s32.totalorder %s225, %s226
      %p237 = scmp.eq.s32.totalorder %s23, 0
      %p238 = por %p236, %p237
      %p239 = scmp.ne.s32.totalorder %s225, %s226
      %p240 = scmp.eq.s32.totalorder %s24, 1
      %p241 = por %p239, %p240
      %p243 = scmp.ne.s32.totalorder %s226, %s242
      %p244 = scmp.eq.s32.totalorder %s24, 0
      %p245 = por %p243, %p244
      %p246 = scmp.le.s32.totalorder 1, %s18
      %p247 = scmp.lt.s32.totalorder %s18, 3
      %p248 = pnand %p246, %p247
      %p249 = pneg %p248
      // Predicated region
      $region9: #{letter_cnn_forward.1} parent=5 // pred_check
        _
      $region10: #{letter_cnn_forward.1} parent=5 // pred_check_branch
        %251 = sbr.rel (%p248) target = $region12
      $region11: #{letter_cnn_forward.1} parent=5 // pred_region
        %s252 = ssub.s32 %s18, 1
        // Predicated region
        $region13: #{letter_cnn_forward.1} parent=11 // pred_check
          %p253 = pneg %p65
        $region14: #{letter_cnn_forward.1} parent=11 // pred_check_branch
          %255 = sbr.rel (%p253) target = $region16
        $region15: #{letter_cnn_forward.1} parent=11 // pred_region
          _
        $region16: #{letter_cnn_forward.1} parent=11 // pred_fallthru
          _
        // Predicated region
        $region17: #{letter_cnn_forward.1} parent=11 // pred_check
          %p256 = pneg %p86
        $region18: #{letter_cnn_forward.1} parent=11 // pred_check_branch
          %258 = sbr.rel (%p256) target = $region20
        $region19: #{letter_cnn_forward.1} parent=11 // pred_region
          _
        $region20: #{letter_cnn_forward.1} parent=11 // pred_fallthru
          _
        // Predicated region
        $region21: #{letter_cnn_forward.1} parent=11 // pred_check
          %p259 = pneg %p107
        $region22: #{letter_cnn_forward.1} parent=11 // pred_check_branch
          %261 = sbr.rel (%p259) target = $region24
        $region23: #{letter_cnn_forward.1} parent=11 // pred_region
          _
        $region24: #{letter_cnn_forward.1} parent=11 // pred_fallthru
          _
        // Predicated region
        $region25: #{letter_cnn_forward.1} parent=11 // pred_check
          %p262 = pneg %p128
        $region26: #{letter_cnn_forward.1} parent=11 // pred_check_branch
          %264 = sbr.rel (%p262) target = $region28
        $region27: #{letter_cnn_forward.1} parent=11 // pred_region
          _
        $region28: #{letter_cnn_forward.1} parent=11 // pred_fallthru
          _
        // Predicated region
        $region29: #{letter_cnn_forward.1} parent=11 // pred_check
          %p265 = pneg %p149
        $region30: #{letter_cnn_forward.1} parent=11 // pred_check_branch
          %267 = sbr.rel (%p265) target = $region32
        $region31: #{letter_cnn_forward.1} parent=11 // pred_region
          _
        $region32: #{letter_cnn_forward.1} parent=11 // pred_fallthru
          _
        // Predicated region
        $region33: #{letter_cnn_forward.1} parent=11 // pred_check
          %p268 = pneg %p170
        $region34: #{letter_cnn_forward.1} parent=11 // pred_check_branch
          %270 = sbr.rel (%p268) target = $region36
        $region35: #{letter_cnn_forward.1} parent=11 // pred_region
          _
        $region36: #{letter_cnn_forward.1} parent=11 // pred_fallthru
          _
        // Predicated region
        $region37: #{letter_cnn_forward.1} parent=11 // pred_check
          %p271 = pneg %p191
        $region38: #{letter_cnn_forward.1} parent=11 // pred_check_branch
          %273 = sbr.rel (%p271) target = $region40
        $region39: #{letter_cnn_forward.1} parent=11 // pred_region
          _
        $region40: #{letter_cnn_forward.1} parent=11 // pred_fallthru
          _
        // Predicated region
        $region41: #{letter_cnn_forward.1} parent=11 // pred_check
          %p274 = pneg %p212
        $region42: #{letter_cnn_forward.1} parent=11 // pred_check_branch
          %276 = sbr.rel (%p274) target = $region44
        $region43: #{letter_cnn_forward.1} parent=11 // pred_region
          _
        $region44: #{letter_cnn_forward.1} parent=11 // pred_fallthru
          _
      $region12: #{letter_cnn_forward.1} parent=5 // pred_fallthru
        _
      %p277 = scmp.lt.s32.totalorder %s18, 2
      // Predicated region
      $region45: #{letter_cnn_forward.1} parent=5 // pred_check
        %p278 = pneg %p277
      $region46: #{letter_cnn_forward.1} parent=5 // pred_check_branch
        %280 = sbr.rel (%p278) target = $region48
      $region47: #{letter_cnn_forward.1} parent=5 // pred_region
        // Predicated region
        $region49: #{letter_cnn_forward.1} parent=47 // pred_check
          %p281 = pneg %p38
        $region50: #{letter_cnn_forward.1} parent=47 // pred_check_branch
          %283 = sbr.rel (%p281) target = $region52
        $region51: #{letter_cnn_forward.1} parent=47 // pred_region
          %p284 = scmp.lt.s32.totalorder %s18, 1
          %s285 = scalar_select %p284, %s18, 1
          %s286 = smul.addr %s285, 104
          %s287 = smul.addr %s286, 8
          %s288 = scalar_lea.vmem %s0, %s287
        $region52: #{letter_cnn_forward.1} parent=47 // pred_fallthru
          _
      $region48: #{letter_cnn_forward.1} parent=5 // pred_fallthru
        _
      %p289 = scmp.le.s32.totalorder 1, %s18
      %p290 = scmp.lt.s32.totalorder %s18, 3
      %p291 = pnand %p289, %p290
      %p292 = pneg %p291
      // Predicated region
      $region53: #{letter_cnn_forward.1} parent=5 // pred_check
        _
      $region54: #{letter_cnn_forward.1} parent=5 // pred_check_branch
        %294 = sbr.rel (%p291) target = $region56
      $region55: #{letter_cnn_forward.1} parent=5 // pred_region
        %s295 = ssub.s32 %s18, 1
        %p296 = scmp.lt.s32.totalorder %s23, 1
        %s297 = scalar_select %p296, %s23, 1
        %s298 = smul.addr %s297, 104
        %s299 = smul.addr %s298, 8
        %s300 = scalar_lea.vmem %s0, %s299
        %p301 = pneg %p44
        %p302 = pneg %p41
        %p303 = pneg %p65
        %p304 = pneg %p62
        %p305 = pneg %p86
        %p306 = pneg %p83
        %p307 = pneg %p107
        %p308 = pneg %p104
        %p309 = pneg %p128
        %p310 = pneg %p125
        %p311 = pneg %p149
        %p312 = pneg %p146
        %p313 = pneg %p170
        %p314 = pneg %p167
        %p315 = pneg %p191
        %p316 = pneg %p188
        %p317 = pneg %p212
        %p318 = pneg %p209
        %p319 = pneg %p238
        %p320 = pneg %p235
        %s321 = sand.u32 %s225, 1
        %s322 = scalar_lea.sflag [#allocation5], %s321
        %s323 = sand.u32 %s225, 1
        %s324 = scalar_lea.vmem [#allocation4], %s323
        %p325 = scmp.lt.s32.totalorder %s23, 1
        %s326 = scalar_select %p325, %s23, 1
        %s327 = smul.addr %s326, 104
        %s328 = smul.addr %s327, 8
        %s329 = scalar_lea.vmem %s0, %s328
        %v331 = vld [vmem:[%s329] sm:$0xff]
        %v332 = vld [vmem:[%s329 + $0x8] sm:$0xff]
        %v333 = vld [vmem:[%s329 + $0x10] sm:$0xff]
        %v334 = vld [vmem:[%s329 + $0x18] sm:$0xff]
        %v335 = vld [vmem:[%s329 + $0x20] sm:$0xff]
        %v336 = vld [vmem:[%s329 + $0x28] sm:$0xff]
        %v337 = vld [vmem:[%s329 + $0x30] sm:$0xff]
        %v338 = vld [vmem:[%s329 + $0x38] sm:$0xff]
        %v339 = vld [vmem:[%s329 + $0x40] sm:$0xff]
        %v340 = vld [vmem:[%s329 + $0x48] sm:$0xff]
        %v341 = vld [vmem:[%s329 + $0x50] sm:$0xff]
        %v342 = vld [vmem:[%s329 + $0x58] sm:$0xff]
        %v343 = vld [vmem:[%s329 + $0x60] sm:$0xff]
        %v344 = vld [vmem:[%s1] sm:$0xff]
        %v345 = vld [vmem:[%s1 + $0x8] sm:$0xff]
        %vm346 = vcmask 130048
        %v348 = vsel %vm346, %v331, 0
        %v351 = vsel %vm346, %v332, 0
        %v354 = vsel %vm346, %v333, 0
        %v357 = vsel %vm346, %v334, 0
        %v360 = vsel %vm346, %v335, 0
        %v363 = vsel %vm346, %v336, 0
        %v366 = vsel %vm346, %v337, 0
        %v369 = vsel %vm346, %v338, 0
        %v372 = vsel %vm346, %v339, 0
        %v375 = vsel %vm346, %v340, 0
        %v378 = vsel %vm346, %v341, 0
        %v381 = vsel %vm346, %v342, 0
        %v384 = vsel %vm346, %v343, 0
        %386 = vmatpush.msra.mxu0 0.0
        %387 = vmatpush.msra.mxu0 0.0
        %388 = vmatpush.msra.mxu0 0.0
        %389 = vmatpush.msra.mxu0 0.0
        %390 = vmatpush.msra.mxu0 0.0
        %391 = vmatpush.msra.mxu0 0.0
        %392 = vmatpush.msra.mxu0 0.0
        %393 = vmatpush.msra.mxu0 0.0
        %394 = vmatpush.msra.mxu0 0.0
        %395 = vmatpush.msra.mxu0 0.0
        %396 = vmatpush.msra.mxu0 0.0
        %397 = vmatpush.msra.mxu0 0.0
        %398 = vmatpush.msra.mxu0 0.0
        %399 = vmatpush.msra.mxu0 0.0
        %400 = vmatpush.msra.mxu0 %v345
        %401 = vmatpush.msra.mxu0 %v344
        %402 = vmatmul.f32.gmra.mxu0 %v348
        %v403 = vpop.f32.mrf.mxu0
        %v404 = vadd.f32 0.0, %v403
        %405 = vmatmul.f32.gmra.mxu0 %v351
        %v406 = vpop.f32.mrf.mxu0
        %v407 = vadd.f32 0.0, %v406
        %408 = vmatmul.f32.gmra.mxu0 %v354
        %v409 = vpop.f32.mrf.mxu0
        %v410 = vadd.f32 0.0, %v409
        %411 = vmatmul.f32.gmra.mxu0 %v357
        %v412 = vpop.f32.mrf.mxu0
        %v413 = vadd.f32 0.0, %v412
        %414 = vmatmul.f32.gmra.mxu0 %v360
        %v415 = vpop.f32.mrf.mxu0
        %v416 = vadd.f32 0.0, %v415
        %417 = vmatmul.f32.gmra.mxu0 %v363
        %v418 = vpop.f32.mrf.mxu0
        %v419 = vadd.f32 0.0, %v418
        %420 = vmatmul.f32.gmra.mxu0 %v366
        %v421 = vpop.f32.mrf.mxu0
        %v422 = vadd.f32 0.0, %v421
        %423 = vmatmul.f32.gmra.mxu0 %v369
        %v424 = vpop.f32.mrf.mxu0
        %v425 = vadd.f32 0.0, %v424
        %426 = vmatmul.f32.gmra.mxu0 %v372
        %v427 = vpop.f32.mrf.mxu0
        %v428 = vadd.f32 0.0, %v427
        %429 = vmatmul.f32.gmra.mxu0 %v375
        %v430 = vpop.f32.mrf.mxu0
        %v431 = vadd.f32 0.0, %v430
        %432 = vmatmul.f32.gmra.mxu0 %v378
        %v433 = vpop.f32.mrf.mxu0
        %v434 = vadd.f32 0.0, %v433
        %435 = vmatmul.f32.gmra.mxu0 %v381
        %v436 = vpop.f32.mrf.mxu0
        %v437 = vadd.f32 0.0, %v436
        %438 = vmatmul.f32.gmra.mxu0 %v384
        %v439 = vpop.f32.mrf.mxu0
        %v440 = vadd.f32 0.0, %v439
        %441 = vdwg.mxu0
        %v442 = vld [vmem:[%s329 + $0xd0] sm:$0xff]
        %v443 = vld [vmem:[%s329 + $0xd8] sm:$0xff]
        %v444 = vld [vmem:[%s329 + $0xe0] sm:$0xff]
        %v445 = vld [vmem:[%s329 + $0xe8] sm:$0xff]
        %v446 = vld [vmem:[%s329 + $0xf0] sm:$0xff]
        %v447 = vld [vmem:[%s329 + $0xf8] sm:$0xff]
        %v448 = vld [vmem:[%s329 + $0x100] sm:$0xff]
        %v449 = vld [vmem:[%s329 + $0x108] sm:$0xff]
        %v450 = vld [vmem:[%s329 + $0x110] sm:$0xff]
        %v451 = vld [vmem:[%s329 + $0x118] sm:$0xff]
        %v452 = vld [vmem:[%s329 + $0x120] sm:$0xff]
        %v453 = vld [vmem:[%s329 + $0x128] sm:$0xff]
        %v454 = vld [vmem:[%s329 + $0x130] sm:$0xff]
        %v456 = vsel %vm346, %v442, 0
        %v459 = vsel %vm346, %v443, 0
        %v462 = vsel %vm346, %v444, 0
        %v465 = vsel %vm346, %v445, 0
        %v468 = vsel %vm346, %v446, 0
        %v471 = vsel %vm346, %v447, 0
        %v474 = vsel %vm346, %v448, 0
        %v477 = vsel %vm346, %v449, 0
        %v480 = vsel %vm346, %v450, 0
        %v483 = vsel %vm346, %v451, 0
        %v486 = vsel %vm346, %v452, 0
        %v489 = vsel %vm346, %v453, 0
        %v492 = vsel %vm346, %v454, 0
        %494 = vmatpush.msra.mxu0 0.0
        %495 = vmatpush.msra.mxu0 0.0
        %496 = vmatpush.msra.mxu0 0.0
        %497 = vmatpush.msra.mxu0 0.0
        %498 = vmatpush.msra.mxu0 0.0
        %499 = vmatpush.msra.mxu0 0.0
        %500 = vmatpush.msra.mxu0 0.0
        %501 = vmatpush.msra.mxu0 0.0
        %502 = vmatpush.msra.mxu0 0.0
        %503 = vmatpush.msra.mxu0 0.0
        %504 = vmatpush.msra.mxu0 0.0
        %505 = vmatpush.msra.mxu0 0.0
        %506 = vmatpush.msra.mxu0 0.0
        %507 = vmatpush.msra.mxu0 0.0
        %508 = vmatpush.msra.mxu0 %v345
        %509 = vmatpush.msra.mxu0 %v344
        %510 = vmatmul.f32.gmra.mxu0 %v456
        %v511 = vpop.f32.mrf.mxu0
        %v512 = vadd.f32 0.0, %v511
        %513 = vmatmul.f32.gmra.mxu0 %v459
        %v514 = vpop.f32.mrf.mxu0
        %v515 = vadd.f32 0.0, %v514
        %516 = vmatmul.f32.gmra.mxu0 %v462
        %v517 = vpop.f32.mrf.mxu0
        %v518 = vadd.f32 0.0, %v517
        %519 = vmatmul.f32.gmra.mxu0 %v465
        %v520 = vpop.f32.mrf.mxu0
        %v521 = vadd.f32 0.0, %v520
        %522 = vmatmul.f32.gmra.mxu0 %v468
        %v523 = vpop.f32.mrf.mxu0
        %v524 = vadd.f32 0.0, %v523
        %525 = vmatmul.f32.gmra.mxu0 %v471
        %v526 = vpop.f32.mrf.mxu0
        %v527 = vadd.f32 0.0, %v526
        %528 = vmatmul.f32.gmra.mxu0 %v474
        %v529 = vpop.f32.mrf.mxu0
        %v530 = vadd.f32 0.0, %v529
        %531 = vmatmul.f32.gmra.mxu0 %v477
        %v532 = vpop.f32.mrf.mxu0
        %v533 = vadd.f32 0.0, %v532
        %534 = vmatmul.f32.gmra.mxu0 %v480
        %v535 = vpop.f32.mrf.mxu0
        %v536 = vadd.f32 0.0, %v535
        %537 = vmatmul.f32.gmra.mxu0 %v483
        %v538 = vpop.f32.mrf.mxu0
        %v539 = vadd.f32 0.0, %v538
        %540 = vmatmul.f32.gmra.mxu0 %v486
        %v541 = vpop.f32.mrf.mxu0
        %v542 = vadd.f32 0.0, %v541
        %543 = vmatmul.f32.gmra.mxu0 %v489
        %v544 = vpop.f32.mrf.mxu0
        %v545 = vadd.f32 0.0, %v544
        %546 = vmatmul.f32.gmra.mxu0 %v492
        %v547 = vpop.f32.mrf.mxu0
        %v548 = vadd.f32 0.0, %v547
        %549 = vdwg.mxu0
        %v550 = vmax.f32 %v404, %v512
        %v551 = vmax.f32 %v407, %v515
        %v552 = vmax.f32 %v410, %v518
        %v553 = vmax.f32 %v413, %v521
        %v554 = vmax.f32 %v416, %v524
        %v555 = vmax.f32 %v419, %v527
        %v556 = vmax.f32 %v422, %v530
        %v557 = vmax.f32 %v425, %v533
        %v558 = vmax.f32 %v428, %v536
        %v559 = vmax.f32 %v431, %v539
        %v560 = vmax.f32 %v434, %v542
        %v561 = vmax.f32 %v437, %v545
        %v562 = vmax.f32 %v440, %v548
        %v563 = vld [vmem:[%s329 + $0x1a0] sm:$0xff]
        %v564 = vld [vmem:[%s329 + $0x1a8] sm:$0xff]
        %v565 = vld [vmem:[%s329 + $0x1b0] sm:$0xff]
        %v566 = vld [vmem:[%s329 + $0x1b8] sm:$0xff]
        %v567 = vld [vmem:[%s329 + $0x1c0] sm:$0xff]
        %v568 = vld [vmem:[%s329 + $0x1c8] sm:$0xff]
        %v569 = vld [vmem:[%s329 + $0x1d0] sm:$0xff]
        %v570 = vld [vmem:[%s329 + $0x1d8] sm:$0xff]
        %v571 = vld [vmem:[%s329 + $0x1e0] sm:$0xff]
        %v572 = vld [vmem:[%s329 + $0x1e8] sm:$0xff]
        %v573 = vld [vmem:[%s329 + $0x1f0] sm:$0xff]
        %v574 = vld [vmem:[%s329 + $0x1f8] sm:$0xff]
        %v575 = vld [vmem:[%s329 + $0x200] sm:$0xff]
        %v577 = vsel %vm346, %v563, 0
        %v580 = vsel %vm346, %v564, 0
        %v583 = vsel %vm346, %v565, 0
        %v586 = vsel %vm346, %v566, 0
        %v589 = vsel %vm346, %v567, 0
        %v592 = vsel %vm346, %v568, 0
        %v595 = vsel %vm346, %v569, 0
        %v598 = vsel %vm346, %v570, 0
        %v601 = vsel %vm346, %v571, 0
        %v604 = vsel %vm346, %v572, 0
        %v607 = vsel %vm346, %v573, 0
        %v610 = vsel %vm346, %v574, 0
        %v613 = vsel %vm346, %v575, 0
        %615 = vmatpush.msra.mxu0 0.0
        %616 = vmatpush.msra.mxu0 0.0
        %617 = vmatpush.msra.mxu0 0.0
        %618 = vmatpush.msra.mxu0 0.0
        %619 = vmatpush.msra.mxu0 0.0
        %620 = vmatpush.msra.mxu0 0.0
        %621 = vmatpush.msra.mxu0 0.0
        %622 = vmatpush.msra.mxu0 0.0
        %623 = vmatpush.msra.mxu0 0.0
        %624 = vmatpush.msra.mxu0 0.0
        %625 = vmatpush.msra.mxu0 0.0
        %626 = vmatpush.msra.mxu0 0.0
        %627 = vmatpush.msra.mxu0 0.0
        %628 = vmatpush.msra.mxu0 0.0
        %629 = vmatpush.msra.mxu0 %v345
        %630 = vmatpush.msra.mxu0 %v344
        %631 = vmatmul.f32.gmra.mxu0 %v577
        %v632 = vpop.f32.mrf.mxu0
        %v633 = vadd.f32 0.0, %v632
        %634 = vmatmul.f32.gmra.mxu0 %v580
        %v635 = vpop.f32.mrf.mxu0
        %v636 = vadd.f32 0.0, %v635
        %637 = vmatmul.f32.gmra.mxu0 %v583
        %v638 = vpop.f32.mrf.mxu0
        %v639 = vadd.f32 0.0, %v638
        %640 = vmatmul.f32.gmra.mxu0 %v586
        %v641 = vpop.f32.mrf.mxu0
        %v642 = vadd.f32 0.0, %v641
        %643 = vmatmul.f32.gmra.mxu0 %v589
        %v644 = vpop.f32.mrf.mxu0
        %v645 = vadd.f32 0.0, %v644
        %646 = vmatmul.f32.gmra.mxu0 %v592
        %v647 = vpop.f32.mrf.mxu0
        %v648 = vadd.f32 0.0, %v647
        %649 = vmatmul.f32.gmra.mxu0 %v595
        %v650 = vpop.f32.mrf.mxu0
        %v651 = vadd.f32 0.0, %v650
        %652 = vmatmul.f32.gmra.mxu0 %v598
        %v653 = vpop.f32.mrf.mxu0
        %v654 = vadd.f32 0.0, %v653
        %655 = vmatmul.f32.gmra.mxu0 %v601
        %v656 = vpop.f32.mrf.mxu0
        %v657 = vadd.f32 0.0, %v656
        %658 = vmatmul.f32.gmra.mxu0 %v604
        %v659 = vpop.f32.mrf.mxu0
        %v660 = vadd.f32 0.0, %v659
        %661 = vmatmul.f32.gmra.mxu0 %v607
        %v662 = vpop.f32.mrf.mxu0
        %v663 = vadd.f32 0.0, %v662
        %664 = vmatmul.f32.gmra.mxu0 %v610
        %v665 = vpop.f32.mrf.mxu0
        %v666 = vadd.f32 0.0, %v665
        %667 = vmatmul.f32.gmra.mxu0 %v613
        %v668 = vpop.f32.mrf.mxu0
        %v669 = vadd.f32 0.0, %v668
        %670 = vdwg.mxu0
        %v671 = vmax.f32 %v550, %v633
        %v672 = vmax.f32 %v551, %v636
        %v673 = vmax.f32 %v552, %v639
        %v674 = vmax.f32 %v553, %v642
        %v675 = vmax.f32 %v554, %v645
        %v676 = vmax.f32 %v555, %v648
        %v677 = vmax.f32 %v556, %v651
        %v678 = vmax.f32 %v557, %v654
        %v679 = vmax.f32 %v558, %v657
        %v680 = vmax.f32 %v559, %v660
        %v681 = vmax.f32 %v560, %v663
        %v682 = vmax.f32 %v561, %v666
        %v683 = vmax.f32 %v562, %v669
        %v684 = vld [vmem:[%s329 + $0x270] sm:$0xff]
        %v685 = vld [vmem:[%s329 + $0x278] sm:$0xff]
        %v686 = vld [vmem:[%s329 + $0x280] sm:$0xff]
        %v687 = vld [vmem:[%s329 + $0x288] sm:$0xff]
        %v688 = vld [vmem:[%s329 + $0x290] sm:$0xff]
        %v689 = vld [vmem:[%s329 + $0x298] sm:$0xff]
        %v690 = vld [vmem:[%s329 + $0x2a0] sm:$0xff]
        %v691 = vld [vmem:[%s329 + $0x2a8] sm:$0xff]
        %v692 = vld [vmem:[%s329 + $0x2b0] sm:$0xff]
        %v693 = vld [vmem:[%s329 + $0x2b8] sm:$0xff]
        %v694 = vld [vmem:[%s329 + $0x2c0] sm:$0xff]
        %v695 = vld [vmem:[%s329 + $0x2c8] sm:$0xff]
        %v696 = vld [vmem:[%s329 + $0x2d0] sm:$0xff]
        %v698 = vsel %vm346, %v684, 0
        %v701 = vsel %vm346, %v685, 0
        %v704 = vsel %vm346, %v686, 0
        %v707 = vsel %vm346, %v687, 0
        %v710 = vsel %vm346, %v688, 0
        %v713 = vsel %vm346, %v689, 0
        %v716 = vsel %vm346, %v690, 0
        %v719 = vsel %vm346, %v691, 0
        %v722 = vsel %vm346, %v692, 0
        %v725 = vsel %vm346, %v693, 0
        %v728 = vsel %vm346, %v694, 0
        %v731 = vsel %vm346, %v695, 0
        %v734 = vsel %vm346, %v696, 0
        %736 = vmatpush.msra.mxu0 0.0
        %737 = vmatpush.msra.mxu0 0.0
        %738 = vmatpush.msra.mxu0 0.0
        %739 = vmatpush.msra.mxu0 0.0
        %740 = vmatpush.msra.mxu0 0.0
        %741 = vmatpush.msra.mxu0 0.0
        %742 = vmatpush.msra.mxu0 0.0
        %743 = vmatpush.msra.mxu0 0.0
        %744 = vmatpush.msra.mxu0 0.0
        %745 = vmatpush.msra.mxu0 0.0
        %746 = vmatpush.msra.mxu0 0.0
        %747 = vmatpush.msra.mxu0 0.0
        %748 = vmatpush.msra.mxu0 0.0
        %749 = vmatpush.msra.mxu0 0.0
        %750 = vmatpush.msra.mxu0 %v345
        %751 = vmatpush.msra.mxu0 %v344
        %752 = vmatmul.f32.gmra.mxu0 %v698
        %v753 = vpop.f32.mrf.mxu0
        %v754 = vadd.f32 0.0, %v753
        %755 = vmatmul.f32.gmra.mxu0 %v701
        %v756 = vpop.f32.mrf.mxu0
        %v757 = vadd.f32 0.0, %v756
        %758 = vmatmul.f32.gmra.mxu0 %v704
        %v759 = vpop.f32.mrf.mxu0
        %v760 = vadd.f32 0.0, %v759
        %761 = vmatmul.f32.gmra.mxu0 %v707
        %v762 = vpop.f32.mrf.mxu0
        %v763 = vadd.f32 0.0, %v762
        %764 = vmatmul.f32.gmra.mxu0 %v710
        %v765 = vpop.f32.mrf.mxu0
        %v766 = vadd.f32 0.0, %v765
        %767 = vmatmul.f32.gmra.mxu0 %v713
        %v768 = vpop.f32.mrf.mxu0
        %v769 = vadd.f32 0.0, %v768
        %770 = vmatmul.f32.gmra.mxu0 %v716
        %v771 = vpop.f32.mrf.mxu0
        %v772 = vadd.f32 0.0, %v771
        %773 = vmatmul.f32.gmra.mxu0 %v719
        %v774 = vpop.f32.mrf.mxu0
        %v775 = vadd.f32 0.0, %v774
        %776 = vmatmul.f32.gmra.mxu0 %v722
        %v777 = vpop.f32.mrf.mxu0
        %v778 = vadd.f32 0.0, %v777
        %779 = vmatmul.f32.gmra.mxu0 %v725
        %v780 = vpop.f32.mrf.mxu0
        %v781 = vadd.f32 0.0, %v780
        %782 = vmatmul.f32.gmra.mxu0 %v728
        %v783 = vpop.f32.mrf.mxu0
        %v784 = vadd.f32 0.0, %v783
        %785 = vmatmul.f32.gmra.mxu0 %v731
        %v786 = vpop.f32.mrf.mxu0
        %v787 = vadd.f32 0.0, %v786
        %788 = vmatmul.f32.gmra.mxu0 %v734
        %v789 = vpop.f32.mrf.mxu0
        %v790 = vadd.f32 0.0, %v789
        %791 = vdwg.mxu0
        %v792 = vmax.f32 %v671, %v754
        %v793 = vmax.f32 %v672, %v757
        %v794 = vmax.f32 %v673, %v760
        %v795 = vmax.f32 %v674, %v763
        %v796 = vmax.f32 %v675, %v766
        %v797 = vmax.f32 %v676, %v769
        %v798 = vmax.f32 %v677, %v772
        %v799 = vmax.f32 %v678, %v775
        %v800 = vmax.f32 %v679, %v778
        %v801 = vmax.f32 %v680, %v781
        %v802 = vmax.f32 %v681, %v784
        %v803 = vmax.f32 %v682, %v787
        %v804 = vmax.f32 %v683, %v790
        %v805 = vld [vmem:[%s2] sm:$0x1]
        %v807 = vperm.slane %v805, 0
        %v809 = vadd.f32 %v792, %v807
        %v810 = vadd.f32 %v793, %v807
        %v811 = vadd.f32 %v794, %v807
        %v812 = vadd.f32 %v795, %v807
        %v813 = vadd.f32 %v796, %v807
        %v814 = vadd.f32 %v797, %v807
        %v815 = vadd.f32 %v798, %v807
        %v816 = vadd.f32 %v799, %v807
        %v817 = vadd.f32 %v800, %v807
        %v818 = vadd.f32 %v801, %v807
        %v819 = vadd.f32 %v802, %v807
        %v820 = vadd.f32 %v803, %v807
        %v821 = vadd.f32 %v804, %v807
        %v822 = vmax.f32 %v809, 0.0
        %v823 = vmax.f32 %v810, 0.0
        %v824 = vmax.f32 %v811, 0.0
        %v825 = vmax.f32 %v812, 0.0
        %v826 = vmax.f32 %v813, 0.0
        %v827 = vmax.f32 %v814, 0.0
        %v828 = vmax.f32 %v815, 0.0
        %v829 = vmax.f32 %v816, 0.0
        %v830 = vmax.f32 %v817, 0.0
        %v831 = vmax.f32 %v818, 0.0
        %v832 = vmax.f32 %v819, 0.0
        %v833 = vmax.f32 %v820, 0.0
        %v834 = vmax.f32 %v821, 0.0
        %v835 = vpack.c.bf16 %v822, %v822
        %v836 = vpack.c.bf16 %v823, %v823
        %v837 = vpack.c.bf16 %v824, %v824
        %v838 = vpack.c.bf16 %v825, %v825
        %v839 = vpack.c.bf16 %v826, %v826
        %v840 = vpack.c.bf16 %v827, %v827
        %v841 = vpack.c.bf16 %v828, %v828
        %v842 = vpack.c.bf16 %v829, %v829
        %v843 = vpack.c.bf16 %v830, %v830
        %v844 = vpack.c.bf16 %v831, %v831
        %v845 = vpack.c.bf16 %v832, %v832
        %v846 = vpack.c.bf16 %v833, %v833
        %v847 = vpack.c.bf16 %v834, %v834
        %vm848 = vcmask 257024
        %849 = vst.msk [vmem:[#allocation2] sm:$0xf] %vm848, %v835
        %850 = vst.msk [vmem:[#allocation2 + $0x4] sm:$0xf] %vm848, %v836
        %851 = vst.msk [vmem:[#allocation2 + $0x8] sm:$0xf] %vm848, %v837
        %852 = vst.msk [vmem:[#allocation2 + $0xc] sm:$0xf] %vm848, %v838
        %853 = vst.msk [vmem:[#allocation2 + $0x10] sm:$0xf] %vm848, %v839
        %854 = vst.msk [vmem:[#allocation2 + $0x14] sm:$0xf] %vm848, %v840
        %855 = vst.msk [vmem:[#allocation2 + $0x18] sm:$0xf] %vm848, %v841
        %856 = vst.msk [vmem:[#allocation2 + $0x1c] sm:$0xf] %vm848, %v842
        %857 = vst.msk [vmem:[#allocation2 + $0x20] sm:$0xf] %vm848, %v843
        %858 = vst.msk [vmem:[#allocation2 + $0x24] sm:$0xf] %vm848, %v844
        %859 = vst.msk [vmem:[#allocation2 + $0x28] sm:$0xf] %vm848, %v845
        %860 = vst.msk [vmem:[#allocation2 + $0x2c] sm:$0xf] %vm848, %v846
        %861 = vst.msk [vmem:[#allocation2 + $0x30] sm:$0xf] %vm848, %v847
        %v862 = vld [vmem:[%s329 + $0x68] sm:$0xff]
        %v863 = vld [vmem:[%s329 + $0x70] sm:$0xff]
        %v864 = vld [vmem:[%s329 + $0x78] sm:$0xff]
        %v865 = vld [vmem:[%s329 + $0x80] sm:$0xff]
        %v866 = vld [vmem:[%s329 + $0x88] sm:$0xff]
        %v867 = vld [vmem:[%s329 + $0x90] sm:$0xff]
        %v868 = vld [vmem:[%s329 + $0x98] sm:$0xff]
        %v869 = vld [vmem:[%s329 + $0xa0] sm:$0xff]
        %v870 = vld [vmem:[%s329 + $0xa8] sm:$0xff]
        %v871 = vld [vmem:[%s329 + $0xb0] sm:$0xff]
        %v872 = vld [vmem:[%s329 + $0xb8] sm:$0xff]
        %v873 = vld [vmem:[%s329 + $0xc0] sm:$0xff]
        %v874 = vld [vmem:[%s329 + $0xc8] sm:$0xff]
        %v875 = vld [vmem:[%s1] sm:$0xff]
        %v876 = vld [vmem:[%s1 + $0x8] sm:$0xff]
        %v878 = vsel %vm346, %v862, 0
        %v881 = vsel %vm346, %v863, 0
        %v884 = vsel %vm346, %v864, 0
        %v887 = vsel %vm346, %v865, 0
        %v890 = vsel %vm346, %v866, 0
        %v893 = vsel %vm346, %v867, 0
        %v896 = vsel %vm346, %v868, 0
        %v899 = vsel %vm346, %v869, 0
        %v902 = vsel %vm346, %v870, 0
        %v905 = vsel %vm346, %v871, 0
        %v908 = vsel %vm346, %v872, 0
        %v911 = vsel %vm346, %v873, 0
        %v914 = vsel %vm346, %v874, 0
        %916 = vmatpush.msra.mxu0 0.0
        %917 = vmatpush.msra.mxu0 0.0
        %918 = vmatpush.msra.mxu0 0.0
        %919 = vmatpush.msra.mxu0 0.0
        %920 = vmatpush.msra.mxu0 0.0
        %921 = vmatpush.msra.mxu0 0.0
        %922 = vmatpush.msra.mxu0 0.0
        %923 = vmatpush.msra.mxu0 0.0
        %924 = vmatpush.msra.mxu0 0.0
        %925 = vmatpush.msra.mxu0 0.0
        %926 = vmatpush.msra.mxu0 0.0
        %927 = vmatpush.msra.mxu0 0.0
        %928 = vmatpush.msra.mxu0 0.0
        %929 = vmatpush.msra.mxu0 0.0
        %930 = vmatpush.msra.mxu0 %v876
        %931 = vmatpush.msra.mxu0 %v875
        %932 = vmatmul.f32.gmra.mxu0 %v878
        %v933 = vpop.f32.mrf.mxu0
        %v934 = vadd.f32 0.0, %v933
        %935 = vmatmul.f32.gmra.mxu0 %v881
        %v936 = vpop.f32.mrf.mxu0
        %v937 = vadd.f32 0.0, %v936
        %938 = vmatmul.f32.gmra.mxu0 %v884
        %v939 = vpop.f32.mrf.mxu0
        %v940 = vadd.f32 0.0, %v939
        %941 = vmatmul.f32.gmra.mxu0 %v887
        %v942 = vpop.f32.mrf.mxu0
        %v943 = vadd.f32 0.0, %v942
        %944 = vmatmul.f32.gmra.mxu0 %v890
        %v945 = vpop.f32.mrf.mxu0
        %v946 = vadd.f32 0.0, %v945
        %947 = vmatmul.f32.gmra.mxu0 %v893
        %v948 = vpop.f32.mrf.mxu0
        %v949 = vadd.f32 0.0, %v948
        %950 = vmatmul.f32.gmra.mxu0 %v896
        %v951 = vpop.f32.mrf.mxu0
        %v952 = vadd.f32 0.0, %v951
        %953 = vmatmul.f32.gmra.mxu0 %v899
        %v954 = vpop.f32.mrf.mxu0
        %v955 = vadd.f32 0.0, %v954
        %956 = vmatmul.f32.gmra.mxu0 %v902
        %v957 = vpop.f32.mrf.mxu0
        %v958 = vadd.f32 0.0, %v957
        %959 = vmatmul.f32.gmra.mxu0 %v905
        %v960 = vpop.f32.mrf.mxu0
        %v961 = vadd.f32 0.0, %v960
        %962 = vmatmul.f32.gmra.mxu0 %v908
        %v963 = vpop.f32.mrf.mxu0
        %v964 = vadd.f32 0.0, %v963
        %965 = vmatmul.f32.gmra.mxu0 %v911
        %v966 = vpop.f32.mrf.mxu0
        %v967 = vadd.f32 0.0, %v966
        %968 = vmatmul.f32.gmra.mxu0 %v914
        %v969 = vpop.f32.mrf.mxu0
        %v970 = vadd.f32 0.0, %v969
        %971 = vdwg.mxu0
        %v972 = vld [vmem:[%s329 + $0x138] sm:$0xff]
        %v973 = vld [vmem:[%s329 + $0x140] sm:$0xff]
        %v974 = vld [vmem:[%s329 + $0x148] sm:$0xff]
        %v975 = vld [vmem:[%s329 + $0x150] sm:$0xff]
        %v976 = vld [vmem:[%s329 + $0x158] sm:$0xff]
        %v977 = vld [vmem:[%s329 + $0x160] sm:$0xff]
        %v978 = vld [vmem:[%s329 + $0x168] sm:$0xff]
        %v979 = vld [vmem:[%s329 + $0x170] sm:$0xff]
        %v980 = vld [vmem:[%s329 + $0x178] sm:$0xff]
        %v981 = vld [vmem:[%s329 + $0x180] sm:$0xff]
        %v982 = vld [vmem:[%s329 + $0x188] sm:$0xff]
        %v983 = vld [vmem:[%s329 + $0x190] sm:$0xff]
        %v984 = vld [vmem:[%s329 + $0x198] sm:$0xff]
        %v986 = vsel %vm346, %v972, 0
        %v989 = vsel %vm346, %v973, 0
        %v992 = vsel %vm346, %v974, 0
        %v995 = vsel %vm346, %v975, 0
        %v998 = vsel %vm346, %v976, 0
        %v1001 = vsel %vm346, %v977, 0
        %v1004 = vsel %vm346, %v978, 0
        %v1007 = vsel %vm346, %v979, 0
        %v1010 = vsel %vm346, %v980, 0
        %v1013 = vsel %vm346, %v981, 0
        %v1016 = vsel %vm346, %v982, 0
        %v1019 = vsel %vm346, %v983, 0
        %v1022 = vsel %vm346, %v984, 0
        %1024 = vmatpush.msra.mxu0 0.0
        %1025 = vmatpush.msra.mxu0 0.0
        %1026 = vmatpush.msra.mxu0 0.0
        %1027 = vmatpush.msra.mxu0 0.0
        %1028 = vmatpush.msra.mxu0 0.0
        %1029 = vmatpush.msra.mxu0 0.0
        %1030 = vmatpush.msra.mxu0 0.0
        %1031 = vmatpush.msra.mxu0 0.0
        %1032 = vmatpush.msra.mxu0 0.0
        %1033 = vmatpush.msra.mxu0 0.0
        %1034 = vmatpush.msra.mxu0 0.0
        %1035 = vmatpush.msra.mxu0 0.0
        %1036 = vmatpush.msra.mxu0 0.0
        %1037 = vmatpush.msra.mxu0 0.0
        %1038 = vmatpush.msra.mxu0 %v876
        %1039 = vmatpush.msra.mxu0 %v875
        %1040 = vmatmul.f32.gmra.mxu0 %v986
        %v1041 = vpop.f32.mrf.mxu0
        %v1042 = vadd.f32 0.0, %v1041
        %1043 = vmatmul.f32.gmra.mxu0 %v989
        %v1044 = vpop.f32.mrf.mxu0
        %v1045 = vadd.f32 0.0, %v1044
        %1046 = vmatmul.f32.gmra.mxu0 %v992
        %v1047 = vpop.f32.mrf.mxu0
        %v1048 = vadd.f32 0.0, %v1047
        %1049 = vmatmul.f32.gmra.mxu0 %v995
        %v1050 = vpop.f32.mrf.mxu0
        %v1051 = vadd.f32 0.0, %v1050
        %1052 = vmatmul.f32.gmra.mxu0 %v998
        %v1053 = vpop.f32.mrf.mxu0
        %v1054 = vadd.f32 0.0, %v1053
        %1055 = vmatmul.f32.gmra.mxu0 %v1001
        %v1056 = vpop.f32.mrf.mxu0
        %v1057 = vadd.f32 0.0, %v1056
        %1058 = vmatmul.f32.gmra.mxu0 %v1004
        %v1059 = vpop.f32.mrf.mxu0
        %v1060 = vadd.f32 0.0, %v1059
        %1061 = vmatmul.f32.gmra.mxu0 %v1007
        %v1062 = vpop.f32.mrf.mxu0
        %v1063 = vadd.f32 0.0, %v1062
        %1064 = vmatmul.f32.gmra.mxu0 %v1010
        %v1065 = vpop.f32.mrf.mxu0
        %v1066 = vadd.f32 0.0, %v1065
        %1067 = vmatmul.f32.gmra.mxu0 %v1013
        %v1068 = vpop.f32.mrf.mxu0
        %v1069 = vadd.f32 0.0, %v1068
        %1070 = vmatmul.f32.gmra.mxu0 %v1016
        %v1071 = vpop.f32.mrf.mxu0
        %v1072 = vadd.f32 0.0, %v1071
        %1073 = vmatmul.f32.gmra.mxu0 %v1019
        %v1074 = vpop.f32.mrf.mxu0
        %v1075 = vadd.f32 0.0, %v1074
        %1076 = vmatmul.f32.gmra.mxu0 %v1022
        %v1077 = vpop.f32.mrf.mxu0
        %v1078 = vadd.f32 0.0, %v1077
        %1079 = vdwg.mxu0
        %v1080 = vmax.f32 %v934, %v1042
        %v1081 = vmax.f32 %v937, %v1045
        %v1082 = vmax.f32 %v940, %v1048
        %v1083 = vmax.f32 %v943, %v1051
        %v1084 = vmax.f32 %v946, %v1054
        %v1085 = vmax.f32 %v949, %v1057
        %v1086 = vmax.f32 %v952, %v1060
        %v1087 = vmax.f32 %v955, %v1063
        %v1088 = vmax.f32 %v958, %v1066
        %v1089 = vmax.f32 %v961, %v1069
        %v1090 = vmax.f32 %v964, %v1072
        %v1091 = vmax.f32 %v967, %v1075
        %v1092 = vmax.f32 %v970, %v1078
        %v1093 = vld [vmem:[%s329 + $0x208] sm:$0xff]
        %v1094 = vld [vmem:[%s329 + $0x210] sm:$0xff]
        %v1095 = vld [vmem:[%s329 + $0x218] sm:$0xff]
        %v1096 = vld [vmem:[%s329 + $0x220] sm:$0xff]
        %v1097 = vld [vmem:[%s329 + $0x228] sm:$0xff]
        %v1098 = vld [vmem:[%s329 + $0x230] sm:$0xff]
        %v1099 = vld [vmem:[%s329 + $0x238] sm:$0xff]
        %v1100 = vld [vmem:[%s329 + $0x240] sm:$0xff]
        %v1101 = vld [vmem:[%s329 + $0x248] sm:$0xff]
        %v1102 = vld [vmem:[%s329 + $0x250] sm:$0xff]
        %v1103 = vld [vmem:[%s329 + $0x258] sm:$0xff]
        %v1104 = vld [vmem:[%s329 + $0x260] sm:$0xff]
        %v1105 = vld [vmem:[%s329 + $0x268] sm:$0xff]
        %v1107 = vsel %vm346, %v1093, 0
        %v1110 = vsel %vm346, %v1094, 0
        %v1113 = vsel %vm346, %v1095, 0
        %v1116 = vsel %vm346, %v1096, 0
        %v1119 = vsel %vm346, %v1097, 0
        %v1122 = vsel %vm346, %v1098, 0
        %v1125 = vsel %vm346, %v1099, 0
        %v1128 = vsel %vm346, %v1100, 0
        %v1131 = vsel %vm346, %v1101, 0
        %v1134 = vsel %vm346, %v1102, 0
        %v1137 = vsel %vm346, %v1103, 0
        %v1140 = vsel %vm346, %v1104, 0
        %v1143 = vsel %vm346, %v1105, 0
        %1145 = vmatpush.msra.mxu0 0.0
        %1146 = vmatpush.msra.mxu0 0.0
        %1147 = vmatpush.msra.mxu0 0.0
        %1148 = vmatpush.msra.mxu0 0.0
        %1149 = vmatpush.msra.mxu0 0.0
        %1150 = vmatpush.msra.mxu0 0.0
        %1151 = vmatpush.msra.mxu0 0.0
        %1152 = vmatpush.msra.mxu0 0.0
        %1153 = vmatpush.msra.mxu0 0.0
        %1154 = vmatpush.msra.mxu0 0.0
        %1155 = vmatpush.msra.mxu0 0.0
        %1156 = vmatpush.msra.mxu0 0.0
        %1157 = vmatpush.msra.mxu0 0.0
        %1158 = vmatpush.msra.mxu0 0.0
        %1159 = vmatpush.msra.mxu0 %v876
        %1160 = vmatpush.msra.mxu0 %v875
        %1161 = vmatmul.f32.gmra.mxu0 %v1107
        %v1162 = vpop.f32.mrf.mxu0
        %v1163 = vadd.f32 0.0, %v1162
        %1164 = vmatmul.f32.gmra.mxu0 %v1110
        %v1165 = vpop.f32.mrf.mxu0
        %v1166 = vadd.f32 0.0, %v1165
        %1167 = vmatmul.f32.gmra.mxu0 %v1113
        %v1168 = vpop.f32.mrf.mxu0
        %v1169 = vadd.f32 0.0, %v1168
        %1170 = vmatmul.f32.gmra.mxu0 %v1116
        %v1171 = vpop.f32.mrf.mxu0
        %v1172 = vadd.f32 0.0, %v1171
        %1173 = vmatmul.f32.gmra.mxu0 %v1119
        %v1174 = vpop.f32.mrf.mxu0
        %v1175 = vadd.f32 0.0, %v1174
        %1176 = vmatmul.f32.gmra.mxu0 %v1122
        %v1177 = vpop.f32.mrf.mxu0
        %v1178 = vadd.f32 0.0, %v1177
        %1179 = vmatmul.f32.gmra.mxu0 %v1125
        %v1180 = vpop.f32.mrf.mxu0
        %v1181 = vadd.f32 0.0, %v1180
        %1182 = vmatmul.f32.gmra.mxu0 %v1128
        %v1183 = vpop.f32.mrf.mxu0
        %v1184 = vadd.f32 0.0, %v1183
        %1185 = vmatmul.f32.gmra.mxu0 %v1131
        %v1186 = vpop.f32.mrf.mxu0
        %v1187 = vadd.f32 0.0, %v1186
        %1188 = vmatmul.f32.gmra.mxu0 %v1134
        %v1189 = vpop.f32.mrf.mxu0
        %v1190 = vadd.f32 0.0, %v1189
        %1191 = vmatmul.f32.gmra.mxu0 %v1137
        %v1192 = vpop.f32.mrf.mxu0
        %v1193 = vadd.f32 0.0, %v1192
        %1194 = vmatmul.f32.gmra.mxu0 %v1140
        %v1195 = vpop.f32.mrf.mxu0
        %v1196 = vadd.f32 0.0, %v1195
        %1197 = vmatmul.f32.gmra.mxu0 %v1143
        %v1198 = vpop.f32.mrf.mxu0
        %v1199 = vadd.f32 0.0, %v1198
        %1200 = vdwg.mxu0
        %v1201 = vmax.f32 %v1080, %v1163
        %v1202 = vmax.f32 %v1081, %v1166
        %v1203 = vmax.f32 %v1082, %v1169
        %v1204 = vmax.f32 %v1083, %v1172
        %v1205 = vmax.f32 %v1084, %v1175
        %v1206 = vmax.f32 %v1085, %v1178
        %v1207 = vmax.f32 %v1086, %v1181
        %v1208 = vmax.f32 %v1087, %v1184
        %v1209 = vmax.f32 %v1088, %v1187
        %v1210 = vmax.f32 %v1089, %v1190
        %v1211 = vmax.f32 %v1090, %v1193
        %v1212 = vmax.f32 %v1091, %v1196
        %v1213 = vmax.f32 %v1092, %v1199
        %v1214 = vld [vmem:[%s329 + $0x2d8] sm:$0xff]
        %v1215 = vld [vmem:[%s329 + $0x2e0] sm:$0xff]
        %v1216 = vld [vmem:[%s329 + $0x2e8] sm:$0xff]
        %v1217 = vld [vmem:[%s329 + $0x2f0] sm:$0xff]
        %v1218 = vld [vmem:[%s329 + $0x2f8] sm:$0xff]
        %v1219 = vld [vmem:[%s329 + $0x300] sm:$0xff]
        %v1220 = vld [vmem:[%s329 + $0x308] sm:$0xff]
        %v1221 = vld [vmem:[%s329 + $0x310] sm:$0xff]
        %v1222 = vld [vmem:[%s329 + $0x318] sm:$0xff]
        %v1223 = vld [vmem:[%s329 + $0x320] sm:$0xff]
        %v1224 = vld [vmem:[%s329 + $0x328] sm:$0xff]
        %v1225 = vld [vmem:[%s329 + $0x330] sm:$0xff]
        %v1226 = vld [vmem:[%s329 + $0x338] sm:$0xff]
        %v1228 = vsel %vm346, %v1214, 0
        %v1231 = vsel %vm346, %v1215, 0
        %v1234 = vsel %vm346, %v1216, 0
        %v1237 = vsel %vm346, %v1217, 0
        %v1240 = vsel %vm346, %v1218, 0
        %v1243 = vsel %vm346, %v1219, 0
        %v1246 = vsel %vm346, %v1220, 0
        %v1249 = vsel %vm346, %v1221, 0
        %v1252 = vsel %vm346, %v1222, 0
        %v1255 = vsel %vm346, %v1223, 0
        %v1258 = vsel %vm346, %v1224, 0
        %v1261 = vsel %vm346, %v1225, 0
        %v1264 = vsel %vm346, %v1226, 0
        %1266 = vmatpush.msra.mxu0 0.0
        %1267 = vmatpush.msra.mxu0 0.0
        %1268 = vmatpush.msra.mxu0 0.0
        %1269 = vmatpush.msra.mxu0 0.0
        %1270 = vmatpush.msra.mxu0 0.0
        %1271 = vmatpush.msra.mxu0 0.0
        %1272 = vmatpush.msra.mxu0 0.0
        %1273 = vmatpush.msra.mxu0 0.0
        %1274 = vmatpush.msra.mxu0 0.0
        %1275 = vmatpush.msra.mxu0 0.0
        %1276 = vmatpush.msra.mxu0 0.0
        %1277 = vmatpush.msra.mxu0 0.0
        %1278 = vmatpush.msra.mxu0 0.0
        %1279 = vmatpush.msra.mxu0 0.0
        %1280 = vmatpush.msra.mxu0 %v876
        %1281 = vmatpush.msra.mxu0 %v875
        %1282 = vmatmul.f32.gmra.mxu0 %v1228
        %v1283 = vpop.f32.mrf.mxu0
        %v1284 = vadd.f32 0.0, %v1283
        %1285 = vmatmul.f32.gmra.mxu0 %v1231
        %v1286 = vpop.f32.mrf.mxu0
        %v1287 = vadd.f32 0.0, %v1286
        %1288 = vmatmul.f32.gmra.mxu0 %v1234
        %v1289 = vpop.f32.mrf.mxu0
        %v1290 = vadd.f32 0.0, %v1289
        %1291 = vmatmul.f32.gmra.mxu0 %v1237
        %v1292 = vpop.f32.mrf.mxu0
        %v1293 = vadd.f32 0.0, %v1292
        %1294 = vmatmul.f32.gmra.mxu0 %v1240
        %v1295 = vpop.f32.mrf.mxu0
        %v1296 = vadd.f32 0.0, %v1295
        %1297 = vmatmul.f32.gmra.mxu0 %v1243
        %v1298 = vpop.f32.mrf.mxu0
        %v1299 = vadd.f32 0.0, %v1298
        %1300 = vmatmul.f32.gmra.mxu0 %v1246
        %v1301 = vpop.f32.mrf.mxu0
        %v1302 = vadd.f32 0.0, %v1301
        %1303 = vmatmul.f32.gmra.mxu0 %v1249
        %v1304 = vpop.f32.mrf.mxu0
        %v1305 = vadd.f32 0.0, %v1304
        %1306 = vmatmul.f32.gmra.mxu0 %v1252
        %v1307 = vpop.f32.mrf.mxu0
        %v1308 = vadd.f32 0.0, %v1307
        %1309 = vmatmul.f32.gmra.mxu0 %v1255
        %v1310 = vpop.f32.mrf.mxu0
        %v1311 = vadd.f32 0.0, %v1310
        %1312 = vmatmul.f32.gmra.mxu0 %v1258
        %v1313 = vpop.f32.mrf.mxu0
        %v1314 = vadd.f32 0.0, %v1313
        %1315 = vmatmul.f32.gmra.mxu0 %v1261
        %v1316 = vpop.f32.mrf.mxu0
        %v1317 = vadd.f32 0.0, %v1316
        %1318 = vmatmul.f32.gmra.mxu0 %v1264
        %v1319 = vpop.f32.mrf.mxu0
        %v1320 = vadd.f32 0.0, %v1319
        %1321 = vdwg.mxu0
        %v1322 = vmax.f32 %v1201, %v1284
        %v1323 = vmax.f32 %v1202, %v1287
        %v1324 = vmax.f32 %v1203, %v1290
        %v1325 = vmax.f32 %v1204, %v1293
        %v1326 = vmax.f32 %v1205, %v1296
        %v1327 = vmax.f32 %v1206, %v1299
        %v1328 = vmax.f32 %v1207, %v1302
        %v1329 = vmax.f32 %v1208, %v1305
        %v1330 = vmax.f32 %v1209, %v1308
        %v1331 = vmax.f32 %v1210, %v1311
        %v1332 = vmax.f32 %v1211, %v1314
        %v1333 = vmax.f32 %v1212, %v1317
        %v1334 = vmax.f32 %v1213, %v1320
        %v1335 = vld [vmem:[%s2] sm:$0x1]
        %v1337 = vperm.slane %v1335, 0
        %v1339 = vadd.f32 %v1322, %v1337
        %v1340 = vadd.f32 %v1323, %v1337
        %v1341 = vadd.f32 %v1324, %v1337
        %v1342 = vadd.f32 %v1325, %v1337
        %v1343 = vadd.f32 %v1326, %v1337
        %v1344 = vadd.f32 %v1327, %v1337
        %v1345 = vadd.f32 %v1328, %v1337
        %v1346 = vadd.f32 %v1329, %v1337
        %v1347 = vadd.f32 %v1330, %v1337
        %v1348 = vadd.f32 %v1331, %v1337
        %v1349 = vadd.f32 %v1332, %v1337
        %v1350 = vadd.f32 %v1333, %v1337
        %v1351 = vadd.f32 %v1334, %v1337
        %v1352 = vmax.f32 %v1339, 0.0
        %v1353 = vmax.f32 %v1340, 0.0
        %v1354 = vmax.f32 %v1341, 0.0
        %v1355 = vmax.f32 %v1342, 0.0
        %v1356 = vmax.f32 %v1343, 0.0
        %v1357 = vmax.f32 %v1344, 0.0
        %v1358 = vmax.f32 %v1345, 0.0
        %v1359 = vmax.f32 %v1346, 0.0
        %v1360 = vmax.f32 %v1347, 0.0
        %v1361 = vmax.f32 %v1348, 0.0
        %v1362 = vmax.f32 %v1349, 0.0
        %v1363 = vmax.f32 %v1350, 0.0
        %v1364 = vmax.f32 %v1351, 0.0
        %v1365 = vpack.c.bf16 %v1352, %v1352
        %v1366 = vpack.c.bf16 %v1353, %v1353
        %v1367 = vpack.c.bf16 %v1354, %v1354
        %v1368 = vpack.c.bf16 %v1355, %v1355
        %v1369 = vpack.c.bf16 %v1356, %v1356
        %v1370 = vpack.c.bf16 %v1357, %v1357
        %v1371 = vpack.c.bf16 %v1358, %v1358
        %v1372 = vpack.c.bf16 %v1359, %v1359
        %v1373 = vpack.c.bf16 %v1360, %v1360
        %v1374 = vpack.c.bf16 %v1361, %v1361
        %v1375 = vpack.c.bf16 %v1362, %v1362
        %v1376 = vpack.c.bf16 %v1363, %v1363
        %v1377 = vpack.c.bf16 %v1364, %v1364
        %1378 = vst.msk [vmem:[#allocation2 + $0x34] sm:$0xf] %vm848, %v1365
        %1379 = vst.msk [vmem:[#allocation2 + $0x38] sm:$0xf] %vm848, %v1366
        %1380 = vst.msk [vmem:[#allocation2 + $0x3c] sm:$0xf] %vm848, %v1367
        %1381 = vst.msk [vmem:[#allocation2 + $0x40] sm:$0xf] %vm848, %v1368
        %1382 = vst.msk [vmem:[#allocation2 + $0x44] sm:$0xf] %vm848, %v1369
        %1383 = vst.msk [vmem:[#allocation2 + $0x48] sm:$0xf] %vm848, %v1370
        %1384 = vst.msk [vmem:[#allocation2 + $0x4c] sm:$0xf] %vm848, %v1371
        %1385 = vst.msk [vmem:[#allocation2 + $0x50] sm:$0xf] %vm848, %v1372
        %1386 = vst.msk [vmem:[#allocation2 + $0x54] sm:$0xf] %vm848, %v1373
        %1387 = vst.msk [vmem:[#allocation2 + $0x58] sm:$0xf] %vm848, %v1374
        %1388 = vst.msk [vmem:[#allocation2 + $0x5c] sm:$0xf] %vm848, %v1375
        %1389 = vst.msk [vmem:[#allocation2 + $0x60] sm:$0xf] %vm848, %v1376
        %1390 = vst.msk [vmem:[#allocation2 + $0x64] sm:$0xf] %vm848, %v1377
        %v1391 = vld [vmem:[#allocation2] sm:$0xf]
        %v1392 = vld [vmem:[#allocation2 + $0x4] sm:$0xf]
        %v1393 = vld [vmem:[#allocation2 + $0x8] sm:$0xf]
        %v1394 = vld [vmem:[#allocation2 + $0xc] sm:$0xf]
        %v1395 = vld [vmem:[#allocation2 + $0x10] sm:$0xf]
        %v1396 = vld [vmem:[#allocation2 + $0x14] sm:$0xf]
        %v1397 = vld [vmem:[#allocation2 + $0x18] sm:$0xf]
        %v1398 = vld [vmem:[#allocation2 + $0x1c] sm:$0xf]
        %v1399 = vld [vmem:[#allocation2 + $0x20] sm:$0xf]
        %v1400 = vld [vmem:[#allocation2 + $0x24] sm:$0xf]
        %v1401 = vld [vmem:[#allocation2 + $0x28] sm:$0xf]
        %v1402 = vld [vmem:[#allocation2 + $0x2c] sm:$0xf]
        %v1403 = vld [vmem:[#allocation2 + $0x30] sm:$0xf]
        %v1404 = vld [vmem:[#allocation2 + $0x34] sm:$0xf]
        %v1405 = vld [vmem:[#allocation2 + $0x38] sm:$0xf]
        %v1406 = vld [vmem:[#allocation2 + $0x3c] sm:$0xf]
        %v1407 = vld [vmem:[#allocation2 + $0x40] sm:$0xf]
        %v1408 = vld [vmem:[#allocation2 + $0x44] sm:$0xf]
        %v1409 = vld [vmem:[#allocation2 + $0x48] sm:$0xf]
        %v1410 = vld [vmem:[#allocation2 + $0x4c] sm:$0xf]
        %v1411 = vld [vmem:[%s3] sm:$0xf]
        %v1412 = vld [vmem:[%s3 + $0x4] sm:$0xf]
        %v1413 = vld [vmem:[%s3 + $0x8] sm:$0xf]
        %v1414 = vld [vmem:[%s3 + $0xc] sm:$0xf]
        %v1415 = vld [vmem:[#allocation2 + $0x50] sm:$0x1]
        %s1416 = scalar_lea.vmem %s3, 16
        %v1417 = vld [vmem:[%s1416] sm:$0xf]
        %v1418 = vld [vmem:[%s1416 + $0x4] sm:$0xf]
        %v1419 = vld [vmem:[%s1416 + $0x8] sm:$0xf]
        %v1420 = vld [vmem:[%s1416 + $0xc] sm:$0xf]
        %v1442 = vunpack.c.l.b16 %v1391
        %v1443 = vunpack.c.l.b16 %v1392
        %v1444 = vunpack.c.l.b16 %v1393
        %v1445 = vunpack.c.l.b16 %v1394
        %v1446 = vunpack.c.l.b16 %v1395
        %v1447 = vunpack.c.l.b16 %v1396
        %v1448 = vunpack.c.l.b16 %v1397
        %v1449 = vunpack.c.l.b16 %v1398
        %v1450 = vunpack.c.l.b16 %v1399
        %v1451 = vunpack.c.l.b16 %v1400
        %v1452 = vunpack.c.l.b16 %v1401
        %v1453 = vunpack.c.l.b16 %v1402
        %v1454 = vunpack.c.l.b16 %v1403
        %v1455 = vunpack.c.l.b16 %v1404
        %v1456 = vunpack.c.l.b16 %v1405
        %v1457 = vunpack.c.l.b16 %v1406
        %v1458 = vunpack.c.l.b16 %v1407
        %v1459 = vunpack.c.l.b16 %v1408
        %v1460 = vunpack.c.l.b16 %v1409
        %v1461 = vunpack.c.l.b16 %v1410
        %v1462 = vunpack.c.l.b16 %v1415
        %v1463 = vpack.c.b16 %v1443, %v1442
        %v1464 = vpack.c.b16 %v1445, %v1444
        %v1465 = vpack.c.b16 %v1447, %v1446
        %v1466 = vpack.c.b16 %v1449, %v1448
        %v1467 = vpack.c.b16 %v1451, %v1450
        %v1468 = vpack.c.b16 %v1453, %v1452
        %v1469 = vpack.c.b16 %v1455, %v1454
        %v1470 = vpack.c.b16 %v1457, %v1456
        %v1471 = vpack.c.b16 %v1459, %v1458
        %v1472 = vpack.c.b16 %v1461, %v1460
        %v1473 = vpack.c.b16 %v1462, %v1462
        %vm1474 = vsmask.f32 7424
        %v1476 = vshrl.u32 %v1463, 16
        %v1478 = vshll.u32 %v1463, 16
        %v1480 = vrot.slane %v1478, 1
        %v1481 = vor.u32 %v1476, %v1480
        %v1483 = vshll.u32 %v1464, 16
        %v1485 = vrot.slane %v1483, 1
        %v1486 = vsel %vm1474, %v1481, %v1485
        %v1487 = vshrl.u32 %v1464, 16
        %v1489 = vor.u32 %v1487, %v1485
        %v1491 = vshll.u32 %v1465, 16
        %v1493 = vrot.slane %v1491, 1
        %v1494 = vsel %vm1474, %v1489, %v1493
        %v1495 = vshrl.u32 %v1465, 16
        %v1497 = vor.u32 %v1495, %v1493
        %v1499 = vshll.u32 %v1466, 16
        %v1501 = vrot.slane %v1499, 1
        %v1502 = vsel %vm1474, %v1497, %v1501
        %v1503 = vshrl.u32 %v1466, 16
        %v1505 = vor.u32 %v1503, %v1501
        %v1507 = vshll.u32 %v1467, 16
        %v1509 = vrot.slane %v1507, 1
        %v1510 = vsel %vm1474, %v1505, %v1509
        %v1511 = vshrl.u32 %v1467, 16
        %v1513 = vor.u32 %v1511, %v1509
        %v1515 = vshll.u32 %v1468, 16
        %v1517 = vrot.slane %v1515, 1
        %v1518 = vsel %vm1474, %v1513, %v1517
        %v1519 = vshrl.u32 %v1468, 16
        %v1521 = vor.u32 %v1519, %v1517
        %v1523 = vshll.u32 %v1469, 16
        %v1525 = vrot.slane %v1523, 1
        %v1526 = vsel %vm1474, %v1521, %v1525
        %v1527 = vshrl.u32 %v1469, 16
        %v1529 = vor.u32 %v1527, %v1525
        %v1531 = vshll.u32 %v1470, 16
        %v1533 = vrot.slane %v1531, 1
        %v1534 = vsel %vm1474, %v1529, %v1533
        %v1535 = vshrl.u32 %v1470, 16
        %v1537 = vor.u32 %v1535, %v1533
        %v1539 = vshll.u32 %v1471, 16
        %v1541 = vrot.slane %v1539, 1
        %v1542 = vsel %vm1474, %v1537, %v1541
        %v1543 = vshrl.u32 %v1471, 16
        %v1545 = vor.u32 %v1543, %v1541
        %v1547 = vshll.u32 %v1472, 16
        %v1549 = vrot.slane %v1547, 1
        %v1550 = vsel %vm1474, %v1545, %v1549
        %v1551 = vshrl.u32 %v1472, 16
        %v1553 = vor.u32 %v1551, %v1549
        %v1555 = vshll.u32 %v1473, 16
        %v1557 = vrot.slane %v1555, 1
        %v1558 = vsel %vm1474, %v1553, %v1557
        %v1563 = vunpack.c.l.b16 %v1417
        %v1564 = vunpack.c.l.b16 %v1418
        %v1565 = vunpack.c.l.b16 %v1419
        %v1566 = vunpack.c.l.b16 %v1420
        %v1567 = vpack.c.b16 %v1564, %v1563
        %v1568 = vpack.c.b16 %v1566, %v1565
        %vm1571 = vcmask 261120
        %v1573 = vsel %vm1571, %v1486, 0
        %v1576 = vsel %vm1571, %v1494, 0
        %v1579 = vsel %vm1571, %v1502, 0
        %v1582 = vsel %vm1571, %v1510, 0
        %v1585 = vsel %vm1571, %v1518, 0
        %v1588 = vsel %vm1571, %v1526, 0
        %v1591 = vsel %vm1571, %v1534, 0
        %v1594 = vsel %vm1571, %v1542, 0
        %v1597 = vsel %vm1571, %v1550, 0
        %v1600 = vsel %vm1571, %v1558, 0
        %1602 = vmatpush.bf16.msra.mxu0 0
        %1603 = vmatpush.bf16.msra.mxu0 0
        %1604 = vmatpush.bf16.msra.mxu0 0
        %1605 = vmatpush.bf16.msra.mxu0 0
        %1606 = vmatpush.bf16.msra.mxu0 0
        %1607 = vmatpush.bf16.msra.mxu0 0
        %1608 = vmatpush.bf16.msra.mxu0 %v1568
        %1609 = vmatpush.bf16.msra.mxu0 %v1567
        %1610 = vmatmul.bf16.gmra.mxu0 %v1573
        %v1611 = vpop.f32.mrf.mxu0
        %v1612 = vadd.f32 0.0, %v1611
        %v1613 = vpop.f32.mrf.mxu0
        %v1614 = vadd.f32 0.0, %v1613
        %1615 = vmatmul.bf16.gmra.mxu0 %v1576
        %v1616 = vpop.f32.mrf.mxu0
        %v1617 = vadd.f32 0.0, %v1616
        %v1618 = vpop.f32.mrf.mxu0
        %v1619 = vadd.f32 0.0, %v1618
        %1620 = vmatmul.bf16.gmra.mxu0 %v1579
        %v1621 = vpop.f32.mrf.mxu0
        %v1622 = vadd.f32 0.0, %v1621
        %v1623 = vpop.f32.mrf.mxu0
        %v1624 = vadd.f32 0.0, %v1623
        %1625 = vmatmul.bf16.gmra.mxu0 %v1582
        %v1626 = vpop.f32.mrf.mxu0
        %v1627 = vadd.f32 0.0, %v1626
        %v1628 = vpop.f32.mrf.mxu0
        %v1629 = vadd.f32 0.0, %v1628
        %1630 = vmatmul.bf16.gmra.mxu0 %v1585
        %v1631 = vpop.f32.mrf.mxu0
        %v1632 = vadd.f32 0.0, %v1631
        %v1633 = vpop.f32.mrf.mxu0
        %v1634 = vadd.f32 0.0, %v1633
        %1635 = vmatmul.bf16.gmra.mxu0 %v1588
        %v1636 = vpop.f32.mrf.mxu0
        %v1637 = vadd.f32 0.0, %v1636
        %v1638 = vpop.f32.mrf.mxu0
        %v1639 = vadd.f32 0.0, %v1638
        %1640 = vmatmul.bf16.gmra.mxu0 %v1591
        %v1641 = vpop.f32.mrf.mxu0
        %v1642 = vadd.f32 0.0, %v1641
        %v1643 = vpop.f32.mrf.mxu0
        %v1644 = vadd.f32 0.0, %v1643
        %1645 = vmatmul.bf16.gmra.mxu0 %v1594
        %v1646 = vpop.f32.mrf.mxu0
        %v1647 = vadd.f32 0.0, %v1646
        %v1648 = vpop.f32.mrf.mxu0
        %v1649 = vadd.f32 0.0, %v1648
        %1650 = vmatmul.bf16.gmra.mxu0 %v1597
        %v1651 = vpop.f32.mrf.mxu0
        %v1652 = vadd.f32 0.0, %v1651
        %v1653 = vpop.f32.mrf.mxu0
        %v1654 = vadd.f32 0.0, %v1653
        %1655 = vmatmul.bf16.gmra.mxu0 %v1600
        %v1656 = vpop.f32.mrf.mxu0
        %v1657 = vadd.f32 0.0, %v1656
        %v1658 = vpop.f32.mrf.mxu0
        %v1659 = vadd.f32 0.0, %v1658
        %1660 = vdwg.mxu0
        %v1665 = vunpack.c.l.b16 %v1411
        %v1666 = vunpack.c.l.b16 %v1412
        %v1667 = vunpack.c.l.b16 %v1413
        %v1668 = vunpack.c.l.b16 %v1414
        %v1669 = vpack.c.b16 %v1666, %v1665
        %v1670 = vpack.c.b16 %v1668, %v1667
        %v1673 = vsel %vm1571, %v1463, 0
        %v1675 = vsel %vm1571, %v1464, 0
        %v1677 = vsel %vm1571, %v1465, 0
        %v1679 = vsel %vm1571, %v1466, 0
        %v1681 = vsel %vm1571, %v1467, 0
        %v1683 = vsel %vm1571, %v1468, 0
        %v1685 = vsel %vm1571, %v1469, 0
        %v1687 = vsel %vm1571, %v1470, 0
        %v1689 = vsel %vm1571, %v1471, 0
        %v1691 = vsel %vm1571, %v1472, 0
        %1693 = vmatpush.bf16.msra.mxu0 0
        %1694 = vmatpush.bf16.msra.mxu0 0
        %1695 = vmatpush.bf16.msra.mxu0 0
        %1696 = vmatpush.bf16.msra.mxu0 0
        %1697 = vmatpush.bf16.msra.mxu0 0
        %1698 = vmatpush.bf16.msra.mxu0 0
        %1699 = vmatpush.bf16.msra.mxu0 %v1670
        %1700 = vmatpush.bf16.msra.mxu0 %v1669
        %1701 = vmatmul.bf16.gmra.mxu0 %v1673
        %v1702 = vpop.f32.mrf.mxu0
        %v1703 = vadd.f32 %v1612, %v1702
        %v1704 = vpop.f32.mrf.mxu0
        %v1705 = vadd.f32 %v1614, %v1704
        %1706 = vmatmul.bf16.gmra.mxu0 %v1675
        %v1707 = vpop.f32.mrf.mxu0
        %v1708 = vadd.f32 %v1617, %v1707
        %v1709 = vpop.f32.mrf.mxu0
        %v1710 = vadd.f32 %v1619, %v1709
        %1711 = vmatmul.bf16.gmra.mxu0 %v1677
        %v1712 = vpop.f32.mrf.mxu0
        %v1713 = vadd.f32 %v1622, %v1712
        %v1714 = vpop.f32.mrf.mxu0
        %v1715 = vadd.f32 %v1624, %v1714
        %1716 = vmatmul.bf16.gmra.mxu0 %v1679
        %v1717 = vpop.f32.mrf.mxu0
        %v1718 = vadd.f32 %v1627, %v1717
        %v1719 = vpop.f32.mrf.mxu0
        %v1720 = vadd.f32 %v1629, %v1719
        %1721 = vmatmul.bf16.gmra.mxu0 %v1681
        %v1722 = vpop.f32.mrf.mxu0
        %v1723 = vadd.f32 %v1632, %v1722
        %v1724 = vpop.f32.mrf.mxu0
        %v1725 = vadd.f32 %v1634, %v1724
        %1726 = vmatmul.bf16.gmra.mxu0 %v1683
        %v1727 = vpop.f32.mrf.mxu0
        %v1728 = vadd.f32 %v1637, %v1727
        %v1729 = vpop.f32.mrf.mxu0
        %v1730 = vadd.f32 %v1639, %v1729
        %1731 = vmatmul.bf16.gmra.mxu0 %v1685
        %v1732 = vpop.f32.mrf.mxu0
        %v1733 = vadd.f32 %v1642, %v1732
        %v1734 = vpop.f32.mrf.mxu0
        %v1735 = vadd.f32 %v1644, %v1734
        %1736 = vmatmul.bf16.gmra.mxu0 %v1687
        %v1737 = vpop.f32.mrf.mxu0
        %v1738 = vadd.f32 %v1647, %v1737
        %v1739 = vpop.f32.mrf.mxu0
        %v1740 = vadd.f32 %v1649, %v1739
        %1741 = vmatmul.bf16.gmra.mxu0 %v1689
        %v1742 = vpop.f32.mrf.mxu0
        %v1743 = vadd.f32 %v1652, %v1742
        %v1744 = vpop.f32.mrf.mxu0
        %v1745 = vadd.f32 %v1654, %v1744
        %1746 = vmatmul.bf16.gmra.mxu0 %v1691
        %v1747 = vpop.f32.mrf.mxu0
        %v1748 = vadd.f32 %v1657, %v1747
        %v1749 = vpop.f32.mrf.mxu0
        %v1750 = vadd.f32 %v1659, %v1749
        %1751 = vdwg.mxu0
        %v1752 = vld [vmem:[#allocation2] sm:$0xe]
        %s1753 = scalar_lea.vmem %s3, 32
        %v1754 = vld [vmem:[%s1753] sm:$0xf]
        %v1755 = vld [vmem:[%s1753 + $0x4] sm:$0xf]
        %v1756 = vld [vmem:[%s1753 + $0x8] sm:$0xf]
        %v1757 = vld [vmem:[%s1753 + $0xc] sm:$0xf]
        %v1759 = vunpack.c.l.b16 %v1752
        %v1760 = vpack.c.b16 %v1443, %v1759
        %vm1761 = vcmask 1046528
        %v1762 = vrot.slane %v1760, 1
        %v1763 = vrot.slane %v1464, 1
        %v1764 = vsel %vm1761, %v1762, %v1763
        %v1765 = vrot.slane %v1465, 1
        %v1766 = vsel %vm1761, %v1763, %v1765
        %v1767 = vrot.slane %v1466, 1
        %v1768 = vsel %vm1761, %v1765, %v1767
        %v1769 = vrot.slane %v1467, 1
        %v1770 = vsel %vm1761, %v1767, %v1769
        %v1771 = vrot.slane %v1468, 1
        %v1772 = vsel %vm1761, %v1769, %v1771
        %v1773 = vrot.slane %v1469, 1
        %v1774 = vsel %vm1761, %v1771, %v1773
        %v1775 = vrot.slane %v1470, 1
        %v1776 = vsel %vm1761, %v1773, %v1775
        %v1777 = vrot.slane %v1471, 1
        %v1778 = vsel %vm1761, %v1775, %v1777
        %v1779 = vrot.slane %v1472, 1
        %v1780 = vsel %vm1761, %v1777, %v1779
        %v1781 = vrot.slane %v1473, 1
        %v1782 = vsel %vm1761, %v1779, %v1781
        %v1787 = vunpack.c.l.b16 %v1754
        %v1788 = vunpack.c.l.b16 %v1755
        %v1789 = vunpack.c.l.b16 %v1756
        %v1790 = vunpack.c.l.b16 %v1757
        %v1791 = vpack.c.b16 %v1788, %v1787
        %v1792 = vpack.c.b16 %v1790, %v1789
        %v1796 = vsel %vm1571, %v1764, 0
        %v1799 = vsel %vm1571, %v1766, 0
        %v1802 = vsel %vm1571, %v1768, 0
        %v1805 = vsel %vm1571, %v1770, 0
        %v1808 = vsel %vm1571, %v1772, 0
        %v1811 = vsel %vm1571, %v1774, 0
        %v1814 = vsel %vm1571, %v1776, 0
        %v1817 = vsel %vm1571, %v1778, 0
        %v1820 = vsel %vm1571, %v1780, 0
        %v1823 = vsel %vm1571, %v1782, 0
        %1825 = vmatpush.bf16.msra.mxu0 0
        %1826 = vmatpush.bf16.msra.mxu0 0
        %1827 = vmatpush.bf16.msra.mxu0 0
        %1828 = vmatpush.bf16.msra.mxu0 0
        %1829 = vmatpush.bf16.msra.mxu0 0
        %1830 = vmatpush.bf16.msra.mxu0 0
        %1831 = vmatpush.bf16.msra.mxu0 %v1792
        %1832 = vmatpush.bf16.msra.mxu0 %v1791
        %1833 = vmatmul.bf16.gmra.mxu0 %v1796
        %v1834 = vpop.f32.mrf.mxu0
        %v1835 = vadd.f32 0.0, %v1834
        %v1836 = vpop.f32.mrf.mxu0
        %v1837 = vadd.f32 0.0, %v1836
        %1838 = vmatmul.bf16.gmra.mxu0 %v1799
        %v1839 = vpop.f32.mrf.mxu0
        %v1840 = vadd.f32 0.0, %v1839
        %v1841 = vpop.f32.mrf.mxu0
        %v1842 = vadd.f32 0.0, %v1841
        %1843 = vmatmul.bf16.gmra.mxu0 %v1802
        %v1844 = vpop.f32.mrf.mxu0
        %v1845 = vadd.f32 0.0, %v1844
        %v1846 = vpop.f32.mrf.mxu0
        %v1847 = vadd.f32 0.0, %v1846
        %1848 = vmatmul.bf16.gmra.mxu0 %v1805
        %v1849 = vpop.f32.mrf.mxu0
        %v1850 = vadd.f32 0.0, %v1849
        %v1851 = vpop.f32.mrf.mxu0
        %v1852 = vadd.f32 0.0, %v1851
        %1853 = vmatmul.bf16.gmra.mxu0 %v1808
        %v1854 = vpop.f32.mrf.mxu0
        %v1855 = vadd.f32 0.0, %v1854
        %v1856 = vpop.f32.mrf.mxu0
        %v1857 = vadd.f32 0.0, %v1856
        %1858 = vmatmul.bf16.gmra.mxu0 %v1811
        %v1859 = vpop.f32.mrf.mxu0
        %v1860 = vadd.f32 0.0, %v1859
        %v1861 = vpop.f32.mrf.mxu0
        %v1862 = vadd.f32 0.0, %v1861
        %1863 = vmatmul.bf16.gmra.mxu0 %v1814
        %v1864 = vpop.f32.mrf.mxu0
        %v1865 = vadd.f32 0.0, %v1864
        %v1866 = vpop.f32.mrf.mxu0
        %v1867 = vadd.f32 0.0, %v1866
        %1868 = vmatmul.bf16.gmra.mxu0 %v1817
        %v1869 = vpop.f32.mrf.mxu0
        %v1870 = vadd.f32 0.0, %v1869
        %v1871 = vpop.f32.mrf.mxu0
        %v1872 = vadd.f32 0.0, %v1871
        %1873 = vmatmul.bf16.gmra.mxu0 %v1820
        %v1874 = vpop.f32.mrf.mxu0
        %v1875 = vadd.f32 0.0, %v1874
        %v1876 = vpop.f32.mrf.mxu0
        %v1877 = vadd.f32 0.0, %v1876
        %1878 = vmatmul.bf16.gmra.mxu0 %v1823
        %v1879 = vpop.f32.mrf.mxu0
        %v1880 = vadd.f32 0.0, %v1879
        %v1881 = vpop.f32.mrf.mxu0
        %v1882 = vadd.f32 0.0, %v1881
        %1883 = vdwg.mxu0
        %v1884 = vadd.f32 %v1703, %v1835
        %v1885 = vadd.f32 %v1705, %v1837
        %v1886 = vadd.f32 %v1708, %v1840
        %v1887 = vadd.f32 %v1710, %v1842
        %v1888 = vadd.f32 %v1713, %v1845
        %v1889 = vadd.f32 %v1715, %v1847
        %v1890 = vadd.f32 %v1718, %v1850
        %v1891 = vadd.f32 %v1720, %v1852
        %v1892 = vadd.f32 %v1723, %v1855
        %v1893 = vadd.f32 %v1725, %v1857
        %v1894 = vadd.f32 %v1728, %v1860
        %v1895 = vadd.f32 %v1730, %v1862
        %v1896 = vadd.f32 %v1733, %v1865
        %v1897 = vadd.f32 %v1735, %v1867
        %v1898 = vadd.f32 %v1738, %v1870
        %v1899 = vadd.f32 %v1740, %v1872
        %v1900 = vadd.f32 %v1743, %v1875
        %v1901 = vadd.f32 %v1745, %v1877
        %v1902 = vadd.f32 %v1748, %v1880
        %v1903 = vadd.f32 %v1750, %v1882
        %v1904 = vld [vmem:[#allocation2 + $0x8] sm:$0xf]
        %v1905 = vld [vmem:[#allocation2 + $0xc] sm:$0xf]
        %v1906 = vld [vmem:[#allocation2 + $0x10] sm:$0xf]
        %v1907 = vld [vmem:[#allocation2 + $0x14] sm:$0xf]
        %v1908 = vld [vmem:[#allocation2 + $0x18] sm:$0xf]
        %v1909 = vld [vmem:[#allocation2 + $0x1c] sm:$0xf]
        %v1910 = vld [vmem:[#allocation2 + $0x20] sm:$0xf]
        %v1911 = vld [vmem:[#allocation2 + $0x24] sm:$0xf]
        %v1912 = vld [vmem:[#allocation2 + $0x28] sm:$0xf]
        %v1913 = vld [vmem:[#allocation2 + $0x2c] sm:$0xf]
        %v1914 = vld [vmem:[#allocation2 + $0x30] sm:$0xf]
        %v1915 = vld [vmem:[#allocation2 + $0x34] sm:$0xf]
        %v1916 = vld [vmem:[#allocation2 + $0x38] sm:$0xf]
        %v1917 = vld [vmem:[#allocation2 + $0x3c] sm:$0xf]
        %v1918 = vld [vmem:[#allocation2 + $0x40] sm:$0xf]
        %v1919 = vld [vmem:[#allocation2 + $0x44] sm:$0xf]
        %v1920 = vld [vmem:[#allocation2 + $0x48] sm:$0xf]
        %v1921 = vld [vmem:[#allocation2 + $0x4c] sm:$0xf]
        %v1922 = vld [vmem:[#allocation2 + $0x50] sm:$0xf]
        %v1923 = vld [vmem:[#allocation2 + $0x54] sm:$0xf]
        %s1924 = scalar_lea.vmem %s3, 48
        %v1925 = vld [vmem:[%s1924] sm:$0xf]
        %v1926 = vld [vmem:[%s1924 + $0x4] sm:$0xf]
        %v1927 = vld [vmem:[%s1924 + $0x8] sm:$0xf]
        %v1928 = vld [vmem:[%s1924 + $0xc] sm:$0xf]
        %v1949 = vunpack.c.l.b16 %v1904
        %v1950 = vunpack.c.l.b16 %v1905
        %v1951 = vunpack.c.l.b16 %v1906
        %v1952 = vunpack.c.l.b16 %v1907
        %v1953 = vunpack.c.l.b16 %v1908
        %v1954 = vunpack.c.l.b16 %v1909
        %v1955 = vunpack.c.l.b16 %v1910
        %v1956 = vunpack.c.l.b16 %v1911
        %v1957 = vunpack.c.l.b16 %v1912
        %v1958 = vunpack.c.l.b16 %v1913
        %v1959 = vunpack.c.l.b16 %v1914
        %v1960 = vunpack.c.l.b16 %v1915
        %v1961 = vunpack.c.l.b16 %v1916
        %v1962 = vunpack.c.l.b16 %v1917
        %v1963 = vunpack.c.l.b16 %v1918
        %v1964 = vunpack.c.l.b16 %v1919
        %v1965 = vunpack.c.l.b16 %v1920
        %v1966 = vunpack.c.l.b16 %v1921
        %v1967 = vunpack.c.l.b16 %v1922
        %v1968 = vunpack.c.l.b16 %v1923
        %v1969 = vpack.c.b16 %v1950, %v1949
        %v1970 = vpack.c.b16 %v1952, %v1951
        %v1971 = vpack.c.b16 %v1954, %v1953
        %v1972 = vpack.c.b16 %v1956, %v1955
        %v1973 = vpack.c.b16 %v1958, %v1957
        %v1974 = vpack.c.b16 %v1960, %v1959
        %v1975 = vpack.c.b16 %v1962, %v1961
        %v1976 = vpack.c.b16 %v1964, %v1963
        %v1977 = vpack.c.b16 %v1966, %v1965
        %v1978 = vpack.c.b16 %v1968, %v1967
        %v1983 = vunpack.c.l.b16 %v1925
        %v1984 = vunpack.c.l.b16 %v1926
        %v1985 = vunpack.c.l.b16 %v1927
        %v1986 = vunpack.c.l.b16 %v1928
        %v1987 = vpack.c.b16 %v1984, %v1983
        %v1988 = vpack.c.b16 %v1986, %v1985
        %v1992 = vsel %vm1571, %v1969, 0
        %v1995 = vsel %vm1571, %v1970, 0
        %v1998 = vsel %vm1571, %v1971, 0
        %v2001 = vsel %vm1571, %v1972, 0
        %v2004 = vsel %vm1571, %v1973, 0
        %v2007 = vsel %vm1571, %v1974, 0
        %v2010 = vsel %vm1571, %v1975, 0
        %v2013 = vsel %vm1571, %v1976, 0
        %v2016 = vsel %vm1571, %v1977, 0
        %v2019 = vsel %vm1571, %v1978, 0
        %2021 = vmatpush.bf16.msra.mxu0 0
        %2022 = vmatpush.bf16.msra.mxu0 0
        %2023 = vmatpush.bf16.msra.mxu0 0
        %2024 = vmatpush.bf16.msra.mxu0 0
        %2025 = vmatpush.bf16.msra.mxu0 0
        %2026 = vmatpush.bf16.msra.mxu0 0
        %2027 = vmatpush.bf16.msra.mxu0 %v1988
        %2028 = vmatpush.bf16.msra.mxu0 %v1987
        %2029 = vmatmul.bf16.gmra.mxu0 %v1992
        %v2030 = vpop.f32.mrf.mxu0
        %v2031 = vadd.f32 0.0, %v2030
        %v2032 = vpop.f32.mrf.mxu0
        %v2033 = vadd.f32 0.0, %v2032
        %2034 = vmatmul.bf16.gmra.mxu0 %v1995
        %v2035 = vpop.f32.mrf.mxu0
        %v2036 = vadd.f32 0.0, %v2035
        %v2037 = vpop.f32.mrf.mxu0
        %v2038 = vadd.f32 0.0, %v2037
        %2039 = vmatmul.bf16.gmra.mxu0 %v1998
        %v2040 = vpop.f32.mrf.mxu0
        %v2041 = vadd.f32 0.0, %v2040
        %v2042 = vpop.f32.mrf.mxu0
        %v2043 = vadd.f32 0.0, %v2042
        %2044 = vmatmul.bf16.gmra.mxu0 %v2001
        %v2045 = vpop.f32.mrf.mxu0
        %v2046 = vadd.f32 0.0, %v2045
        %v2047 = vpop.f32.mrf.mxu0
        %v2048 = vadd.f32 0.0, %v2047
        %2049 = vmatmul.bf16.gmra.mxu0 %v2004
        %v2050 = vpop.f32.mrf.mxu0
        %v2051 = vadd.f32 0.0, %v2050
        %v2052 = vpop.f32.mrf.mxu0
        %v2053 = vadd.f32 0.0, %v2052
        %2054 = vmatmul.bf16.gmra.mxu0 %v2007
        %v2055 = vpop.f32.mrf.mxu0
        %v2056 = vadd.f32 0.0, %v2055
        %v2057 = vpop.f32.mrf.mxu0
        %v2058 = vadd.f32 0.0, %v2057
        %2059 = vmatmul.bf16.gmra.mxu0 %v2010
        %v2060 = vpop.f32.mrf.mxu0
        %v2061 = vadd.f32 0.0, %v2060
        %v2062 = vpop.f32.mrf.mxu0
        %v2063 = vadd.f32 0.0, %v2062
        %2064 = vmatmul.bf16.gmra.mxu0 %v2013
        %v2065 = vpop.f32.mrf.mxu0
        %v2066 = vadd.f32 0.0, %v2065
        %v2067 = vpop.f32.mrf.mxu0
        %v2068 = vadd.f32 0.0, %v2067
        %2069 = vmatmul.bf16.gmra.mxu0 %v2016
        %v2070 = vpop.f32.mrf.mxu0
        %v2071 = vadd.f32 0.0, %v2070
        %v2072 = vpop.f32.mrf.mxu0
        %v2073 = vadd.f32 0.0, %v2072
        %2074 = vmatmul.bf16.gmra.mxu0 %v2019
        %v2075 = vpop.f32.mrf.mxu0
        %v2076 = vadd.f32 0.0, %v2075
        %v2077 = vpop.f32.mrf.mxu0
        %v2078 = vadd.f32 0.0, %v2077
        %2079 = vdwg.mxu0
        %v2080 = vadd.f32 %v1884, %v2031
        %v2081 = vadd.f32 %v1885, %v2033
        %v2082 = vadd.f32 %v1886, %v2036
        %v2083 = vadd.f32 %v1887, %v2038
        %v2084 = vadd.f32 %v1888, %v2041
        %v2085 = vadd.f32 %v1889, %v2043
        %v2086 = vadd.f32 %v1890, %v2046
        %v2087 = vadd.f32 %v1891, %v2048
        %v2088 = vadd.f32 %v1892, %v2051
        %v2089 = vadd.f32 %v1893, %v2053
        %v2090 = vadd.f32 %v1894, %v2056
        %v2091 = vadd.f32 %v1895, %v2058
        %v2092 = vadd.f32 %v1896, %v2061
        %v2093 = vadd.f32 %v1897, %v2063
        %v2094 = vadd.f32 %v1898, %v2066
        %v2095 = vadd.f32 %v1899, %v2068
        %v2096 = vadd.f32 %v1900, %v2071
        %v2097 = vadd.f32 %v1901, %v2073
        %v2098 = vadd.f32 %v1902, %v2076
        %v2099 = vadd.f32 %v1903, %v2078
        %v2100 = vld [vmem:[#allocation2 + $0x8] sm:$0xf]
        %v2101 = vld [vmem:[#allocation2 + $0xc] sm:$0xf]
        %v2102 = vld [vmem:[#allocation2 + $0x10] sm:$0xf]
        %v2103 = vld [vmem:[#allocation2 + $0x14] sm:$0xf]
        %v2104 = vld [vmem:[#allocation2 + $0x18] sm:$0xf]
        %v2105 = vld [vmem:[#allocation2 + $0x1c] sm:$0xf]
        %v2106 = vld [vmem:[#allocation2 + $0x20] sm:$0xf]
        %v2107 = vld [vmem:[#allocation2 + $0x24] sm:$0xf]
        %v2108 = vld [vmem:[#allocation2 + $0x28] sm:$0xf]
        %v2109 = vld [vmem:[#allocation2 + $0x2c] sm:$0xf]
        %v2110 = vld [vmem:[#allocation2 + $0x30] sm:$0xf]
        %v2111 = vld [vmem:[#allocation2 + $0x34] sm:$0xf]
        %v2112 = vld [vmem:[#allocation2 + $0x38] sm:$0xf]
        %v2113 = vld [vmem:[#allocation2 + $0x3c] sm:$0xf]
        %v2114 = vld [vmem:[#allocation2 + $0x40] sm:$0xf]
        %v2115 = vld [vmem:[#allocation2 + $0x44] sm:$0xf]
        %v2116 = vld [vmem:[#allocation2 + $0x48] sm:$0xf]
        %v2117 = vld [vmem:[#allocation2 + $0x4c] sm:$0xf]
        %v2118 = vld [vmem:[#allocation2 + $0x50] sm:$0xf]
        %v2119 = vld [vmem:[#allocation2 + $0x54] sm:$0xf]
        %v2120 = vld [vmem:[#allocation2 + $0x58] sm:$0x1]
        %s2121 = scalar_lea.vmem %s3, 64
        %v2122 = vld [vmem:[%s2121] sm:$0xf]
        %v2123 = vld [vmem:[%s2121 + $0x4] sm:$0xf]
        %v2124 = vld [vmem:[%s2121 + $0x8] sm:$0xf]
        %v2125 = vld [vmem:[%s2121 + $0xc] sm:$0xf]
        %v2147 = vunpack.c.l.b16 %v2100
        %v2148 = vunpack.c.l.b16 %v2101
        %v2149 = vunpack.c.l.b16 %v2102
        %v2150 = vunpack.c.l.b16 %v2103
        %v2151 = vunpack.c.l.b16 %v2104
        %v2152 = vunpack.c.l.b16 %v2105
        %v2153 = vunpack.c.l.b16 %v2106
        %v2154 = vunpack.c.l.b16 %v2107
        %v2155 = vunpack.c.l.b16 %v2108
        %v2156 = vunpack.c.l.b16 %v2109
        %v2157 = vunpack.c.l.b16 %v2110
        %v2158 = vunpack.c.l.b16 %v2111
        %v2159 = vunpack.c.l.b16 %v2112
        %v2160 = vunpack.c.l.b16 %v2113
        %v2161 = vunpack.c.l.b16 %v2114
        %v2162 = vunpack.c.l.b16 %v2115
        %v2163 = vunpack.c.l.b16 %v2116
        %v2164 = vunpack.c.l.b16 %v2117
        %v2165 = vunpack.c.l.b16 %v2118
        %v2166 = vunpack.c.l.b16 %v2119
        %v2167 = vunpack.c.l.b16 %v2120
        %v2168 = vpack.c.b16 %v2148, %v2147
        %v2169 = vpack.c.b16 %v2150, %v2149
        %v2170 = vpack.c.b16 %v2152, %v2151
        %v2171 = vpack.c.b16 %v2154, %v2153
        %v2172 = vpack.c.b16 %v2156, %v2155
        %v2173 = vpack.c.b16 %v2158, %v2157
        %v2174 = vpack.c.b16 %v2160, %v2159
        %v2175 = vpack.c.b16 %v2162, %v2161
        %v2176 = vpack.c.b16 %v2164, %v2163
        %v2177 = vpack.c.b16 %v2166, %v2165
        %v2178 = vpack.c.b16 %v2167, %v2167
        %v2180 = vshrl.u32 %v2168, 16
        %v2182 = vshll.u32 %v2168, 16
        %v2184 = vrot.slane %v2182, 1
        %v2185 = vor.u32 %v2180, %v2184
        %v2187 = vshll.u32 %v2169, 16
        %v2189 = vrot.slane %v2187, 1
        %v2190 = vsel %vm1474, %v2185, %v2189
        %v2191 = vshrl.u32 %v2169, 16
        %v2193 = vor.u32 %v2191, %v2189
        %v2195 = vshll.u32 %v2170, 16
        %v2197 = vrot.slane %v2195, 1
        %v2198 = vsel %vm1474, %v2193, %v2197
        %v2199 = vshrl.u32 %v2170, 16
        %v2201 = vor.u32 %v2199, %v2197
        %v2203 = vshll.u32 %v2171, 16
        %v2205 = vrot.slane %v2203, 1
        %v2206 = vsel %vm1474, %v2201, %v2205
        %v2207 = vshrl.u32 %v2171, 16
        %v2209 = vor.u32 %v2207, %v2205
        %v2211 = vshll.u32 %v2172, 16
        %v2213 = vrot.slane %v2211, 1
        %v2214 = vsel %vm1474, %v2209, %v2213
        %v2215 = vshrl.u32 %v2172, 16
        %v2217 = vor.u32 %v2215, %v2213
        %v2219 = vshll.u32 %v2173, 16
        %v2221 = vrot.slane %v2219, 1
        %v2222 = vsel %vm1474, %v2217, %v2221
        %v2223 = vshrl.u32 %v2173, 16
        %v2225 = vor.u32 %v2223, %v2221
        %v2227 = vshll.u32 %v2174, 16
        %v2229 = vrot.slane %v2227, 1
        %v2230 = vsel %vm1474, %v2225, %v2229
        %v2231 = vshrl.u32 %v2174, 16
        %v2233 = vor.u32 %v2231, %v2229
        %v2235 = vshll.u32 %v2175, 16
        %v2237 = vrot.slane %v2235, 1
        %v2238 = vsel %vm1474, %v2233, %v2237
        %v2239 = vshrl.u32 %v2175, 16
        %v2241 = vor.u32 %v2239, %v2237
        %v2243 = vshll.u32 %v2176, 16
        %v2245 = vrot.slane %v2243, 1
        %v2246 = vsel %vm1474, %v2241, %v2245
        %v2247 = vshrl.u32 %v2176, 16
        %v2249 = vor.u32 %v2247, %v2245
        %v2251 = vshll.u32 %v2177, 16
        %v2253 = vrot.slane %v2251, 1
        %v2254 = vsel %vm1474, %v2249, %v2253
        %v2255 = vshrl.u32 %v2177, 16
        %v2257 = vor.u32 %v2255, %v2253
        %v2259 = vshll.u32 %v2178, 16
        %v2261 = vrot.slane %v2259, 1
        %v2262 = vsel %vm1474, %v2257, %v2261
        %v2267 = vunpack.c.l.b16 %v2122
        %v2268 = vunpack.c.l.b16 %v2123
        %v2269 = vunpack.c.l.b16 %v2124
        %v2270 = vunpack.c.l.b16 %v2125
        %v2271 = vpack.c.b16 %v2268, %v2267
        %v2272 = vpack.c.b16 %v2270, %v2269
        %v2276 = vsel %vm1571, %v2190, 0
        %v2279 = vsel %vm1571, %v2198, 0
        %v2282 = vsel %vm1571, %v2206, 0
        %v2285 = vsel %vm1571, %v2214, 0
        %v2288 = vsel %vm1571, %v2222, 0
        %v2291 = vsel %vm1571, %v2230, 0
        %v2294 = vsel %vm1571, %v2238, 0
        %v2297 = vsel %vm1571, %v2246, 0
        %v2300 = vsel %vm1571, %v2254, 0
        %v2303 = vsel %vm1571, %v2262, 0
        %2305 = vmatpush.bf16.msra.mxu0 0
        %2306 = vmatpush.bf16.msra.mxu0 0
        %2307 = vmatpush.bf16.msra.mxu0 0
        %2308 = vmatpush.bf16.msra.mxu0 0
        %2309 = vmatpush.bf16.msra.mxu0 0
        %2310 = vmatpush.bf16.msra.mxu0 0
        %2311 = vmatpush.bf16.msra.mxu0 %v2272
        %2312 = vmatpush.bf16.msra.mxu0 %v2271
        %2313 = vmatmul.bf16.gmra.mxu0 %v2276
        %v2314 = vpop.f32.mrf.mxu0
        %v2315 = vadd.f32 0.0, %v2314
        %v2316 = vpop.f32.mrf.mxu0
        %v2317 = vadd.f32 0.0, %v2316
        %2318 = vmatmul.bf16.gmra.mxu0 %v2279
        %v2319 = vpop.f32.mrf.mxu0
        %v2320 = vadd.f32 0.0, %v2319
        %v2321 = vpop.f32.mrf.mxu0
        %v2322 = vadd.f32 0.0, %v2321
        %2323 = vmatmul.bf16.gmra.mxu0 %v2282
        %v2324 = vpop.f32.mrf.mxu0
        %v2325 = vadd.f32 0.0, %v2324
        %v2326 = vpop.f32.mrf.mxu0
        %v2327 = vadd.f32 0.0, %v2326
        %2328 = vmatmul.bf16.gmra.mxu0 %v2285
        %v2329 = vpop.f32.mrf.mxu0
        %v2330 = vadd.f32 0.0, %v2329
        %v2331 = vpop.f32.mrf.mxu0
        %v2332 = vadd.f32 0.0, %v2331
        %2333 = vmatmul.bf16.gmra.mxu0 %v2288
        %v2334 = vpop.f32.mrf.mxu0
        %v2335 = vadd.f32 0.0, %v2334
        %v2336 = vpop.f32.mrf.mxu0
        %v2337 = vadd.f32 0.0, %v2336
        %2338 = vmatmul.bf16.gmra.mxu0 %v2291
        %v2339 = vpop.f32.mrf.mxu0
        %v2340 = vadd.f32 0.0, %v2339
        %v2341 = vpop.f32.mrf.mxu0
        %v2342 = vadd.f32 0.0, %v2341
        %2343 = vmatmul.bf16.gmra.mxu0 %v2294
        %v2344 = vpop.f32.mrf.mxu0
        %v2345 = vadd.f32 0.0, %v2344
        %v2346 = vpop.f32.mrf.mxu0
        %v2347 = vadd.f32 0.0, %v2346
        %2348 = vmatmul.bf16.gmra.mxu0 %v2297
        %v2349 = vpop.f32.mrf.mxu0
        %v2350 = vadd.f32 0.0, %v2349
        %v2351 = vpop.f32.mrf.mxu0
        %v2352 = vadd.f32 0.0, %v2351
        %2353 = vmatmul.bf16.gmra.mxu0 %v2300
        %v2354 = vpop.f32.mrf.mxu0
        %v2355 = vadd.f32 0.0, %v2354
        %v2356 = vpop.f32.mrf.mxu0
        %v2357 = vadd.f32 0.0, %v2356
        %2358 = vmatmul.bf16.gmra.mxu0 %v2303
        %v2359 = vpop.f32.mrf.mxu0
        %v2360 = vadd.f32 0.0, %v2359
        %v2361 = vpop.f32.mrf.mxu0
        %v2362 = vadd.f32 0.0, %v2361
        %2363 = vdwg.mxu0
        %v2364 = vadd.f32 %v2080, %v2315
        %v2365 = vadd.f32 %v2081, %v2317
        %v2366 = vadd.f32 %v2082, %v2320
        %v2367 = vadd.f32 %v2083, %v2322
        %v2368 = vadd.f32 %v2084, %v2325
        %v2369 = vadd.f32 %v2085, %v2327
        %v2370 = vadd.f32 %v2086, %v2330
        %v2371 = vadd.f32 %v2087, %v2332
        %v2372 = vadd.f32 %v2088, %v2335
        %v2373 = vadd.f32 %v2089, %v2337
        %v2374 = vadd.f32 %v2090, %v2340
        %v2375 = vadd.f32 %v2091, %v2342
        %v2376 = vadd.f32 %v2092, %v2345
        %v2377 = vadd.f32 %v2093, %v2347
        %v2378 = vadd.f32 %v2094, %v2350
        %v2379 = vadd.f32 %v2095, %v2352
        %v2380 = vadd.f32 %v2096, %v2355
        %v2381 = vadd.f32 %v2097, %v2357
        %v2382 = vadd.f32 %v2098, %v2360
        %v2383 = vadd.f32 %v2099, %v2362
        %v2384 = vld [vmem:[#allocation2 + $0x8] sm:$0xe]
        %s2385 = scalar_lea.vmem %s3, 80
        %v2386 = vld [vmem:[%s2385] sm:$0xf]
        %v2387 = vld [vmem:[%s2385 + $0x4] sm:$0xf]
        %v2388 = vld [vmem:[%s2385 + $0x8] sm:$0xf]
        %v2389 = vld [vmem:[%s2385 + $0xc] sm:$0xf]
        %v2391 = vunpack.c.l.b16 %v2384
        %v2392 = vpack.c.b16 %v2148, %v2391
        %v2393 = vrot.slane %v2392, 1
        %v2394 = vrot.slane %v2169, 1
        %v2395 = vsel %vm1761, %v2393, %v2394
        %v2396 = vrot.slane %v2170, 1
        %v2397 = vsel %vm1761, %v2394, %v2396
        %v2398 = vrot.slane %v2171, 1
        %v2399 = vsel %vm1761, %v2396, %v2398
        %v2400 = vrot.slane %v2172, 1
        %v2401 = vsel %vm1761, %v2398, %v2400
        %v2402 = vrot.slane %v2173, 1
        %v2403 = vsel %vm1761, %v2400, %v2402
        %v2404 = vrot.slane %v2174, 1
        %v2405 = vsel %vm1761, %v2402, %v2404
        %v2406 = vrot.slane %v2175, 1
        %v2407 = vsel %vm1761, %v2404, %v2406
        %v2408 = vrot.slane %v2176, 1
        %v2409 = vsel %vm1761, %v2406, %v2408
        %v2410 = vrot.slane %v2177, 1
        %v2411 = vsel %vm1761, %v2408, %v2410
        %v2412 = vrot.slane %v2178, 1
        %v2413 = vsel %vm1761, %v2410, %v2412
        %v2418 = vunpack.c.l.b16 %v2386
        %v2419 = vunpack.c.l.b16 %v2387
        %v2420 = vunpack.c.l.b16 %v2388
        %v2421 = vunpack.c.l.b16 %v2389
        %v2422 = vpack.c.b16 %v2419, %v2418
        %v2423 = vpack.c.b16 %v2421, %v2420
        %v2427 = vsel %vm1571, %v2395, 0
        %v2430 = vsel %vm1571, %v2397, 0
        %v2433 = vsel %vm1571, %v2399, 0
        %v2436 = vsel %vm1571, %v2401, 0
        %v2439 = vsel %vm1571, %v2403, 0
        %v2442 = vsel %vm1571, %v2405, 0
        %v2445 = vsel %vm1571, %v2407, 0
        %v2448 = vsel %vm1571, %v2409, 0
        %v2451 = vsel %vm1571, %v2411, 0
        %v2454 = vsel %vm1571, %v2413, 0
        %2456 = vmatpush.bf16.msra.mxu0 0
        %2457 = vmatpush.bf16.msra.mxu0 0
        %2458 = vmatpush.bf16.msra.mxu0 0
        %2459 = vmatpush.bf16.msra.mxu0 0
        %2460 = vmatpush.bf16.msra.mxu0 0
        %2461 = vmatpush.bf16.msra.mxu0 0
        %2462 = vmatpush.bf16.msra.mxu0 %v2423
        %2463 = vmatpush.bf16.msra.mxu0 %v2422
        %2464 = vmatmul.bf16.gmra.mxu0 %v2427
        %v2465 = vpop.f32.mrf.mxu0
        %v2466 = vadd.f32 0.0, %v2465
        %v2467 = vpop.f32.mrf.mxu0
        %v2468 = vadd.f32 0.0, %v2467
        %2469 = vmatmul.bf16.gmra.mxu0 %v2430
        %v2470 = vpop.f32.mrf.mxu0
        %v2471 = vadd.f32 0.0, %v2470
        %v2472 = vpop.f32.mrf.mxu0
        %v2473 = vadd.f32 0.0, %v2472
        %2474 = vmatmul.bf16.gmra.mxu0 %v2433
        %v2475 = vpop.f32.mrf.mxu0
        %v2476 = vadd.f32 0.0, %v2475
        %v2477 = vpop.f32.mrf.mxu0
        %v2478 = vadd.f32 0.0, %v2477
        %2479 = vmatmul.bf16.gmra.mxu0 %v2436
        %v2480 = vpop.f32.mrf.mxu0
        %v2481 = vadd.f32 0.0, %v2480
        %v2482 = vpop.f32.mrf.mxu0
        %v2483 = vadd.f32 0.0, %v2482
        %2484 = vmatmul.bf16.gmra.mxu0 %v2439
        %v2485 = vpop.f32.mrf.mxu0
        %v2486 = vadd.f32 0.0, %v2485
        %v2487 = vpop.f32.mrf.mxu0
        %v2488 = vadd.f32 0.0, %v2487
        %2489 = vmatmul.bf16.gmra.mxu0 %v2442
        %v2490 = vpop.f32.mrf.mxu0
        %v2491 = vadd.f32 0.0, %v2490
        %v2492 = vpop.f32.mrf.mxu0
        %v2493 = vadd.f32 0.0, %v2492
        %2494 = vmatmul.bf16.gmra.mxu0 %v2445
        %v2495 = vpop.f32.mrf.mxu0
        %v2496 = vadd.f32 0.0, %v2495
        %v2497 = vpop.f32.mrf.mxu0
        %v2498 = vadd.f32 0.0, %v2497
        %2499 = vmatmul.bf16.gmra.mxu0 %v2448
        %v2500 = vpop.f32.mrf.mxu0
        %v2501 = vadd.f32 0.0, %v2500
        %v2502 = vpop.f32.mrf.mxu0
        %v2503 = vadd.f32 0.0, %v2502
        %2504 = vmatmul.bf16.gmra.mxu0 %v2451
        %v2505 = vpop.f32.mrf.mxu0
        %v2506 = vadd.f32 0.0, %v2505
        %v2507 = vpop.f32.mrf.mxu0
        %v2508 = vadd.f32 0.0, %v2507
        %2509 = vmatmul.bf16.gmra.mxu0 %v2454
        %v2510 = vpop.f32.mrf.mxu0
        %v2511 = vadd.f32 0.0, %v2510
        %v2512 = vpop.f32.mrf.mxu0
        %v2513 = vadd.f32 0.0, %v2512
        %2514 = vdwg.mxu0
        %v2515 = vadd.f32 %v2364, %v2466
        %v2516 = vadd.f32 %v2365, %v2468
        %v2517 = vadd.f32 %v2366, %v2471
        %v2518 = vadd.f32 %v2367, %v2473
        %v2519 = vadd.f32 %v2368, %v2476
        %v2520 = vadd.f32 %v2369, %v2478
        %v2521 = vadd.f32 %v2370, %v2481
        %v2522 = vadd.f32 %v2371, %v2483
        %v2523 = vadd.f32 %v2372, %v2486
        %v2524 = vadd.f32 %v2373, %v2488
        %v2525 = vadd.f32 %v2374, %v2491
        %v2526 = vadd.f32 %v2375, %v2493
        %v2527 = vadd.f32 %v2376, %v2496
        %v2528 = vadd.f32 %v2377, %v2498
        %v2529 = vadd.f32 %v2378, %v2501
        %v2530 = vadd.f32 %v2379, %v2503
        %v2531 = vadd.f32 %v2380, %v2506
        %v2532 = vadd.f32 %v2381, %v2508
        %v2533 = vadd.f32 %v2382, %v2511
        %v2534 = vadd.f32 %v2383, %v2513
        %v2535 = vld [vmem:[#allocation2 + $0x10] sm:$0xf]
        %v2536 = vld [vmem:[#allocation2 + $0x14] sm:$0xf]
        %v2537 = vld [vmem:[#allocation2 + $0x18] sm:$0xf]
        %v2538 = vld [vmem:[#allocation2 + $0x1c] sm:$0xf]
        %v2539 = vld [vmem:[#allocation2 + $0x20] sm:$0xf]
        %v2540 = vld [vmem:[#allocation2 + $0x24] sm:$0xf]
        %v2541 = vld [vmem:[#allocation2 + $0x28] sm:$0xf]
        %v2542 = vld [vmem:[#allocation2 + $0x2c] sm:$0xf]
        %v2543 = vld [vmem:[#allocation2 + $0x30] sm:$0xf]
        %v2544 = vld [vmem:[#allocation2 + $0x34] sm:$0xf]
        %v2545 = vld [vmem:[#allocation2 + $0x38] sm:$0xf]
        %v2546 = vld [vmem:[#allocation2 + $0x3c] sm:$0xf]
        %v2547 = vld [vmem:[#allocation2 + $0x40] sm:$0xf]
        %v2548 = vld [vmem:[#allocation2 + $0x44] sm:$0xf]
        %v2549 = vld [vmem:[#allocation2 + $0x48] sm:$0xf]
        %v2550 = vld [vmem:[#allocation2 + $0x4c] sm:$0xf]
        %v2551 = vld [vmem:[#allocation2 + $0x50] sm:$0xf]
        %v2552 = vld [vmem:[#allocation2 + $0x54] sm:$0xf]
        %v2553 = vld [vmem:[#allocation2 + $0x58] sm:$0xf]
        %v2554 = vld [vmem:[#allocation2 + $0x5c] sm:$0xf]
        %s2555 = scalar_lea.vmem %s3, 96
        %v2556 = vld [vmem:[%s2555] sm:$0xf]
        %v2557 = vld [vmem:[%s2555 + $0x4] sm:$0xf]
        %v2558 = vld [vmem:[%s2555 + $0x8] sm:$0xf]
        %v2559 = vld [vmem:[%s2555 + $0xc] sm:$0xf]
        %v2580 = vunpack.c.l.b16 %v2535
        %v2581 = vunpack.c.l.b16 %v2536
        %v2582 = vunpack.c.l.b16 %v2537
        %v2583 = vunpack.c.l.b16 %v2538
        %v2584 = vunpack.c.l.b16 %v2539
        %v2585 = vunpack.c.l.b16 %v2540
        %v2586 = vunpack.c.l.b16 %v2541
        %v2587 = vunpack.c.l.b16 %v2542
        %v2588 = vunpack.c.l.b16 %v2543
        %v2589 = vunpack.c.l.b16 %v2544
        %v2590 = vunpack.c.l.b16 %v2545
        %v2591 = vunpack.c.l.b16 %v2546
        %v2592 = vunpack.c.l.b16 %v2547
        %v2593 = vunpack.c.l.b16 %v2548
        %v2594 = vunpack.c.l.b16 %v2549
        %v2595 = vunpack.c.l.b16 %v2550
        %v2596 = vunpack.c.l.b16 %v2551
        %v2597 = vunpack.c.l.b16 %v2552
        %v2598 = vunpack.c.l.b16 %v2553
        %v2599 = vunpack.c.l.b16 %v2554
        %v2600 = vpack.c.b16 %v2581, %v2580
        %v2601 = vpack.c.b16 %v2583, %v2582
        %v2602 = vpack.c.b16 %v2585, %v2584
        %v2603 = vpack.c.b16 %v2587, %v2586
        %v2604 = vpack.c.b16 %v2589, %v2588
        %v2605 = vpack.c.b16 %v2591, %v2590
        %v2606 = vpack.c.b16 %v2593, %v2592
        %v2607 = vpack.c.b16 %v2595, %v2594
        %v2608 = vpack.c.b16 %v2597, %v2596
        %v2609 = vpack.c.b16 %v2599, %v2598
        %v2614 = vunpack.c.l.b16 %v2556
        %v2615 = vunpack.c.l.b16 %v2557
        %v2616 = vunpack.c.l.b16 %v2558
        %v2617 = vunpack.c.l.b16 %v2559
        %v2618 = vpack.c.b16 %v2615, %v2614
        %v2619 = vpack.c.b16 %v2617, %v2616
        %v2623 = vsel %vm1571, %v2600, 0
        %v2626 = vsel %vm1571, %v2601, 0
        %v2629 = vsel %vm1571, %v2602, 0
        %v2632 = vsel %vm1571, %v2603, 0
        %v2635 = vsel %vm1571, %v2604, 0
        %v2638 = vsel %vm1571, %v2605, 0
        %v2641 = vsel %vm1571, %v2606, 0
        %v2644 = vsel %vm1571, %v2607, 0
        %v2647 = vsel %vm1571, %v2608, 0
        %v2650 = vsel %vm1571, %v2609, 0
        %2652 = vmatpush.bf16.msra.mxu0 0
        %2653 = vmatpush.bf16.msra.mxu0 0
        %2654 = vmatpush.bf16.msra.mxu0 0
        %2655 = vmatpush.bf16.msra.mxu0 0
        %2656 = vmatpush.bf16.msra.mxu0 0
        %2657 = vmatpush.bf16.msra.mxu0 0
        %2658 = vmatpush.bf16.msra.mxu0 %v2619
        %2659 = vmatpush.bf16.msra.mxu0 %v2618
        %2660 = vmatmul.bf16.gmra.mxu0 %v2623
        %v2661 = vpop.f32.mrf.mxu0
        %v2662 = vadd.f32 0.0, %v2661
        %v2663 = vpop.f32.mrf.mxu0
        %v2664 = vadd.f32 0.0, %v2663
        %2665 = vmatmul.bf16.gmra.mxu0 %v2626
        %v2666 = vpop.f32.mrf.mxu0
        %v2667 = vadd.f32 0.0, %v2666
        %v2668 = vpop.f32.mrf.mxu0
        %v2669 = vadd.f32 0.0, %v2668
        %2670 = vmatmul.bf16.gmra.mxu0 %v2629
        %v2671 = vpop.f32.mrf.mxu0
        %v2672 = vadd.f32 0.0, %v2671
        %v2673 = vpop.f32.mrf.mxu0
        %v2674 = vadd.f32 0.0, %v2673
        %2675 = vmatmul.bf16.gmra.mxu0 %v2632
        %v2676 = vpop.f32.mrf.mxu0
        %v2677 = vadd.f32 0.0, %v2676
        %v2678 = vpop.f32.mrf.mxu0
        %v2679 = vadd.f32 0.0, %v2678
        %2680 = vmatmul.bf16.gmra.mxu0 %v2635
        %v2681 = vpop.f32.mrf.mxu0
        %v2682 = vadd.f32 0.0, %v2681
        %v2683 = vpop.f32.mrf.mxu0
        %v2684 = vadd.f32 0.0, %v2683
        %2685 = vmatmul.bf16.gmra.mxu0 %v2638
        %v2686 = vpop.f32.mrf.mxu0
        %v2687 = vadd.f32 0.0, %v2686
        %v2688 = vpop.f32.mrf.mxu0
        %v2689 = vadd.f32 0.0, %v2688
        %2690 = vmatmul.bf16.gmra.mxu0 %v2641
        %v2691 = vpop.f32.mrf.mxu0
        %v2692 = vadd.f32 0.0, %v2691
        %v2693 = vpop.f32.mrf.mxu0
        %v2694 = vadd.f32 0.0, %v2693
        %2695 = vmatmul.bf16.gmra.mxu0 %v2644
        %v2696 = vpop.f32.mrf.mxu0
        %v2697 = vadd.f32 0.0, %v2696
        %v2698 = vpop.f32.mrf.mxu0
        %v2699 = vadd.f32 0.0, %v2698
        %2700 = vmatmul.bf16.gmra.mxu0 %v2647
        %v2701 = vpop.f32.mrf.mxu0
        %v2702 = vadd.f32 0.0, %v2701
        %v2703 = vpop.f32.mrf.mxu0
        %v2704 = vadd.f32 0.0, %v2703
        %2705 = vmatmul.bf16.gmra.mxu0 %v2650
        %v2706 = vpop.f32.mrf.mxu0
        %v2707 = vadd.f32 0.0, %v2706
        %v2708 = vpop.f32.mrf.mxu0
        %v2709 = vadd.f32 0.0, %v2708
        %2710 = vdwg.mxu0
        %v2711 = vadd.f32 %v2515, %v2662
        %v2712 = vadd.f32 %v2516, %v2664
        %v2713 = vadd.f32 %v2517, %v2667
        %v2714 = vadd.f32 %v2518, %v2669
        %v2715 = vadd.f32 %v2519, %v2672
        %v2716 = vadd.f32 %v2520, %v2674
        %v2717 = vadd.f32 %v2521, %v2677
        %v2718 = vadd.f32 %v2522, %v2679
        %v2719 = vadd.f32 %v2523, %v2682
        %v2720 = vadd.f32 %v2524, %v2684
        %v2721 = vadd.f32 %v2525, %v2687
        %v2722 = vadd.f32 %v2526, %v2689
        %v2723 = vadd.f32 %v2527, %v2692
        %v2724 = vadd.f32 %v2528, %v2694
        %v2725 = vadd.f32 %v2529, %v2697
        %v2726 = vadd.f32 %v2530, %v2699
        %v2727 = vadd.f32 %v2531, %v2702
        %v2728 = vadd.f32 %v2532, %v2704
        %v2729 = vadd.f32 %v2533, %v2707
        %v2730 = vadd.f32 %v2534, %v2709
        %v2731 = vld [vmem:[#allocation2 + $0x10] sm:$0xf]
        %v2732 = vld [vmem:[#allocation2 + $0x14] sm:$0xf]
        %v2733 = vld [vmem:[#allocation2 + $0x18] sm:$0xf]
        %v2734 = vld [vmem:[#allocation2 + $0x1c] sm:$0xf]
        %v2735 = vld [vmem:[#allocation2 + $0x20] sm:$0xf]
        %v2736 = vld [vmem:[#allocation2 + $0x24] sm:$0xf]
        %v2737 = vld [vmem:[#allocation2 + $0x28] sm:$0xf]
        %v2738 = vld [vmem:[#allocation2 + $0x2c] sm:$0xf]
        %v2739 = vld [vmem:[#allocation2 + $0x30] sm:$0xf]
        %v2740 = vld [vmem:[#allocation2 + $0x34] sm:$0xf]
        %v2741 = vld [vmem:[#allocation2 + $0x38] sm:$0xf]
        %v2742 = vld [vmem:[#allocation2 + $0x3c] sm:$0xf]
        %v2743 = vld [vmem:[#allocation2 + $0x40] sm:$0xf]
        %v2744 = vld [vmem:[#allocation2 + $0x44] sm:$0xf]
        %v2745 = vld [vmem:[#allocation2 + $0x48] sm:$0xf]
        %v2746 = vld [vmem:[#allocation2 + $0x4c] sm:$0xf]
        %v2747 = vld [vmem:[#allocation2 + $0x50] sm:$0xf]
        %v2748 = vld [vmem:[#allocation2 + $0x54] sm:$0xf]
        %v2749 = vld [vmem:[#allocation2 + $0x58] sm:$0xf]
        %v2750 = vld [vmem:[#allocation2 + $0x5c] sm:$0xf]
        %v2751 = vld [vmem:[#allocation2 + $0x60] sm:$0x1]
        %s2752 = scalar_lea.vmem %s3, 112
        %v2753 = vld [vmem:[%s2752] sm:$0xf]
        %v2754 = vld [vmem:[%s2752 + $0x4] sm:$0xf]
        %v2755 = vld [vmem:[%s2752 + $0x8] sm:$0xf]
        %v2756 = vld [vmem:[%s2752 + $0xc] sm:$0xf]
        %v2778 = vunpack.c.l.b16 %v2731
        %v2779 = vunpack.c.l.b16 %v2732
        %v2780 = vunpack.c.l.b16 %v2733
        %v2781 = vunpack.c.l.b16 %v2734
        %v2782 = vunpack.c.l.b16 %v2735
        %v2783 = vunpack.c.l.b16 %v2736
        %v2784 = vunpack.c.l.b16 %v2737
        %v2785 = vunpack.c.l.b16 %v2738
        %v2786 = vunpack.c.l.b16 %v2739
        %v2787 = vunpack.c.l.b16 %v2740
        %v2788 = vunpack.c.l.b16 %v2741
        %v2789 = vunpack.c.l.b16 %v2742
        %v2790 = vunpack.c.l.b16 %v2743
        %v2791 = vunpack.c.l.b16 %v2744
        %v2792 = vunpack.c.l.b16 %v2745
        %v2793 = vunpack.c.l.b16 %v2746
        %v2794 = vunpack.c.l.b16 %v2747
        %v2795 = vunpack.c.l.b16 %v2748
        %v2796 = vunpack.c.l.b16 %v2749
        %v2797 = vunpack.c.l.b16 %v2750
        %v2798 = vunpack.c.l.b16 %v2751
        %v2799 = vpack.c.b16 %v2779, %v2778
        %v2800 = vpack.c.b16 %v2781, %v2780
        %v2801 = vpack.c.b16 %v2783, %v2782
        %v2802 = vpack.c.b16 %v2785, %v2784
        %v2803 = vpack.c.b16 %v2787, %v2786
        %v2804 = vpack.c.b16 %v2789, %v2788
        %v2805 = vpack.c.b16 %v2791, %v2790
        %v2806 = vpack.c.b16 %v2793, %v2792
        %v2807 = vpack.c.b16 %v2795, %v2794
        %v2808 = vpack.c.b16 %v2797, %v2796
        %v2809 = vpack.c.b16 %v2798, %v2798
        %v2811 = vshrl.u32 %v2799, 16
        %v2813 = vshll.u32 %v2799, 16
        %v2815 = vrot.slane %v2813, 1
        %v2816 = vor.u32 %v2811, %v2815
        %v2818 = vshll.u32 %v2800, 16
        %v2820 = vrot.slane %v2818, 1
        %v2821 = vsel %vm1474, %v2816, %v2820
        %v2822 = vshrl.u32 %v2800, 16
        %v2824 = vor.u32 %v2822, %v2820
        %v2826 = vshll.u32 %v2801, 16
        %v2828 = vrot.slane %v2826, 1
        %v2829 = vsel %vm1474, %v2824, %v2828
        %v2830 = vshrl.u32 %v2801, 16
        %v2832 = vor.u32 %v2830, %v2828
        %v2834 = vshll.u32 %v2802, 16
        %v2836 = vrot.slane %v2834, 1
        %v2837 = vsel %vm1474, %v2832, %v2836
        %v2838 = vshrl.u32 %v2802, 16
        %v2840 = vor.u32 %v2838, %v2836
        %v2842 = vshll.u32 %v2803, 16
        %v2844 = vrot.slane %v2842, 1
        %v2845 = vsel %vm1474, %v2840, %v2844
        %v2846 = vshrl.u32 %v2803, 16
        %v2848 = vor.u32 %v2846, %v2844
        %v2850 = vshll.u32 %v2804, 16
        %v2852 = vrot.slane %v2850, 1
        %v2853 = vsel %vm1474, %v2848, %v2852
        %v2854 = vshrl.u32 %v2804, 16
        %v2856 = vor.u32 %v2854, %v2852
        %v2858 = vshll.u32 %v2805, 16
        %v2860 = vrot.slane %v2858, 1
        %v2861 = vsel %vm1474, %v2856, %v2860
        %v2862 = vshrl.u32 %v2805, 16
        %v2864 = vor.u32 %v2862, %v2860
        %v2866 = vshll.u32 %v2806, 16
        %v2868 = vrot.slane %v2866, 1
        %v2869 = vsel %vm1474, %v2864, %v2868
        %v2870 = vshrl.u32 %v2806, 16
        %v2872 = vor.u32 %v2870, %v2868
        %v2874 = vshll.u32 %v2807, 16
        %v2876 = vrot.slane %v2874, 1
        %v2877 = vsel %vm1474, %v2872, %v2876
        %v2878 = vshrl.u32 %v2807, 16
        %v2880 = vor.u32 %v2878, %v2876
        %v2882 = vshll.u32 %v2808, 16
        %v2884 = vrot.slane %v2882, 1
        %v2885 = vsel %vm1474, %v2880, %v2884
        %v2886 = vshrl.u32 %v2808, 16
        %v2888 = vor.u32 %v2886, %v2884
        %v2890 = vshll.u32 %v2809, 16
        %v2892 = vrot.slane %v2890, 1
        %v2893 = vsel %vm1474, %v2888, %v2892
        %v2898 = vunpack.c.l.b16 %v2753
        %v2899 = vunpack.c.l.b16 %v2754
        %v2900 = vunpack.c.l.b16 %v2755
        %v2901 = vunpack.c.l.b16 %v2756
        %v2902 = vpack.c.b16 %v2899, %v2898
        %v2903 = vpack.c.b16 %v2901, %v2900
        %v2907 = vsel %vm1571, %v2821, 0
        %v2910 = vsel %vm1571, %v2829, 0
        %v2913 = vsel %vm1571, %v2837, 0
        %v2916 = vsel %vm1571, %v2845, 0
        %v2919 = vsel %vm1571, %v2853, 0
        %v2922 = vsel %vm1571, %v2861, 0
        %v2925 = vsel %vm1571, %v2869, 0
        %v2928 = vsel %vm1571, %v2877, 0
        %v2931 = vsel %vm1571, %v2885, 0
        %v2934 = vsel %vm1571, %v2893, 0
        %2936 = vmatpush.bf16.msra.mxu0 0
        %2937 = vmatpush.bf16.msra.mxu0 0
        %2938 = vmatpush.bf16.msra.mxu0 0
        %2939 = vmatpush.bf16.msra.mxu0 0
        %2940 = vmatpush.bf16.msra.mxu0 0
        %2941 = vmatpush.bf16.msra.mxu0 0
        %2942 = vmatpush.bf16.msra.mxu0 %v2903
        %2943 = vmatpush.bf16.msra.mxu0 %v2902
        %2944 = vmatmul.bf16.gmra.mxu0 %v2907
        %v2945 = vpop.f32.mrf.mxu0
        %v2946 = vadd.f32 0.0, %v2945
        %v2947 = vpop.f32.mrf.mxu0
        %v2948 = vadd.f32 0.0, %v2947
        %2949 = vmatmul.bf16.gmra.mxu0 %v2910
        %v2950 = vpop.f32.mrf.mxu0
        %v2951 = vadd.f32 0.0, %v2950
        %v2952 = vpop.f32.mrf.mxu0
        %v2953 = vadd.f32 0.0, %v2952
        %2954 = vmatmul.bf16.gmra.mxu0 %v2913
        %v2955 = vpop.f32.mrf.mxu0
        %v2956 = vadd.f32 0.0, %v2955
        %v2957 = vpop.f32.mrf.mxu0
        %v2958 = vadd.f32 0.0, %v2957
        %2959 = vmatmul.bf16.gmra.mxu0 %v2916
        %v2960 = vpop.f32.mrf.mxu0
        %v2961 = vadd.f32 0.0, %v2960
        %v2962 = vpop.f32.mrf.mxu0
        %v2963 = vadd.f32 0.0, %v2962
        %2964 = vmatmul.bf16.gmra.mxu0 %v2919
        %v2965 = vpop.f32.mrf.mxu0
        %v2966 = vadd.f32 0.0, %v2965
        %v2967 = vpop.f32.mrf.mxu0
        %v2968 = vadd.f32 0.0, %v2967
        %2969 = vmatmul.bf16.gmra.mxu0 %v2922
        %v2970 = vpop.f32.mrf.mxu0
        %v2971 = vadd.f32 0.0, %v2970
        %v2972 = vpop.f32.mrf.mxu0
        %v2973 = vadd.f32 0.0, %v2972
        %2974 = vmatmul.bf16.gmra.mxu0 %v2925
        %v2975 = vpop.f32.mrf.mxu0
        %v2976 = vadd.f32 0.0, %v2975
        %v2977 = vpop.f32.mrf.mxu0
        %v2978 = vadd.f32 0.0, %v2977
        %2979 = vmatmul.bf16.gmra.mxu0 %v2928
        %v2980 = vpop.f32.mrf.mxu0
        %v2981 = vadd.f32 0.0, %v2980
        %v2982 = vpop.f32.mrf.mxu0
        %v2983 = vadd.f32 0.0, %v2982
        %2984 = vmatmul.bf16.gmra.mxu0 %v2931
        %v2985 = vpop.f32.mrf.mxu0
        %v2986 = vadd.f32 0.0, %v2985
        %v2987 = vpop.f32.mrf.mxu0
        %v2988 = vadd.f32 0.0, %v2987
        %2989 = vmatmul.bf16.gmra.mxu0 %v2934
        %v2990 = vpop.f32.mrf.mxu0
        %v2991 = vadd.f32 0.0, %v2990
        %v2992 = vpop.f32.mrf.mxu0
        %v2993 = vadd.f32 0.0, %v2992
        %2994 = vdwg.mxu0
        %v2995 = vadd.f32 %v2711, %v2946
        %v2996 = vadd.f32 %v2712, %v2948
        %v2997 = vadd.f32 %v2713, %v2951
        %v2998 = vadd.f32 %v2714, %v2953
        %v2999 = vadd.f32 %v2715, %v2956
        %v3000 = vadd.f32 %v2716, %v2958
        %v3001 = vadd.f32 %v2717, %v2961
        %v3002 = vadd.f32 %v2718, %v2963
        %v3003 = vadd.f32 %v2719, %v2966
        %v3004 = vadd.f32 %v2720, %v2968
        %v3005 = vadd.f32 %v2721, %v2971
        %v3006 = vadd.f32 %v2722, %v2973
        %v3007 = vadd.f32 %v2723, %v2976
        %v3008 = vadd.f32 %v2724, %v2978
        %v3009 = vadd.f32 %v2725, %v2981
        %v3010 = vadd.f32 %v2726, %v2983
        %v3011 = vadd.f32 %v2727, %v2986
        %v3012 = vadd.f32 %v2728, %v2988
        %v3013 = vadd.f32 %v2729, %v2991
        %v3014 = vadd.f32 %v2730, %v2993
        %v3015 = vld [vmem:[#allocation2 + $0x10] sm:$0xe]
        %s3016 = scalar_lea.vmem %s3, 128
        %v3017 = vld [vmem:[%s3016] sm:$0xf]
        %v3018 = vld [vmem:[%s3016 + $0x4] sm:$0xf]
        %v3019 = vld [vmem:[%s3016 + $0x8] sm:$0xf]
        %v3020 = vld [vmem:[%s3016 + $0xc] sm:$0xf]
        %v3022 = vunpack.c.l.b16 %v3015
        %v3023 = vpack.c.b16 %v2779, %v3022
        %v3024 = vrot.slane %v3023, 1
        %v3025 = vrot.slane %v2800, 1
        %v3026 = vsel %vm1761, %v3024, %v3025
        %v3027 = vrot.slane %v2801, 1
        %v3028 = vsel %vm1761, %v3025, %v3027
        %v3029 = vrot.slane %v2802, 1
        %v3030 = vsel %vm1761, %v3027, %v3029
        %v3031 = vrot.slane %v2803, 1
        %v3032 = vsel %vm1761, %v3029, %v3031
        %v3033 = vrot.slane %v2804, 1
        %v3034 = vsel %vm1761, %v3031, %v3033
        %v3035 = vrot.slane %v2805, 1
        %v3036 = vsel %vm1761, %v3033, %v3035
        %v3037 = vrot.slane %v2806, 1
        %v3038 = vsel %vm1761, %v3035, %v3037
        %v3039 = vrot.slane %v2807, 1
        %v3040 = vsel %vm1761, %v3037, %v3039
        %v3041 = vrot.slane %v2808, 1
        %v3042 = vsel %vm1761, %v3039, %v3041
        %v3043 = vrot.slane %v2809, 1
        %v3044 = vsel %vm1761, %v3041, %v3043
        %v3049 = vunpack.c.l.b16 %v3017
        %v3050 = vunpack.c.l.b16 %v3018
        %v3051 = vunpack.c.l.b16 %v3019
        %v3052 = vunpack.c.l.b16 %v3020
        %v3053 = vpack.c.b16 %v3050, %v3049
        %v3054 = vpack.c.b16 %v3052, %v3051
        %v3058 = vsel %vm1571, %v3026, 0
        %v3061 = vsel %vm1571, %v3028, 0
        %v3064 = vsel %vm1571, %v3030, 0
        %v3067 = vsel %vm1571, %v3032, 0
        %v3070 = vsel %vm1571, %v3034, 0
        %v3073 = vsel %vm1571, %v3036, 0
        %v3076 = vsel %vm1571, %v3038, 0
        %v3079 = vsel %vm1571, %v3040, 0
        %v3082 = vsel %vm1571, %v3042, 0
        %v3085 = vsel %vm1571, %v3044, 0
        %3087 = vmatpush.bf16.msra.mxu0 0
        %3088 = vmatpush.bf16.msra.mxu0 0
        %3089 = vmatpush.bf16.msra.mxu0 0
        %3090 = vmatpush.bf16.msra.mxu0 0
        %3091 = vmatpush.bf16.msra.mxu0 0
        %3092 = vmatpush.bf16.msra.mxu0 0
        %3093 = vmatpush.bf16.msra.mxu0 %v3054
        %3094 = vmatpush.bf16.msra.mxu0 %v3053
        %3095 = vmatmul.bf16.gmra.mxu0 %v3058
        %v3096 = vpop.f32.mrf.mxu0
        %v3097 = vadd.f32 0.0, %v3096
        %v3098 = vpop.f32.mrf.mxu0
        %v3099 = vadd.f32 0.0, %v3098
        %3100 = vmatmul.bf16.gmra.mxu0 %v3061
        %v3101 = vpop.f32.mrf.mxu0
        %v3102 = vadd.f32 0.0, %v3101
        %v3103 = vpop.f32.mrf.mxu0
        %v3104 = vadd.f32 0.0, %v3103
        %3105 = vmatmul.bf16.gmra.mxu0 %v3064
        %v3106 = vpop.f32.mrf.mxu0
        %v3107 = vadd.f32 0.0, %v3106
        %v3108 = vpop.f32.mrf.mxu0
        %v3109 = vadd.f32 0.0, %v3108
        %3110 = vmatmul.bf16.gmra.mxu0 %v3067
        %v3111 = vpop.f32.mrf.mxu0
        %v3112 = vadd.f32 0.0, %v3111
        %v3113 = vpop.f32.mrf.mxu0
        %v3114 = vadd.f32 0.0, %v3113
        %3115 = vmatmul.bf16.gmra.mxu0 %v3070
        %v3116 = vpop.f32.mrf.mxu0
        %v3117 = vadd.f32 0.0, %v3116
        %v3118 = vpop.f32.mrf.mxu0
        %v3119 = vadd.f32 0.0, %v3118
        %3120 = vmatmul.bf16.gmra.mxu0 %v3073
        %v3121 = vpop.f32.mrf.mxu0
        %v3122 = vadd.f32 0.0, %v3121
        %v3123 = vpop.f32.mrf.mxu0
        %v3124 = vadd.f32 0.0, %v3123
        %3125 = vmatmul.bf16.gmra.mxu0 %v3076
        %v3126 = vpop.f32.mrf.mxu0
        %v3127 = vadd.f32 0.0, %v3126
        %v3128 = vpop.f32.mrf.mxu0
        %v3129 = vadd.f32 0.0, %v3128
        %3130 = vmatmul.bf16.gmra.mxu0 %v3079
        %v3131 = vpop.f32.mrf.mxu0
        %v3132 = vadd.f32 0.0, %v3131
        %v3133 = vpop.f32.mrf.mxu0
        %v3134 = vadd.f32 0.0, %v3133
        %3135 = vmatmul.bf16.gmra.mxu0 %v3082
        %v3136 = vpop.f32.mrf.mxu0
        %v3137 = vadd.f32 0.0, %v3136
        %v3138 = vpop.f32.mrf.mxu0
        %v3139 = vadd.f32 0.0, %v3138
        %3140 = vmatmul.bf16.gmra.mxu0 %v3085
        %v3141 = vpop.f32.mrf.mxu0
        %v3142 = vadd.f32 0.0, %v3141
        %v3143 = vpop.f32.mrf.mxu0
        %v3144 = vadd.f32 0.0, %v3143
        %3145 = vdwg.mxu0
        %v3146 = vadd.f32 %v2995, %v3097
        %v3147 = vadd.f32 %v2996, %v3099
        %v3148 = vadd.f32 %v2997, %v3102
        %v3149 = vadd.f32 %v2998, %v3104
        %v3150 = vadd.f32 %v2999, %v3107
        %v3151 = vadd.f32 %v3000, %v3109
        %v3152 = vadd.f32 %v3001, %v3112
        %v3153 = vadd.f32 %v3002, %v3114
        %v3154 = vadd.f32 %v3003, %v3117
        %v3155 = vadd.f32 %v3004, %v3119
        %v3156 = vadd.f32 %v3005, %v3122
        %v3157 = vadd.f32 %v3006, %v3124
        %v3158 = vadd.f32 %v3007, %v3127
        %v3159 = vadd.f32 %v3008, %v3129
        %v3160 = vadd.f32 %v3009, %v3132
        %v3161 = vadd.f32 %v3010, %v3134
        %v3162 = vadd.f32 %v3011, %v3137
        %v3163 = vadd.f32 %v3012, %v3139
        %v3164 = vadd.f32 %v3013, %v3142
        %v3165 = vadd.f32 %v3014, %v3144
        %v3166 = vmax.f32 %v3146, %v3148
        %v3167 = vmax.f32 %v3147, %v3149
        %v3168 = vld [vmem:[%s4] sm:$0x1]
        %v3170 = vperm.slane %v3168, 0
        %v3172 = vadd.f32 %v3166, %v3170
        %v3173 = vadd.f32 %v3167, %v3170
        %v3174 = vmax.f32 %v3172, 0.0
        %v3175 = vmax.f32 %v3173, 0.0
        %v3177 = vrot.slane %v3174, 1
        %v3179 = vmax.f32 %v3174, %v3177
        %v3180 = vpack.c.bf16 %v3179, %v3179
        %vm3181 = vcmask 516096
        %vm3182 = vsmask.f32 256
        %vm3183 = vmand %vm3181, %vm3182
        %v3184 = vld [vmem:[#allocation3] sm:$0x1]
        %v3185 = vsel %vm3183, %v3180, %v3184
        %3186 = vst [vmem:[#allocation3] sm:$0x1] %v3185
        %3188 = vst [vmem:[#allocation1] sm:$0xff] %v3180
        %s3189 = scalar_lea.vmem [#allocation1], 1
        %v3190 = vld [vmem:[%s3189] ss:$4 sm:$0xff]
        %3192 = vrot.lane.b32.xlu0 %v3190, 64
        %v3193 = vpop.permute.xlu0 %3192
        %vm3195 = vcmask 1040896
        %vm3196 = vmand %vm3195, %vm3182
        %v3197 = vld [vmem:[#allocation3] sm:$0x1]
        %v3198 = vsel %vm3196, %v3193, %v3197
        %3199 = vst [vmem:[#allocation3] sm:$0x1] %v3198
        %3200 = vst [vmem:[#allocation1] sm:$0xff] %v3180
        %s3201 = scalar_lea.vmem [#allocation1], 2
        %v3202 = vld [vmem:[%s3201] ss:$4 sm:$0xff]
        %v3204 = vld [vmem:[#allocation3 + $0x1] sm:$0x1]
        %v3205 = vsel %vm3183, %v3202, %v3204
        %3206 = vst [vmem:[#allocation3 + $0x1] sm:$0x1] %v3205
        %3207 = vst [vmem:[#allocation1] sm:$0xff] %v3180
        %s3208 = scalar_lea.vmem [#allocation1], 3
        %v3209 = vld [vmem:[%s3208] ss:$4 sm:$0xff]
        %3211 = vrot.lane.b32.xlu0 %v3209, 64
        %v3212 = vpop.permute.xlu0 %3211
        %v3214 = vld [vmem:[#allocation3 + $0x1] sm:$0x1]
        %v3215 = vsel %vm3196, %v3212, %v3214
        %3216 = vst [vmem:[#allocation3 + $0x1] sm:$0x1] %v3215
        %v3218 = vrot.slane %v3175, 1
        %v3220 = vmax.f32 %v3175, %v3218
        %v3221 = vpack.c.bf16 %v3220, %v3220
        %v3222 = vld [vmem:[#allocation3 + $0x2] sm:$0x1]
        %v3223 = vsel %vm3183, %v3221, %v3222
        %3224 = vst [vmem:[#allocation3 + $0x2] sm:$0x1] %v3223
        %v3225 = vmax.f32 %v3150, %v3152
        %v3226 = vmax.f32 %v3151, %v3153
        %v3227 = vld [vmem:[%s4] sm:$0x1]
        %v3229 = vperm.slane %v3227, 0
        %v3231 = vadd.f32 %v3225, %v3229
        %v3232 = vadd.f32 %v3226, %v3229
        %v3233 = vmax.f32 %v3231, 0.0
        %v3234 = vmax.f32 %v3232, 0.0
        %v3236 = vrot.slane %v3233, 1
        %v3238 = vmax.f32 %v3233, %v3236
        %v3239 = vpack.c.bf16 %v3238, %v3238
        %v3241 = vrot.slane %v3239, 3
        %vm3242 = vcmask 1040384
        %v3245 = vsel %vm3242, %v3239, %v3241
        %3247 = vrot.lane.b32.xlu0 %v3245, 64
        %v3248 = vpop.permute.xlu0 %3247
        %v3250 = vld [vmem:[#allocation3 + $0x2] sm:$0x1]
        %v3251 = vsel %vm3196, %v3248, %v3250
        %3252 = vst [vmem:[#allocation3 + $0x2] sm:$0x1] %v3251
        %3253 = vst [vmem:[#allocation1] sm:$0xff] %v3239
        %s3254 = scalar_lea.vmem [#allocation1], 1
        %v3255 = vld [vmem:[%s3254] ss:$4 sm:$0xff]
        %v3257 = vld [vmem:[#allocation3 + $0x3] sm:$0x1]
        %v3258 = vsel %vm3183, %v3255, %v3257
        %3259 = vst [vmem:[#allocation3 + $0x3] sm:$0x1] %v3258
        %3260 = vst [vmem:[#allocation1] sm:$0xff] %v3239
        %s3261 = scalar_lea.vmem [#allocation1], 2
        %v3262 = vld [vmem:[%s3261] ss:$4 sm:$0xff]
        %3264 = vrot.lane.b32.xlu0 %v3262, 64
        %v3265 = vpop.permute.xlu0 %3264
        %v3267 = vld [vmem:[#allocation3 + $0x3] sm:$0x1]
        %v3268 = vsel %vm3196, %v3265, %v3267
        %3269 = vst [vmem:[#allocation3 + $0x3] sm:$0x1] %v3268
        %3270 = vst [vmem:[#allocation1] sm:$0xff] %v3239
        %s3271 = scalar_lea.vmem [#allocation1], 3
        %v3272 = vld [vmem:[%s3271] ss:$4 sm:$0xff]
        %v3274 = vld [vmem:[#allocation3 + $0x4] sm:$0x1]
        %v3275 = vsel %vm3183, %v3272, %v3274
        %3276 = vst [vmem:[#allocation3 + $0x4] sm:$0x1] %v3275
        %v3278 = vrot.slane %v3234, 1
        %v3280 = vmax.f32 %v3234, %v3278
        %v3281 = vpack.c.bf16 %v3280, %v3280
        %v3283 = vrot.slane %v3281, 3
        %v3286 = vsel %vm3242, %v3281, %v3283
        %3288 = vrot.lane.b32.xlu0 %v3286, 64
        %v3289 = vpop.permute.xlu0 %3288
        %v3291 = vld [vmem:[#allocation3 + $0x4] sm:$0x1]
        %v3292 = vsel %vm3196, %v3289, %v3291
        %3293 = vst [vmem:[#allocation3 + $0x4] sm:$0x1] %v3292
        %v3294 = vmax.f32 %v3154, %v3156
        %v3295 = vmax.f32 %v3155, %v3157
        %v3296 = vld [vmem:[%s4] sm:$0x1]
        %v3298 = vperm.slane %v3296, 0
        %v3300 = vadd.f32 %v3294, %v3298
        %v3301 = vadd.f32 %v3295, %v3298
        %v3302 = vmax.f32 %v3300, 0.0
        %v3303 = vmax.f32 %v3301, 0.0
        %v3305 = vrot.slane %v3302, 1
        %v3307 = vmax.f32 %v3302, %v3305
        %v3308 = vpack.c.bf16 %v3307, %v3307
        %v3309 = vld [vmem:[#allocation3 + $0x5] sm:$0x1]
        %v3310 = vsel %vm3183, %v3308, %v3309
        %3311 = vst [vmem:[#allocation3 + $0x5] sm:$0x1] %v3310
        %3313 = vst [vmem:[#allocation1] sm:$0xff] %v3308
        %s3314 = scalar_lea.vmem [#allocation1], 1
        %v3315 = vld [vmem:[%s3314] ss:$4 sm:$0xff]
        %3317 = vrot.lane.b32.xlu0 %v3315, 64
        %v3318 = vpop.permute.xlu0 %3317
        %v3320 = vld [vmem:[#allocation3 + $0x5] sm:$0x1]
        %v3321 = vsel %vm3196, %v3318, %v3320
        %3322 = vst [vmem:[#allocation3 + $0x5] sm:$0x1] %v3321
        %3323 = vst [vmem:[#allocation1] sm:$0xff] %v3308
        %s3324 = scalar_lea.vmem [#allocation1], 2
        %v3325 = vld [vmem:[%s3324] ss:$4 sm:$0xff]
        %v3327 = vld [vmem:[#allocation3 + $0x6] sm:$0x1]
        %v3328 = vsel %vm3183, %v3325, %v3327
        %3329 = vst [vmem:[#allocation3 + $0x6] sm:$0x1] %v3328
        %3330 = vst [vmem:[#allocation1] sm:$0xff] %v3308
        %s3331 = scalar_lea.vmem [#allocation1], 3
        %v3332 = vld [vmem:[%s3331] ss:$4 sm:$0xff]
        %3334 = vrot.lane.b32.xlu0 %v3332, 64
        %v3335 = vpop.permute.xlu0 %3334
        %v3337 = vld [vmem:[#allocation3 + $0x6] sm:$0x1]
        %v3338 = vsel %vm3196, %v3335, %v3337
        %3339 = vst [vmem:[#allocation3 + $0x6] sm:$0x1] %v3338
        %v3341 = vrot.slane %v3303, 1
        %v3343 = vmax.f32 %v3303, %v3341
        %v3344 = vpack.c.bf16 %v3343, %v3343
        %v3345 = vld [vmem:[#allocation3 + $0x7] sm:$0x1]
        %v3346 = vsel %vm3183, %v3344, %v3345
        %3347 = vst [vmem:[#allocation3 + $0x7] sm:$0x1] %v3346
        %v3348 = vmax.f32 %v3158, %v3160
        %v3349 = vmax.f32 %v3159, %v3161
        %v3350 = vld [vmem:[%s4] sm:$0x1]
        %v3352 = vperm.slane %v3350, 0
        %v3354 = vadd.f32 %v3348, %v3352
        %v3355 = vadd.f32 %v3349, %v3352
        %v3356 = vmax.f32 %v3354, 0.0
        %v3357 = vmax.f32 %v3355, 0.0
        %v3359 = vrot.slane %v3356, 1
        %v3361 = vmax.f32 %v3356, %v3359
        %v3362 = vpack.c.bf16 %v3361, %v3361
        %v3364 = vrot.slane %v3362, 3
        %v3367 = vsel %vm3242, %v3362, %v3364
        %3369 = vrot.lane.b32.xlu0 %v3367, 64
        %v3370 = vpop.permute.xlu0 %3369
        %v3372 = vld [vmem:[#allocation3 + $0x7] sm:$0x1]
        %v3373 = vsel %vm3196, %v3370, %v3372
        %3374 = vst [vmem:[#allocation3 + $0x7] sm:$0x1] %v3373
        %3375 = vst [vmem:[#allocation1] sm:$0xff] %v3362
        %s3376 = scalar_lea.vmem [#allocation1], 1
        %v3377 = vld [vmem:[%s3376] ss:$4 sm:$0xff]
        %v3379 = vld [vmem:[#allocation3 + $0x8] sm:$0x1]
        %v3380 = vsel %vm3183, %v3377, %v3379
        %3381 = vst [vmem:[#allocation3 + $0x8] sm:$0x1] %v3380
        %3382 = vst [vmem:[#allocation1] sm:$0xff] %v3362
        %s3383 = scalar_lea.vmem [#allocation1], 2
        %v3384 = vld [vmem:[%s3383] ss:$4 sm:$0xff]
        %3386 = vrot.lane.b32.xlu0 %v3384, 64
        %v3387 = vpop.permute.xlu0 %3386
        %v3389 = vld [vmem:[#allocation3 + $0x8] sm:$0x1]
        %v3390 = vsel %vm3196, %v3387, %v3389
        %3391 = vst [vmem:[#allocation3 + $0x8] sm:$0x1] %v3390
        %3392 = vst [vmem:[#allocation1] sm:$0xff] %v3362
        %s3393 = scalar_lea.vmem [#allocation1], 3
        %v3394 = vld [vmem:[%s3393] ss:$4 sm:$0xff]
        %v3396 = vld [vmem:[#allocation3 + $0x9] sm:$0x1]
        %v3397 = vsel %vm3183, %v3394, %v3396
        %3398 = vst [vmem:[#allocation3 + $0x9] sm:$0x1] %v3397
        %v3400 = vrot.slane %v3357, 1
        %v3402 = vmax.f32 %v3357, %v3400
        %v3403 = vpack.c.bf16 %v3402, %v3402
        %v3405 = vrot.slane %v3403, 3
        %v3408 = vsel %vm3242, %v3403, %v3405
        %3410 = vrot.lane.b32.xlu0 %v3408, 64
        %v3411 = vpop.permute.xlu0 %3410
        %v3413 = vld [vmem:[#allocation3 + $0x9] sm:$0x1]
        %v3414 = vsel %vm3196, %v3411, %v3413
        %3415 = vst [vmem:[#allocation3 + $0x9] sm:$0x1] %v3414
        %v3416 = vmax.f32 %v3162, %v3164
        %v3417 = vmax.f32 %v3163, %v3165
        %v3418 = vld [vmem:[%s4] sm:$0x1]
        %v3420 = vperm.slane %v3418, 0
        %v3422 = vadd.f32 %v3416, %v3420
        %v3423 = vadd.f32 %v3417, %v3420
        %v3424 = vmax.f32 %v3422, 0.0
        %v3425 = vmax.f32 %v3423, 0.0
        %v3427 = vrot.slane %v3424, 1
        %v3429 = vmax.f32 %v3424, %v3427
        %v3430 = vpack.c.bf16 %v3429, %v3429
        %v3431 = vld [vmem:[#allocation3 + $0xa] sm:$0x1]
        %v3432 = vsel %vm3183, %v3430, %v3431
        %3433 = vst [vmem:[#allocation3 + $0xa] sm:$0x1] %v3432
        %3435 = vst [vmem:[#allocation1] sm:$0xff] %v3430
        %s3436 = scalar_lea.vmem [#allocation1], 1
        %v3437 = vld [vmem:[%s3436] ss:$4 sm:$0xff]
        %3439 = vrot.lane.b32.xlu0 %v3437, 64
        %v3440 = vpop.permute.xlu0 %3439
        %v3442 = vld [vmem:[#allocation3 + $0xa] sm:$0x1]
        %v3443 = vsel %vm3196, %v3440, %v3442
        %3444 = vst [vmem:[#allocation3 + $0xa] sm:$0x1] %v3443
        %3445 = vst [vmem:[#allocation1] sm:$0xff] %v3430
        %s3446 = scalar_lea.vmem [#allocation1], 2
        %v3447 = vld [vmem:[%s3446] ss:$4 sm:$0xff]
        %v3449 = vld [vmem:[#allocation3 + $0xb] sm:$0x1]
        %v3450 = vsel %vm3183, %v3447, %v3449
        %3451 = vst [vmem:[#allocation3 + $0xb] sm:$0x1] %v3450
        %3452 = vst [vmem:[#allocation1] sm:$0xff] %v3430
        %s3453 = scalar_lea.vmem [#allocation1], 3
        %v3454 = vld [vmem:[%s3453] ss:$4 sm:$0xff]
        %3456 = vrot.lane.b32.xlu0 %v3454, 64
        %v3457 = vpop.permute.xlu0 %3456
        %v3459 = vld [vmem:[#allocation3 + $0xb] sm:$0x1]
        %v3460 = vsel %vm3196, %v3457, %v3459
        %3461 = vst [vmem:[#allocation3 + $0xb] sm:$0x1] %v3460
        %v3463 = vrot.slane %v3425, 1
        %v3465 = vmax.f32 %v3425, %v3463
        %v3466 = vpack.c.bf16 %v3465, %v3465
        %v3467 = vld [vmem:[#allocation3 + $0xc] sm:$0x1]
        %v3468 = vsel %vm3183, %v3466, %v3467
        %3469 = vst [vmem:[#allocation3 + $0xc] sm:$0x1] %v3468
        %v3470 = vld [vmem:[#allocation3] sm:$0xff]
        %v3471 = vld [vmem:[#allocation3 + $0x8] sm:$0x1f]
        %v3472 = vld [vmem:[%s5] sm:$0xf]
        %v3473 = vld [vmem:[%s5 + $0x4] sm:$0xf]
        %v3474 = vld [vmem:[%s5 + $0x8] sm:$0xf]
        %v3475 = vld [vmem:[%s5 + $0xc] sm:$0xf]
        %v3476 = vld [vmem:[%s5 + $0x10] sm:$0xf]
        %v3477 = vld [vmem:[%s5 + $0x14] sm:$0xf]
        %v3478 = vld [vmem:[%s5 + $0x18] sm:$0xf]
        %v3479 = vld [vmem:[%s5 + $0x1c] sm:$0xf]
        %v3480 = vld [vmem:[%s5 + $0x20] sm:$0xf]
        %v3481 = vld [vmem:[%s5 + $0x24] sm:$0xf]
        %v3482 = vld [vmem:[%s5 + $0x28] sm:$0xf]
        %v3483 = vld [vmem:[%s5 + $0x2c] sm:$0xf]
        %v3484 = vld [vmem:[%s5 + $0x30] sm:$0xf]
        %v3485 = vld [vmem:[%s5 + $0x34] sm:$0xf]
        %v3486 = vld [vmem:[%s5 + $0x38] sm:$0xf]
        %v3487 = vld [vmem:[%s5 + $0x3c] sm:$0xf]
        %v3488 = vld [vmem:[%s5 + $0x40] sm:$0xf]
        %v3489 = vld [vmem:[%s5 + $0x44] sm:$0xf]
        %v3490 = vld [vmem:[%s5 + $0x48] sm:$0xf]
        %v3491 = vld [vmem:[%s5 + $0x4c] sm:$0xf]
        %v3492 = vld [vmem:[%s5 + $0x50] sm:$0xf]
        %v3493 = vld [vmem:[%s5 + $0x54] sm:$0xf]
        %v3494 = vld [vmem:[%s5 + $0x58] sm:$0xf]
        %v3495 = vld [vmem:[%s5 + $0x5c] sm:$0xf]
        %v3496 = vld [vmem:[%s5 + $0x60] sm:$0xf]
        %v3497 = vld [vmem:[%s5 + $0x64] sm:$0xf]
        %v3498 = vld [vmem:[%s5 + $0x68] sm:$0xf]
        %v3499 = vld [vmem:[%s5 + $0x6c] sm:$0xf]
        %v3500 = vld [vmem:[%s5 + $0x70] sm:$0xf]
        %v3501 = vld [vmem:[%s5 + $0x74] sm:$0xf]
        %v3502 = vld [vmem:[%s5 + $0x78] sm:$0xf]
        %v3503 = vld [vmem:[%s5 + $0x7c] sm:$0xf]
        %v3504 = vld [vmem:[%s5 + $0x80] sm:$0xf]
        %v3505 = vld [vmem:[%s5 + $0x84] sm:$0xf]
        %v3506 = vld [vmem:[%s5 + $0x88] sm:$0xf]
        %v3507 = vld [vmem:[%s5 + $0x8c] sm:$0xf]
        %v3508 = vld [vmem:[%s5 + $0x90] sm:$0xf]
        %v3509 = vld [vmem:[%s5 + $0x94] sm:$0xf]
        %v3510 = vld [vmem:[%s5 + $0x98] sm:$0xf]
        %v3511 = vld [vmem:[%s5 + $0x9c] sm:$0xf]
        %v3512 = vld [vmem:[%s5 + $0xa0] sm:$0xf]
        %v3513 = vld [vmem:[%s5 + $0xa4] sm:$0xf]
        %v3514 = vld [vmem:[%s5 + $0xa8] sm:$0xf]
        %v3515 = vld [vmem:[%s5 + $0xac] sm:$0xf]
        %v3516 = vld [vmem:[%s5 + $0xb0] sm:$0xf]
        %v3517 = vld [vmem:[%s5 + $0xb4] sm:$0xf]
        %v3518 = vld [vmem:[%s5 + $0xb8] sm:$0xf]
        %v3519 = vld [vmem:[%s5 + $0xbc] sm:$0xf]
        %v3520 = vld [vmem:[%s5 + $0xc0] sm:$0xf]
        %v3521 = vld [vmem:[%s5 + $0xc4] sm:$0xf]
        %v3522 = vld [vmem:[%s5 + $0xc8] sm:$0xf]
        %v3523 = vld [vmem:[%s5 + $0xcc] sm:$0xf]
        %v3524 = vld [vmem:[%s5 + $0xd0] sm:$0xf]
        %v3525 = vld [vmem:[%s5 + $0xd4] sm:$0xf]
        %v3526 = vld [vmem:[%s5 + $0xd8] sm:$0xf]
        %v3527 = vld [vmem:[%s5 + $0xdc] sm:$0xf]
        %v3528 = vld [vmem:[%s5 + $0xe0] sm:$0xf]
        %v3529 = vld [vmem:[%s5 + $0xe4] sm:$0xf]
        %v3530 = vld [vmem:[%s5 + $0xe8] sm:$0xf]
        %v3531 = vld [vmem:[%s5 + $0xec] sm:$0xf]
        %v3532 = vld [vmem:[%s5 + $0xf0] sm:$0xf]
        %v3533 = vld [vmem:[%s5 + $0xf4] sm:$0xf]
        %v3534 = vld [vmem:[%s5 + $0xf8] sm:$0xf]
        %v3535 = vld [vmem:[%s5 + $0xfc] sm:$0xf]
        %v3536 = vld [vmem:[%s5 + $0x100] sm:$0xf]
        %v3537 = vld [vmem:[%s5 + $0x104] sm:$0xf]
        %v3538 = vld [vmem:[%s5 + $0x108] sm:$0xf]
        %v3539 = vld [vmem:[%s5 + $0x10c] sm:$0xf]
        %v3540 = vld [vmem:[%s5 + $0x110] sm:$0xf]
        %v3541 = vld [vmem:[%s5 + $0x114] sm:$0xf]
        %v3542 = vld [vmem:[%s5 + $0x118] sm:$0xf]
        %v3543 = vld [vmem:[%s5 + $0x11c] sm:$0xf]
        %v3544 = vld [vmem:[%s5 + $0x120] sm:$0xf]
        %v3545 = vld [vmem:[%s5 + $0x124] sm:$0xf]
        %v3546 = vld [vmem:[%s5 + $0x128] sm:$0xf]
        %v3547 = vld [vmem:[%s5 + $0x12c] sm:$0xf]
        %v3548 = vld [vmem:[%s5 + $0x130] sm:$0xf]
        %v3549 = vld [vmem:[%s5 + $0x134] sm:$0xf]
        %v3550 = vld [vmem:[%s5 + $0x138] sm:$0xf]
        %v3551 = vld [vmem:[%s5 + $0x13c] sm:$0xf]
        %v3552 = vld [vmem:[%s5 + $0x140] sm:$0xf]
        %v3553 = vld [vmem:[%s5 + $0x144] sm:$0xf]
        %v3554 = vld [vmem:[%s5 + $0x148] sm:$0xf]
        %v3555 = vld [vmem:[%s5 + $0x14c] sm:$0xf]
        %v3556 = vld [vmem:[%s5 + $0x150] sm:$0xf]
        %v3557 = vld [vmem:[%s5 + $0x154] sm:$0xf]
        %v3558 = vld [vmem:[%s5 + $0x158] sm:$0xf]
        %v3559 = vld [vmem:[%s5 + $0x15c] sm:$0xf]
        %v3560 = vld [vmem:[%s5 + $0x160] sm:$0xf]
        %v3561 = vld [vmem:[%s5 + $0x164] sm:$0xf]
        %v3562 = vld [vmem:[%s5 + $0x168] sm:$0xf]
        %v3563 = vld [vmem:[%s5 + $0x16c] sm:$0xf]
        %v3564 = vld [vmem:[%s5 + $0x170] sm:$0xf]
        %v3565 = vld [vmem:[%s5 + $0x174] sm:$0xf]
        %v3566 = vld [vmem:[%s5 + $0x178] sm:$0xf]
        %v3567 = vld [vmem:[%s5 + $0x17c] sm:$0xf]
        %v3568 = vld [vmem:[%s5 + $0x180] sm:$0xf]
        %v3569 = vld [vmem:[%s5 + $0x184] sm:$0xf]
        %v3570 = vld [vmem:[%s5 + $0x188] sm:$0xf]
        %v3571 = vld [vmem:[%s5 + $0x18c] sm:$0xf]
        %v3572 = vld [vmem:[%s5 + $0x190] sm:$0xf]
        %v3573 = vld [vmem:[%s5 + $0x194] sm:$0xf]
        %v3574 = vld [vmem:[%s5 + $0x198] sm:$0xf]
        %v3575 = vld [vmem:[%s5 + $0x19c] sm:$0xf]
        %v3576 = vld [vmem:[%s5 + $0x1a0] sm:$0xf]
        %v3577 = vld [vmem:[%s5 + $0x1a4] sm:$0xf]
        %v3578 = vld [vmem:[%s5 + $0x1a8] sm:$0xf]
        %v3579 = vld [vmem:[%s5 + $0x1ac] sm:$0xf]
        %v3580 = vld [vmem:[%s5 + $0x1b0] sm:$0xf]
        %v3581 = vld [vmem:[%s5 + $0x1b4] sm:$0xf]
        %v3582 = vld [vmem:[%s5 + $0x1b8] sm:$0xf]
        %v3583 = vld [vmem:[%s5 + $0x1bc] sm:$0xf]
        %v3584 = vld [vmem:[%s5 + $0x1c0] sm:$0xf]
        %v3585 = vld [vmem:[%s5 + $0x1c4] sm:$0xf]
        %v3586 = vld [vmem:[%s5 + $0x1c8] sm:$0xf]
        %v3587 = vld [vmem:[%s5 + $0x1cc] sm:$0xf]
        %v3588 = vld [vmem:[%s5 + $0x1d0] sm:$0xf]
        %v3589 = vld [vmem:[%s5 + $0x1d4] sm:$0xf]
        %v3590 = vld [vmem:[%s5 + $0x1d8] sm:$0xf]
        %v3591 = vld [vmem:[%s5 + $0x1dc] sm:$0xf]
        %v3592 = vld [vmem:[%s5 + $0x1e0] sm:$0xf]
        %v3593 = vld [vmem:[%s5 + $0x1e4] sm:$0xf]
        %v3594 = vld [vmem:[%s5 + $0x1e8] sm:$0xf]
        %v3595 = vld [vmem:[%s5 + $0x1ec] sm:$0xf]
        %v3596 = vld [vmem:[%s5 + $0x1f0] sm:$0xf]
        %v3597 = vld [vmem:[%s5 + $0x1f4] sm:$0xf]
        %v3598 = vld [vmem:[%s5 + $0x1f8] sm:$0xf]
        %v3599 = vld [vmem:[%s5 + $0x1fc] sm:$0xf]
        %v3600 = vld [vmem:[%s5 + $0x200] sm:$0xf]
        %v3601 = vld [vmem:[%s5 + $0x204] sm:$0xf]
        %v3602 = vld [vmem:[%s5 + $0x208] sm:$0xf]
        %v3603 = vld [vmem:[%s5 + $0x20c] sm:$0xf]
        %v3604 = vld [vmem:[%s5 + $0x210] sm:$0xf]
        %v3605 = vld [vmem:[%s5 + $0x214] sm:$0xf]
        %v3606 = vld [vmem:[%s5 + $0x218] sm:$0xf]
        %v3607 = vld [vmem:[%s5 + $0x21c] sm:$0xf]
        %v3608 = vld [vmem:[%s5 + $0x220] sm:$0xf]
        %v3609 = vld [vmem:[%s5 + $0x224] sm:$0xf]
        %v3610 = vld [vmem:[%s5 + $0x228] sm:$0xf]
        %v3611 = vld [vmem:[%s5 + $0x22c] sm:$0xf]
        %v3612 = vld [vmem:[%s5 + $0x230] sm:$0xf]
        %v3613 = vld [vmem:[%s5 + $0x234] sm:$0xf]
        %v3614 = vld [vmem:[%s5 + $0x238] sm:$0xf]
        %v3615 = vld [vmem:[%s5 + $0x23c] sm:$0xf]
        %v3616 = vld [vmem:[%s5 + $0x240] sm:$0xf]
        %v3617 = vld [vmem:[%s5 + $0x244] sm:$0xf]
        %v3618 = vld [vmem:[%s5 + $0x248] sm:$0xf]
        %v3619 = vld [vmem:[%s5 + $0x24c] sm:$0xf]
        %v3620 = vld [vmem:[%s5 + $0x250] sm:$0xf]
        %v3621 = vld [vmem:[%s5 + $0x254] sm:$0xf]
        %v3622 = vld [vmem:[%s5 + $0x258] sm:$0xf]
        %v3623 = vld [vmem:[%s5 + $0x25c] sm:$0xf]
        %v3624 = vld [vmem:[%s5 + $0x260] sm:$0xf]
        %v3625 = vld [vmem:[%s5 + $0x264] sm:$0xf]
        %v3626 = vld [vmem:[%s5 + $0x268] sm:$0xf]
        %v3627 = vld [vmem:[%s5 + $0x26c] sm:$0xf]
        %v3628 = vld [vmem:[%s5 + $0x270] sm:$0xf]
        %v3629 = vld [vmem:[%s5 + $0x274] sm:$0xf]
        %v3630 = vld [vmem:[%s5 + $0x278] sm:$0xf]
        %v3631 = vld [vmem:[%s5 + $0x27c] sm:$0xf]
        %v3632 = vld [vmem:[%s5 + $0x280] sm:$0xf]
        %v3633 = vld [vmem:[%s5 + $0x284] sm:$0xf]
        %v3634 = vld [vmem:[%s5 + $0x288] sm:$0xf]
        %v3635 = vld [vmem:[%s5 + $0x28c] sm:$0xf]
        %v3636 = vld [vmem:[%s5 + $0x290] sm:$0xf]
        %v3637 = vld [vmem:[%s5 + $0x294] sm:$0xf]
        %v3638 = vld [vmem:[%s5 + $0x298] sm:$0xf]
        %v3639 = vld [vmem:[%s5 + $0x29c] sm:$0xf]
        %v3640 = vld [vmem:[%s5 + $0x2a0] sm:$0xf]
        %v3641 = vld [vmem:[%s5 + $0x2a4] sm:$0xf]
        %v3642 = vld [vmem:[%s5 + $0x2a8] sm:$0xf]
        %v3643 = vld [vmem:[%s5 + $0x2ac] sm:$0xf]
        %v3644 = vld [vmem:[%s5 + $0x2b0] sm:$0xf]
        %v3645 = vld [vmem:[%s5 + $0x2b4] sm:$0xf]
        %v3646 = vld [vmem:[%s5 + $0x2b8] sm:$0xf]
        %v3647 = vld [vmem:[%s5 + $0x2bc] sm:$0xf]
        %v3648 = vld [vmem:[%s5 + $0x2c0] sm:$0xf]
        %v3649 = vld [vmem:[%s5 + $0x2c4] sm:$0xf]
        %v3650 = vld [vmem:[%s5 + $0x2c8] sm:$0xf]
        %v3651 = vld [vmem:[%s5 + $0x2cc] sm:$0xf]
        %v3652 = vld [vmem:[%s5 + $0x2d0] sm:$0xf]
        %v3653 = vld [vmem:[%s5 + $0x2d4] sm:$0xf]
        %v3654 = vld [vmem:[%s5 + $0x2d8] sm:$0xf]
        %v3655 = vld [vmem:[%s5 + $0x2dc] sm:$0xf]
        %v3656 = vld [vmem:[%s5 + $0x2e0] sm:$0xf]
        %v3657 = vld [vmem:[%s5 + $0x2e4] sm:$0xf]
        %v3658 = vld [vmem:[%s5 + $0x2e8] sm:$0xf]
        %v3659 = vld [vmem:[%s5 + $0x2ec] sm:$0xf]
        %v3660 = vld [vmem:[%s5 + $0x2f0] sm:$0xf]
        %v3661 = vld [vmem:[%s5 + $0x2f4] sm:$0xf]
        %v3662 = vld [vmem:[%s5 + $0x2f8] sm:$0xf]
        %v3663 = vld [vmem:[%s5 + $0x2fc] sm:$0xf]
        %v3664 = vld [vmem:[%s5 + $0x300] sm:$0xf]
        %v3665 = vld [vmem:[%s5 + $0x304] sm:$0xf]
        %v3666 = vld [vmem:[%s5 + $0x308] sm:$0xf]
        %v3667 = vld [vmem:[%s5 + $0x30c] sm:$0xf]
        %v3668 = vld [vmem:[%s5 + $0x310] sm:$0xf]
        %v3669 = vld [vmem:[%s5 + $0x314] sm:$0xf]
        %v3670 = vld [vmem:[%s5 + $0x318] sm:$0xf]
        %v3671 = vld [vmem:[%s5 + $0x31c] sm:$0xf]
        %v3672 = vld [vmem:[%s6] sm:$0x1]
        %3674 = vst [vmem:[#allocation1] ss:$9 sm:$0xff] %v3470
        %v3675 = vld [vmem:[#allocation1] sm:$0xff]
        %v3676 = vld [vmem:[#allocation1 + $0x9] sm:$0xff]
        %v3677 = vld [vmem:[#allocation1 + $0x12] sm:$0xff]
        %v3678 = vld [vmem:[#allocation1 + $0x1b] sm:$0xff]
        %v3679 = vld [vmem:[#allocation1 + $0x24] sm:$0xff]
        %v3680 = vld [vmem:[#allocation1 + $0x2d] sm:$0xff]
        %v3681 = vld [vmem:[#allocation1 + $0x36] sm:$0xff]
        %v3682 = vld [vmem:[#allocation1 + $0x3f] sm:$0xff]
        %3684 = vst [vmem:[#allocation1] ss:$9 sm:$0xff] %v3471
        %v3685 = vld [vmem:[#allocation1] sm:$0xff]
        %v3686 = vld [vmem:[#allocation1 + $0x9] sm:$0xff]
        %v3687 = vld [vmem:[#allocation1 + $0x12] sm:$0xff]
        %v3688 = vld [vmem:[#allocation1 + $0x1b] sm:$0xff]
        %v3689 = vld [vmem:[#allocation1 + $0x24] sm:$0xff]
        %v3902 = vunpack.c.l.b16 %v3472
        %v3903 = vunpack.c.l.b16 %v3473
        %v3904 = vunpack.c.l.b16 %v3474
        %v3905 = vunpack.c.l.b16 %v3475
        %v3906 = vunpack.c.l.b16 %v3476
        %v3907 = vunpack.c.l.b16 %v3477
        %v3908 = vunpack.c.l.b16 %v3478
        %v3909 = vunpack.c.l.b16 %v3479
        %v3910 = vunpack.c.l.b16 %v3480
        %v3911 = vunpack.c.l.b16 %v3481
        %v3912 = vunpack.c.l.b16 %v3482
        %v3913 = vunpack.c.l.b16 %v3483
        %v3914 = vunpack.c.l.b16 %v3484
        %v3915 = vunpack.c.l.b16 %v3485
        %v3916 = vunpack.c.l.b16 %v3486
        %v3917 = vunpack.c.l.b16 %v3487
        %v3918 = vunpack.c.l.b16 %v3488
        %v3919 = vunpack.c.l.b16 %v3489
        %v3920 = vunpack.c.l.b16 %v3490
        %v3921 = vunpack.c.l.b16 %v3491
        %v3922 = vunpack.c.l.b16 %v3492
        %v3923 = vunpack.c.l.b16 %v3493
        %v3924 = vunpack.c.l.b16 %v3494
        %v3925 = vunpack.c.l.b16 %v3495
        %v3926 = vunpack.c.l.b16 %v3496
        %v3927 = vunpack.c.l.b16 %v3497
        %v3928 = vunpack.c.l.b16 %v3498
        %v3929 = vunpack.c.l.b16 %v3499
        %v3930 = vunpack.c.l.b16 %v3500
        %v3931 = vunpack.c.l.b16 %v3501
        %v3932 = vunpack.c.l.b16 %v3502
        %v3933 = vunpack.c.l.b16 %v3503
        %v3934 = vunpack.c.l.b16 %v3504
        %v3935 = vunpack.c.l.b16 %v3505
        %v3936 = vunpack.c.l.b16 %v3506
        %v3937 = vunpack.c.l.b16 %v3507
        %v3938 = vunpack.c.l.b16 %v3508
        %v3939 = vunpack.c.l.b16 %v3509
        %v3940 = vunpack.c.l.b16 %v3510
        %v3941 = vunpack.c.l.b16 %v3511
        %v3942 = vunpack.c.l.b16 %v3512
        %v3943 = vunpack.c.l.b16 %v3513
        %v3944 = vunpack.c.l.b16 %v3514
        %v3945 = vunpack.c.l.b16 %v3515
        %v3946 = vunpack.c.l.b16 %v3516
        %v3947 = vunpack.c.l.b16 %v3517
        %v3948 = vunpack.c.l.b16 %v3518
        %v3949 = vunpack.c.l.b16 %v3519
        %v3950 = vunpack.c.l.b16 %v3520
        %v3951 = vunpack.c.l.b16 %v3521
        %v3952 = vunpack.c.l.b16 %v3522
        %v3953 = vunpack.c.l.b16 %v3523
        %v3954 = vunpack.c.l.b16 %v3524
        %v3955 = vunpack.c.l.b16 %v3525
        %v3956 = vunpack.c.l.b16 %v3526
        %v3957 = vunpack.c.l.b16 %v3527
        %v3958 = vunpack.c.l.b16 %v3528
        %v3959 = vunpack.c.l.b16 %v3529
        %v3960 = vunpack.c.l.b16 %v3530
        %v3961 = vunpack.c.l.b16 %v3531
        %v3962 = vunpack.c.l.b16 %v3532
        %v3963 = vunpack.c.l.b16 %v3533
        %v3964 = vunpack.c.l.b16 %v3534
        %v3965 = vunpack.c.l.b16 %v3535
        %v3966 = vunpack.c.l.b16 %v3536
        %v3967 = vunpack.c.l.b16 %v3537
        %v3968 = vunpack.c.l.b16 %v3538
        %v3969 = vunpack.c.l.b16 %v3539
        %v3970 = vunpack.c.l.b16 %v3540
        %v3971 = vunpack.c.l.b16 %v3541
        %v3972 = vunpack.c.l.b16 %v3542
        %v3973 = vunpack.c.l.b16 %v3543
        %v3974 = vunpack.c.l.b16 %v3544
        %v3975 = vunpack.c.l.b16 %v3545
        %v3976 = vunpack.c.l.b16 %v3546
        %v3977 = vunpack.c.l.b16 %v3547
        %v3978 = vunpack.c.l.b16 %v3548
        %v3979 = vunpack.c.l.b16 %v3549
        %v3980 = vunpack.c.l.b16 %v3550
        %v3981 = vunpack.c.l.b16 %v3551
        %v3982 = vunpack.c.l.b16 %v3552
        %v3983 = vunpack.c.l.b16 %v3553
        %v3984 = vunpack.c.l.b16 %v3554
        %v3985 = vunpack.c.l.b16 %v3555
        %v3986 = vunpack.c.l.b16 %v3556
        %v3987 = vunpack.c.l.b16 %v3557
        %v3988 = vunpack.c.l.b16 %v3558
        %v3989 = vunpack.c.l.b16 %v3559
        %v3990 = vunpack.c.l.b16 %v3560
        %v3991 = vunpack.c.l.b16 %v3561
        %v3992 = vunpack.c.l.b16 %v3562
        %v3993 = vunpack.c.l.b16 %v3563
        %v3994 = vunpack.c.l.b16 %v3564
        %v3995 = vunpack.c.l.b16 %v3565
        %v3996 = vunpack.c.l.b16 %v3566
        %v3997 = vunpack.c.l.b16 %v3567
        %v3998 = vunpack.c.l.b16 %v3568
        %v3999 = vunpack.c.l.b16 %v3569
        %v4000 = vunpack.c.l.b16 %v3570
        %v4001 = vunpack.c.l.b16 %v3571
        %v4002 = vunpack.c.l.b16 %v3572
        %v4003 = vunpack.c.l.b16 %v3573
        %v4004 = vunpack.c.l.b16 %v3574
        %v4005 = vunpack.c.l.b16 %v3575
        %v4006 = vunpack.c.l.b16 %v3576
        %v4007 = vunpack.c.l.b16 %v3577
        %v4008 = vunpack.c.l.b16 %v3578
        %v4009 = vunpack.c.l.b16 %v3579
        %v4010 = vunpack.c.l.b16 %v3580
        %v4011 = vunpack.c.l.b16 %v3581
        %v4012 = vunpack.c.l.b16 %v3582
        %v4013 = vunpack.c.l.b16 %v3583
        %v4014 = vunpack.c.l.b16 %v3584
        %v4015 = vunpack.c.l.b16 %v3585
        %v4016 = vunpack.c.l.b16 %v3586
        %v4017 = vunpack.c.l.b16 %v3587
        %v4018 = vunpack.c.l.b16 %v3588
        %v4019 = vunpack.c.l.b16 %v3589
        %v4020 = vunpack.c.l.b16 %v3590
        %v4021 = vunpack.c.l.b16 %v3591
        %v4022 = vunpack.c.l.b16 %v3592
        %v4023 = vunpack.c.l.b16 %v3593
        %v4024 = vunpack.c.l.b16 %v3594
        %v4025 = vunpack.c.l.b16 %v3595
        %v4026 = vunpack.c.l.b16 %v3596
        %v4027 = vunpack.c.l.b16 %v3597
        %v4028 = vunpack.c.l.b16 %v3598
        %v4029 = vunpack.c.l.b16 %v3599
        %v4030 = vunpack.c.l.b16 %v3600
        %v4031 = vunpack.c.l.b16 %v3601
        %v4032 = vunpack.c.l.b16 %v3602
        %v4033 = vunpack.c.l.b16 %v3603
        %v4034 = vunpack.c.l.b16 %v3604
        %v4035 = vunpack.c.l.b16 %v3605
        %v4036 = vunpack.c.l.b16 %v3606
        %v4037 = vunpack.c.l.b16 %v3607
        %v4038 = vunpack.c.l.b16 %v3608
        %v4039 = vunpack.c.l.b16 %v3609
        %v4040 = vunpack.c.l.b16 %v3610
        %v4041 = vunpack.c.l.b16 %v3611
        %v4042 = vunpack.c.l.b16 %v3612
        %v4043 = vunpack.c.l.b16 %v3613
        %v4044 = vunpack.c.l.b16 %v3614
        %v4045 = vunpack.c.l.b16 %v3615
        %v4046 = vunpack.c.l.b16 %v3616
        %v4047 = vunpack.c.l.b16 %v3617
        %v4048 = vunpack.c.l.b16 %v3618
        %v4049 = vunpack.c.l.b16 %v3619
        %v4050 = vunpack.c.l.b16 %v3620
        %v4051 = vunpack.c.l.b16 %v3621
        %v4052 = vunpack.c.l.b16 %v3622
        %v4053 = vunpack.c.l.b16 %v3623
        %v4054 = vunpack.c.l.b16 %v3624
        %v4055 = vunpack.c.l.b16 %v3625
        %v4056 = vunpack.c.l.b16 %v3626
        %v4057 = vunpack.c.l.b16 %v3627
        %v4058 = vunpack.c.l.b16 %v3628
        %v4059 = vunpack.c.l.b16 %v3629
        %v4060 = vunpack.c.l.b16 %v3630
        %v4061 = vunpack.c.l.b16 %v3631
        %v4062 = vunpack.c.l.b16 %v3632
        %v4063 = vunpack.c.l.b16 %v3633
        %v4064 = vunpack.c.l.b16 %v3634
        %v4065 = vunpack.c.l.b16 %v3635
        %v4066 = vunpack.c.l.b16 %v3636
        %v4067 = vunpack.c.l.b16 %v3637
        %v4068 = vunpack.c.l.b16 %v3638
        %v4069 = vunpack.c.l.b16 %v3639
        %v4070 = vunpack.c.l.b16 %v3640
        %v4071 = vunpack.c.l.b16 %v3641
        %v4072 = vunpack.c.l.b16 %v3642
        %v4073 = vunpack.c.l.b16 %v3643
        %v4074 = vunpack.c.l.b16 %v3644
        %v4075 = vunpack.c.l.b16 %v3645
        %v4076 = vunpack.c.l.b16 %v3646
        %v4077 = vunpack.c.l.b16 %v3647
        %v4078 = vunpack.c.l.b16 %v3648
        %v4079 = vunpack.c.l.b16 %v3649
        %v4080 = vunpack.c.l.b16 %v3650
        %v4081 = vunpack.c.l.b16 %v3651
        %v4082 = vunpack.c.l.b16 %v3652
        %v4083 = vunpack.c.l.b16 %v3653
        %v4084 = vunpack.c.l.b16 %v3654
        %v4085 = vunpack.c.l.b16 %v3655
        %v4086 = vunpack.c.l.b16 %v3656
        %v4087 = vunpack.c.l.b16 %v3657
        %v4088 = vunpack.c.l.b16 %v3658
        %v4089 = vunpack.c.l.b16 %v3659
        %v4090 = vunpack.c.l.b16 %v3660
        %v4091 = vunpack.c.l.b16 %v3661
        %v4092 = vunpack.c.l.b16 %v3662
        %v4093 = vunpack.c.l.b16 %v3663
        %v4094 = vunpack.c.l.b16 %v3664
        %v4095 = vunpack.c.l.b16 %v3665
        %v4096 = vunpack.c.l.b16 %v3666
        %v4097 = vunpack.c.l.b16 %v3667
        %v4098 = vunpack.c.l.b16 %v3668
        %v4099 = vunpack.c.l.b16 %v3669
        %v4100 = vunpack.c.l.b16 %v3670
        %v4101 = vunpack.c.l.b16 %v3671
        %v4102 = vpack.c.b16 %v3903, %v3902
        %v4103 = vpack.c.b16 %v3905, %v3904
        %v4104 = vpack.c.b16 %v3907, %v3906
        %v4105 = vpack.c.b16 %v3909, %v3908
        %v4106 = vpack.c.b16 %v3911, %v3910
        %v4107 = vpack.c.b16 %v3913, %v3912
        %v4108 = vpack.c.b16 %v3915, %v3914
        %v4109 = vpack.c.b16 %v3917, %v3916
        %v4110 = vpack.c.b16 %v3919, %v3918
        %v4111 = vpack.c.b16 %v3921, %v3920
        %v4112 = vpack.c.b16 %v3923, %v3922
        %v4113 = vpack.c.b16 %v3925, %v3924
        %v4114 = vpack.c.b16 %v3927, %v3926
        %v4115 = vpack.c.b16 %v3929, %v3928
        %v4116 = vpack.c.b16 %v3931, %v3930
        %v4117 = vpack.c.b16 %v3933, %v3932
        %v4118 = vpack.c.b16 %v3935, %v3934
        %v4119 = vpack.c.b16 %v3937, %v3936
        %v4120 = vpack.c.b16 %v3939, %v3938
        %v4121 = vpack.c.b16 %v3941, %v3940
        %v4122 = vpack.c.b16 %v3943, %v3942
        %v4123 = vpack.c.b16 %v3945, %v3944
        %v4124 = vpack.c.b16 %v3947, %v3946
        %v4125 = vpack.c.b16 %v3949, %v3948
        %v4126 = vpack.c.b16 %v3951, %v3950
        %v4127 = vpack.c.b16 %v3953, %v3952
        %v4128 = vpack.c.b16 %v3955, %v3954
        %v4129 = vpack.c.b16 %v3957, %v3956
        %v4130 = vpack.c.b16 %v3959, %v3958
        %v4131 = vpack.c.b16 %v3961, %v3960
        %v4132 = vpack.c.b16 %v3963, %v3962
        %v4133 = vpack.c.b16 %v3965, %v3964
        %v4134 = vpack.c.b16 %v3967, %v3966
        %v4135 = vpack.c.b16 %v3969, %v3968
        %v4136 = vpack.c.b16 %v3971, %v3970
        %v4137 = vpack.c.b16 %v3973, %v3972
        %v4138 = vpack.c.b16 %v3975, %v3974
        %v4139 = vpack.c.b16 %v3977, %v3976
        %v4140 = vpack.c.b16 %v3979, %v3978
        %v4141 = vpack.c.b16 %v3981, %v3980
        %v4142 = vpack.c.b16 %v3983, %v3982
        %v4143 = vpack.c.b16 %v3985, %v3984
        %v4144 = vpack.c.b16 %v3987, %v3986
        %v4145 = vpack.c.b16 %v3989, %v3988
        %v4146 = vpack.c.b16 %v3991, %v3990
        %v4147 = vpack.c.b16 %v3993, %v3992
        %v4148 = vpack.c.b16 %v3995, %v3994
        %v4149 = vpack.c.b16 %v3997, %v3996
        %v4150 = vpack.c.b16 %v3999, %v3998
        %v4151 = vpack.c.b16 %v4001, %v4000
        %v4152 = vpack.c.b16 %v4003, %v4002
        %v4153 = vpack.c.b16 %v4005, %v4004
        %v4154 = vpack.c.b16 %v4007, %v4006
        %v4155 = vpack.c.b16 %v4009, %v4008
        %v4156 = vpack.c.b16 %v4011, %v4010
        %v4157 = vpack.c.b16 %v4013, %v4012
        %v4158 = vpack.c.b16 %v4015, %v4014
        %v4159 = vpack.c.b16 %v4017, %v4016
        %v4160 = vpack.c.b16 %v4019, %v4018
        %v4161 = vpack.c.b16 %v4021, %v4020
        %v4162 = vpack.c.b16 %v4023, %v4022
        %v4163 = vpack.c.b16 %v4025, %v4024
        %v4164 = vpack.c.b16 %v4027, %v4026
        %v4165 = vpack.c.b16 %v4029, %v4028
        %v4166 = vpack.c.b16 %v4031, %v4030
        %v4167 = vpack.c.b16 %v4033, %v4032
        %v4168 = vpack.c.b16 %v4035, %v4034
        %v4169 = vpack.c.b16 %v4037, %v4036
        %v4170 = vpack.c.b16 %v4039, %v4038
        %v4171 = vpack.c.b16 %v4041, %v4040
        %v4172 = vpack.c.b16 %v4043, %v4042
        %v4173 = vpack.c.b16 %v4045, %v4044
        %v4174 = vpack.c.b16 %v4047, %v4046
        %v4175 = vpack.c.b16 %v4049, %v4048
        %v4176 = vpack.c.b16 %v4051, %v4050
        %v4177 = vpack.c.b16 %v4053, %v4052
        %v4178 = vpack.c.b16 %v4055, %v4054
        %v4179 = vpack.c.b16 %v4057, %v4056
        %v4180 = vpack.c.b16 %v4059, %v4058
        %v4181 = vpack.c.b16 %v4061, %v4060
        %v4182 = vpack.c.b16 %v4063, %v4062
        %v4183 = vpack.c.b16 %v4065, %v4064
        %v4184 = vpack.c.b16 %v4067, %v4066
        %v4185 = vpack.c.b16 %v4069, %v4068
        %v4186 = vpack.c.b16 %v4071, %v4070
        %v4187 = vpack.c.b16 %v4073, %v4072
        %v4188 = vpack.c.b16 %v4075, %v4074
        %v4189 = vpack.c.b16 %v4077, %v4076
        %v4190 = vpack.c.b16 %v4079, %v4078
        %v4191 = vpack.c.b16 %v4081, %v4080
        %v4192 = vpack.c.b16 %v4083, %v4082
        %v4193 = vpack.c.b16 %v4085, %v4084
        %v4194 = vpack.c.b16 %v4087, %v4086
        %v4195 = vpack.c.b16 %v4089, %v4088
        %v4196 = vpack.c.b16 %v4091, %v4090
        %v4197 = vpack.c.b16 %v4093, %v4092
        %v4198 = vpack.c.b16 %v4095, %v4094
        %v4199 = vpack.c.b16 %v4097, %v4096
        %v4200 = vpack.c.b16 %v4099, %v4098
        %v4201 = vpack.c.b16 %v4101, %v4100
        %vm4302 = vcmask 523264
        %v4303 = vsel %vm4302, %v3689, 0
        %4305 = vmatpush.bf16.msra.mxu0 %v4109
        %4306 = vmatpush.bf16.msra.mxu0 %v4108
        %4307 = vmatpush.bf16.msra.mxu0 %v4107
        %4308 = vmatpush.bf16.msra.mxu0 %v4106
        %4309 = vmatpush.bf16.msra.mxu0 %v4105
        %4310 = vmatpush.bf16.msra.mxu0 %v4104
        %4311 = vmatpush.bf16.msra.mxu0 %v4103
        %4312 = vmatpush.bf16.msra.mxu0 %v4102
        %4313 = vmatmul.bf16.gmra.mxu0 %v3675
        %v4314 = vpop.f32.mrf.mxu0
        %v4315 = vadd.f32 %v3672, %v4314
        %v4316 = vpop.f32.mrf.mxu0
        %4317 = vdwg.mxu0
        %4318 = vmatpush.bf16.msra.mxu0 %v4117
        %4319 = vmatpush.bf16.msra.mxu0 %v4116
        %4320 = vmatpush.bf16.msra.mxu0 %v4115
        %4321 = vmatpush.bf16.msra.mxu0 %v4114
        %4322 = vmatpush.bf16.msra.mxu0 %v4113
        %4323 = vmatpush.bf16.msra.mxu0 %v4112
        %4324 = vmatpush.bf16.msra.mxu0 %v4111
        %4325 = vmatpush.bf16.msra.mxu0 %v4110
        %4326 = vmatmul.bf16.gmra.mxu0 %v3676
        %v4327 = vpop.f32.mrf.mxu0
        %v4328 = vadd.f32 %v4315, %v4327
        %v4329 = vpop.f32.mrf.mxu0
        %4330 = vdwg.mxu0
        %4331 = vmatpush.bf16.msra.mxu0 %v4125
        %4332 = vmatpush.bf16.msra.mxu0 %v4124
        %4333 = vmatpush.bf16.msra.mxu0 %v4123
        %4334 = vmatpush.bf16.msra.mxu0 %v4122
        %4335 = vmatpush.bf16.msra.mxu0 %v4121
        %4336 = vmatpush.bf16.msra.mxu0 %v4120
        %4337 = vmatpush.bf16.msra.mxu0 %v4119
        %4338 = vmatpush.bf16.msra.mxu0 %v4118
        %4339 = vmatmul.bf16.gmra.mxu0 %v3677
        %v4340 = vpop.f32.mrf.mxu0
        %v4341 = vadd.f32 %v4328, %v4340
        %v4342 = vpop.f32.mrf.mxu0
        %4343 = vdwg.mxu0
        %4344 = vmatpush.bf16.msra.mxu0 %v4133
        %4345 = vmatpush.bf16.msra.mxu0 %v4132
        %4346 = vmatpush.bf16.msra.mxu0 %v4131
        %4347 = vmatpush.bf16.msra.mxu0 %v4130
        %4348 = vmatpush.bf16.msra.mxu0 %v4129
        %4349 = vmatpush.bf16.msra.mxu0 %v4128
        %4350 = vmatpush.bf16.msra.mxu0 %v4127
        %4351 = vmatpush.bf16.msra.mxu0 %v4126
        %4352 = vmatmul.bf16.gmra.mxu0 %v3678
        %v4353 = vpop.f32.mrf.mxu0
        %v4354 = vadd.f32 %v4341, %v4353
        %v4355 = vpop.f32.mrf.mxu0
        %4356 = vdwg.mxu0
        %4357 = vmatpush.bf16.msra.mxu0 %v4141
        %4358 = vmatpush.bf16.msra.mxu0 %v4140
        %4359 = vmatpush.bf16.msra.mxu0 %v4139
        %4360 = vmatpush.bf16.msra.mxu0 %v4138
        %4361 = vmatpush.bf16.msra.mxu0 %v4137
        %4362 = vmatpush.bf16.msra.mxu0 %v4136
        %4363 = vmatpush.bf16.msra.mxu0 %v4135
        %4364 = vmatpush.bf16.msra.mxu0 %v4134
        %4365 = vmatmul.bf16.gmra.mxu0 %v3679
        %v4366 = vpop.f32.mrf.mxu0
        %v4367 = vadd.f32 %v4354, %v4366
        %v4368 = vpop.f32.mrf.mxu0
        %4369 = vdwg.mxu0
        %4370 = vmatpush.bf16.msra.mxu0 %v4149
        %4371 = vmatpush.bf16.msra.mxu0 %v4148
        %4372 = vmatpush.bf16.msra.mxu0 %v4147
        %4373 = vmatpush.bf16.msra.mxu0 %v4146
        %4374 = vmatpush.bf16.msra.mxu0 %v4145
        %4375 = vmatpush.bf16.msra.mxu0 %v4144
        %4376 = vmatpush.bf16.msra.mxu0 %v4143
        %4377 = vmatpush.bf16.msra.mxu0 %v4142
        %4378 = vmatmul.bf16.gmra.mxu0 %v3680
        %v4379 = vpop.f32.mrf.mxu0
        %v4380 = vadd.f32 %v4367, %v4379
        %v4381 = vpop.f32.mrf.mxu0
        %4382 = vdwg.mxu0
        %4383 = vmatpush.bf16.msra.mxu0 %v4157
        %4384 = vmatpush.bf16.msra.mxu0 %v4156
        %4385 = vmatpush.bf16.msra.mxu0 %v4155
        %4386 = vmatpush.bf16.msra.mxu0 %v4154
        %4387 = vmatpush.bf16.msra.mxu0 %v4153
        %4388 = vmatpush.bf16.msra.mxu0 %v4152
        %4389 = vmatpush.bf16.msra.mxu0 %v4151
        %4390 = vmatpush.bf16.msra.mxu0 %v4150
        %4391 = vmatmul.bf16.gmra.mxu0 %v3681
        %v4392 = vpop.f32.mrf.mxu0
        %v4393 = vadd.f32 %v4380, %v4392
        %v4394 = vpop.f32.mrf.mxu0
        %4395 = vdwg.mxu0
        %4396 = vmatpush.bf16.msra.mxu0 %v4165
        %4397 = vmatpush.bf16.msra.mxu0 %v4164
        %4398 = vmatpush.bf16.msra.mxu0 %v4163
        %4399 = vmatpush.bf16.msra.mxu0 %v4162
        %4400 = vmatpush.bf16.msra.mxu0 %v4161
        %4401 = vmatpush.bf16.msra.mxu0 %v4160
        %4402 = vmatpush.bf16.msra.mxu0 %v4159
        %4403 = vmatpush.bf16.msra.mxu0 %v4158
        %4404 = vmatmul.bf16.gmra.mxu0 %v3682
        %v4405 = vpop.f32.mrf.mxu0
        %v4406 = vadd.f32 %v4393, %v4405
        %v4407 = vpop.f32.mrf.mxu0
        %4408 = vdwg.mxu0
        %4409 = vmatpush.bf16.msra.mxu0 %v4173
        %4410 = vmatpush.bf16.msra.mxu0 %v4172
        %4411 = vmatpush.bf16.msra.mxu0 %v4171
        %4412 = vmatpush.bf16.msra.mxu0 %v4170
        %4413 = vmatpush.bf16.msra.mxu0 %v4169
        %4414 = vmatpush.bf16.msra.mxu0 %v4168
        %4415 = vmatpush.bf16.msra.mxu0 %v4167
        %4416 = vmatpush.bf16.msra.mxu0 %v4166
        %4417 = vmatmul.bf16.gmra.mxu0 %v3685
        %v4418 = vpop.f32.mrf.mxu0
        %v4419 = vadd.f32 %v4406, %v4418
        %v4420 = vpop.f32.mrf.mxu0
        %4421 = vdwg.mxu0
        %4422 = vmatpush.bf16.msra.mxu0 %v4181
        %4423 = vmatpush.bf16.msra.mxu0 %v4180
        %4424 = vmatpush.bf16.msra.mxu0 %v4179
        %4425 = vmatpush.bf16.msra.mxu0 %v4178
        %4426 = vmatpush.bf16.msra.mxu0 %v4177
        %4427 = vmatpush.bf16.msra.mxu0 %v4176
        %4428 = vmatpush.bf16.msra.mxu0 %v4175
        %4429 = vmatpush.bf16.msra.mxu0 %v4174
        %4430 = vmatmul.bf16.gmra.mxu0 %v3686
        %v4431 = vpop.f32.mrf.mxu0
        %v4432 = vadd.f32 %v4419, %v4431
        %v4433 = vpop.f32.mrf.mxu0
        %4434 = vdwg.mxu0
        %4435 = vmatpush.bf16.msra.mxu0 %v4189
        %4436 = vmatpush.bf16.msra.mxu0 %v4188
        %4437 = vmatpush.bf16.msra.mxu0 %v4187
        %4438 = vmatpush.bf16.msra.mxu0 %v4186
        %4439 = vmatpush.bf16.msra.mxu0 %v4185
        %4440 = vmatpush.bf16.msra.mxu0 %v4184
        %4441 = vmatpush.bf16.msra.mxu0 %v4183
        %4442 = vmatpush.bf16.msra.mxu0 %v4182
        %4443 = vmatmul.bf16.gmra.mxu0 %v3687
        %v4444 = vpop.f32.mrf.mxu0
        %v4445 = vadd.f32 %v4432, %v4444
        %v4446 = vpop.f32.mrf.mxu0
        %4447 = vdwg.mxu0
        %4448 = vmatpush.bf16.msra.mxu0 %v4197
        %4449 = vmatpush.bf16.msra.mxu0 %v4196
        %4450 = vmatpush.bf16.msra.mxu0 %v4195
        %4451 = vmatpush.bf16.msra.mxu0 %v4194
        %4452 = vmatpush.bf16.msra.mxu0 %v4193
        %4453 = vmatpush.bf16.msra.mxu0 %v4192
        %4454 = vmatpush.bf16.msra.mxu0 %v4191
        %4455 = vmatpush.bf16.msra.mxu0 %v4190
        %4456 = vmatmul.bf16.gmra.mxu0 %v3688
        %v4457 = vpop.f32.mrf.mxu0
        %v4458 = vadd.f32 %v4445, %v4457
        %v4459 = vpop.f32.mrf.mxu0
        %4460 = vdwg.mxu0
        %4461 = vmatpush.bf16.msra.mxu0 0
        %4462 = vmatpush.bf16.msra.mxu0 0
        %4463 = vmatpush.bf16.msra.mxu0 0
        %4464 = vmatpush.bf16.msra.mxu0 0
        %4465 = vmatpush.bf16.msra.mxu0 %v4201
        %4466 = vmatpush.bf16.msra.mxu0 %v4200
        %4467 = vmatpush.bf16.msra.mxu0 %v4199
        %4468 = vmatpush.bf16.msra.mxu0 %v4198
        %4469 = vmatmul.bf16.gmra.mxu0 %v4303
        %v4470 = vpop.f32.mrf.mxu0
        %v4471 = vadd.f32 %v4458, %v4470
        %v4472 = vpop.f32.mrf.mxu0
        %4473 = vdwg.mxu0
        %v4474 = vmax.f32 %v4471, 0.0
        %v4475 = vpack.c.bf16 %v4474, %v4474
        %v4476 = vld [vmem:[%s7] sm:$0xf]
        %v4477 = vld [vmem:[%s7 + $0x4] sm:$0xf]
        %v4478 = vld [vmem:[%s7 + $0x8] sm:$0xf]
        %v4479 = vld [vmem:[%s7 + $0xc] sm:$0xf]
        %v4480 = vld [vmem:[%s7 + $0x10] sm:$0xf]
        %v4481 = vld [vmem:[%s7 + $0x14] sm:$0xf]
        %v4482 = vld [vmem:[%s7 + $0x18] sm:$0xf]
        %v4483 = vld [vmem:[%s7 + $0x1c] sm:$0xf]
        %v4484 = vld [vmem:[%s7 + $0x20] sm:$0xf]
        %v4485 = vld [vmem:[%s7 + $0x24] sm:$0xf]
        %v4486 = vld [vmem:[%s7 + $0x28] sm:$0xf]
        %v4487 = vld [vmem:[%s7 + $0x2c] sm:$0xf]
        %v4488 = vld [vmem:[%s7 + $0x30] sm:$0xf]
        %v4489 = vld [vmem:[%s7 + $0x34] sm:$0xf]
        %v4490 = vld [vmem:[%s7 + $0x38] sm:$0xf]
        %v4491 = vld [vmem:[%s7 + $0x3c] sm:$0xf]
        %v4492 = vld [vmem:[%s8] sm:$0x1]
        %v4509 = vunpack.c.l.b16 %v4476
        %v4510 = vunpack.c.l.b16 %v4477
        %v4511 = vunpack.c.l.b16 %v4478
        %v4512 = vunpack.c.l.b16 %v4479
        %v4513 = vunpack.c.l.b16 %v4480
        %v4514 = vunpack.c.l.b16 %v4481
        %v4515 = vunpack.c.l.b16 %v4482
        %v4516 = vunpack.c.l.b16 %v4483
        %v4517 = vunpack.c.l.b16 %v4484
        %v4518 = vunpack.c.l.b16 %v4485
        %v4519 = vunpack.c.l.b16 %v4486
        %v4520 = vunpack.c.l.b16 %v4487
        %v4521 = vunpack.c.l.b16 %v4488
        %v4522 = vunpack.c.l.b16 %v4489
        %v4523 = vunpack.c.l.b16 %v4490
        %v4524 = vunpack.c.l.b16 %v4491
        %v4525 = vpack.c.b16 %v4510, %v4509
        %v4526 = vpack.c.b16 %v4512, %v4511
        %v4527 = vpack.c.b16 %v4514, %v4513
        %v4528 = vpack.c.b16 %v4516, %v4515
        %v4529 = vpack.c.b16 %v4518, %v4517
        %v4530 = vpack.c.b16 %v4520, %v4519
        %v4531 = vpack.c.b16 %v4522, %v4521
        %v4532 = vpack.c.b16 %v4524, %v4523
        %4541 = vmatpush.bf16.msra.mxu0 %v4532
        %4542 = vmatpush.bf16.msra.mxu0 %v4531
        %4543 = vmatpush.bf16.msra.mxu0 %v4530
        %4544 = vmatpush.bf16.msra.mxu0 %v4529
        %4545 = vmatpush.bf16.msra.mxu0 %v4528
        %4546 = vmatpush.bf16.msra.mxu0 %v4527
        %4547 = vmatpush.bf16.msra.mxu0 %v4526
        %4548 = vmatpush.bf16.msra.mxu0 %v4525
        %4549 = vmatmul.bf16.gmra.mxu0 %v4475
        %v4550 = vpop.f32.mrf.mxu0
        %v4551 = vadd.f32 %v4492, %v4550
        %v4552 = vpop.f32.mrf.mxu0
        %4553 = vdwg.mxu0
        %vm4554 = vcmask 204800
        %4555 = vst.msk [vmem:[%s324] sm:$0x1] %vm4554, %v4551
        %s4556 = sand.u32 %s225, 1
        %s4557 = scalar_lea.sflag [#allocation5], %s4556
        %s4558 = sand.u32 %s225, 1
        %s4559 = scalar_lea.vmem [#allocation4], %s4558
        // Predicated region
        $region57: #{letter_cnn_forward.1} parent=55 // pred_check
          %p4560 = pneg %p235
        $region58: #{letter_cnn_forward.1} parent=55 // pred_check_branch
          %4562 = sbr.rel (%p4560) target = $region60
        $region59: #{letter_cnn_forward.1} parent=55 // pred_region
          %4564 = vsyncadd %s4557, 0
          %s4565 = scalar_lea.hbm %s9, %s23
          %s4567 = sshll.u32 %s4559, 4
          %s4568 = int_to_ptr.vmem [resolvable:$true] %s4567
          %s4569 = sshll.u32 %s4565, 4
          %s4570 = int_to_ptr.hbm [resolvable:$true] %s4569
          %4572 = dma.vmem_to_hbm [thread:$0]  %s4568, 16, %s4570, %s4557
        $region60: #{letter_cnn_forward.1} parent=55 // pred_fallthru
          _
      $region56: #{letter_cnn_forward.1} parent=5 // pred_fallthru
        _
      %p4573 = scmp.le.s32.totalorder 2, %s18
      // Predicated region
      $region61: #{letter_cnn_forward.1} parent=5 // pred_check
        %p4574 = pneg %p4573
      $region62: #{letter_cnn_forward.1} parent=5 // pred_check_branch
        %4576 = sbr.rel (%p4574) target = $region64
      $region63: #{letter_cnn_forward.1} parent=5 // pred_region
        %s4577 = ssub.s32 %s18, 2
        // Predicated region
        $region65: #{letter_cnn_forward.1} parent=63 // pred_check
          %p4578 = pneg %p241
        $region66: #{letter_cnn_forward.1} parent=63 // pred_check_branch
          %4580 = sbr.rel (%p4578) target = $region68
        $region67: #{letter_cnn_forward.1} parent=63 // pred_region
          %s4581 = sand.u32 %s226, 1
          %s4582 = scalar_lea.sflag [#allocation5], %s4581
          %s4583 = sand.u32 %s226, 1
          %s4584 = scalar_lea.vmem [#allocation4], %s4583
          %4586 = dma.done %s4582, 16
        $region68: #{letter_cnn_forward.1} parent=63 // pred_fallthru
          _
      $region64: #{letter_cnn_forward.1} parent=5 // pred_fallthru
        _
    $region6: #{letter_cnn_forward.1} parent=1 // loop_footer
      %s22 = sadd.s32 1, %s18
    $region7: #{letter_cnn_forward.1} parent=1 // loop_footer_branch
      %17 = sbr.rel target = $region3
    $region8: #{letter_cnn_forward.1} parent=1 // loop_exit
      _
    %4587 = vsyncpa [#allocation5], 1
    %s4588 = scalar_lea.sflag [#allocation5], 1
    %4589 = vsyncpa %s4588, 1

</llo_original>
